<compile_context>
chip_gen: v6e
topology: v6e:2x2x1
jax: 0.10.0
libtpu: 0.0.40
codegen_flags: <defaults>
</compile_context>

<pallas_src>
import functools

import jax
import jax.numpy as jnp
from jax import lax
from jax.experimental import pallas as pl
from jax.experimental.pallas import tpu as pltpu


_NEG_INF = -1000000000.0
_LN_EPS = 1e-6


# ------------------------- in-kernel building blocks -------------------------

def _layer_norm(y, gamma, beta):
    """f32 LayerNorm over the last dim (eps=1e-6), rsqrt on the EUP."""
    mean = jnp.mean(y, axis=-1, keepdims=True)
    var = jnp.mean(jnp.square(y - mean), axis=-1, keepdims=True)
    return (y - mean) * lax.rsqrt(var + _LN_EPS) * gamma + beta


def _mha_block(x_q, x_kv, bias_f32, wq, wk, wv, wo, gamma, beta, attn_ref,
               *, n_head, d_k, d_v, inv_temp):
    """Multi-head attention + residual + LayerNorm for one (batch, q-tile).

    x_q: (tq, Dm) f32 query rows, x_kv: (Lk, Dm) f32 key/value rows,
    bias_f32: (tq, Lk) f32 additive mask bias (0 = visible, -1e9 = blocked).
    wq/wk: (Dm, H*d_k) bf16, wv: (Dm, H*d_v) bf16, wo: (H*d_v, Dm) bf16.
    Writes per-head attention probabilities into attn_ref[0, h] and returns (tq, Dm) f32.
    """
    xq16 = x_q.astype(jnp.bfloat16)
    xkv16 = x_kv.astype(jnp.bfloat16)

    # Single lane-dense 2D projections (N = H*d_k / H*d_v), f32 accumulation.
    q = jnp.dot(xq16, wq, preferred_element_type=jnp.float32) * inv_temp   # (tq, H*dk)
    k = jnp.dot(xkv16, wk, preferred_element_type=jnp.float32)             # (Lk, H*dk)
    v = jnp.dot(xkv16, wv, preferred_element_type=jnp.float32)             # (Lk, H*dv)

    q16 = q.astype(jnp.bfloat16)
    k16 = k.astype(jnp.bfloat16)
    v16 = v.astype(jnp.bfloat16)

    ctx_heads = []
    for h in range(n_head):                      # unrolled; each head is one MXU matmul pair
        qh = q16[:, h * d_k:(h + 1) * d_k]       # static lane slices of the fused projection
        kh = k16[:, h * d_k:(h + 1) * d_k]
        vh = v16[:, h * d_v:(h + 1) * d_v]

        # scores: (tq, Lk), contraction over d_k, rhs used transposed (NT) natively.
        s = lax.dot_general(qh, kh, (((1,), (1,)), ((), ())),
                            preferred_element_type=jnp.float32)
        s = s + bias_f32                          # additive mask bias (one VPU add)

        # Softmax in f32; divide goes to the EUP via approximate reciprocal.
        m = jnp.max(s, axis=-1, keepdims=True)
        e = jnp.exp(s - m)
        p = e * pl.reciprocal(jnp.sum(e, axis=-1, keepdims=True), approx=True)

        attn_ref[0, h] = p.astype(attn_ref.dtype)      # bf16 attention-map writeback
        ctx_heads.append(jnp.dot(p.astype(jnp.bfloat16), vh,
                                 preferred_element_type=jnp.float32))      # (tq, dv)

    # Head contraction folded into ONE matmul: (tq, H*dv) @ (H*dv, Dm).
    ctx = jnp.concatenate(ctx_heads, axis=-1)
    o = jnp.dot(ctx.astype(jnp.bfloat16), wo, preferred_element_type=jnp.float32)

    # dropout(fc(..)) is identity in eval mode; residual + LayerNorm.
    return _layer_norm(o + x_q, gamma, beta)


def _ffn_block(x, w1, b1, w2, b2, gamma, beta):
    """Positionwise FFN + residual + LayerNorm for one q-tile (x: (tq, Dm) f32)."""
    h = jnp.dot(x.astype(jnp.bfloat16), w1, preferred_element_type=jnp.float32) + b1
    h = jnp.maximum(h, 0.0)                                              # ReLU
    y = jnp.dot(h.astype(jnp.bfloat16), w2, preferred_element_type=jnp.float32) + b2
    return _layer_norm(y + x, gamma, beta)                               # dropout = identity


def _decoder_layer_kernel(xq_ref, xkv_ref, enc_ref, sbias_ref, cbias_ref,
                          sa_wq, sa_wk, sa_wv, sa_wo, sa_g, sa_b,
                          ca_wq, ca_wk, ca_wv, ca_wo, ca_g, ca_b,
                          f_w1, f_b1, f_w2, f_b2, f_g, f_b,
                          out_ref, sattn_ref, cattn_ref,
                          *, n_head, d_k, d_v, inv_temp):
    """Fused self-attn + cross-attn + FFN for one (batch, query-tile) grid step."""
    x_q = xq_ref[0]        # (tq, Dm)  query rows of this tile
    x_kv = xkv_ref[0]      # (Lq, Dm)  full decoder input (self-attn K/V source)
    enc = enc_ref[0]       # (Lk, Dm)  full encoder output (cross-attn K/V source)

    dec = _mha_block(x_q, x_kv, sbias_ref[0].astype(jnp.float32),
                     sa_wq[...], sa_wk[...], sa_wv[...], sa_wo[...],
                     sa_g[...], sa_b[...], sattn_ref,
                     n_head=n_head, d_k=d_k, d_v=d_v, inv_temp=inv_temp)

    dec = _mha_block(dec, enc, cbias_ref[0].astype(jnp.float32),
                     ca_wq[...], ca_wk[...], ca_wv[...], ca_wo[...],
                     ca_g[...], ca_b[...], cattn_ref,
                     n_head=n_head, d_k=d_k, d_v=d_v, inv_temp=inv_temp)

    out_ref[0] = _ffn_block(dec, f_w1[...], f_b1[...], f_w2[...], f_b2[...],
                            f_g[...], f_b[...])


# ------------------------- wrapper -------------------------

def _prep_mha_params(pm):
    """bf16 cast only -- no reshapes needed; heads are static lane-slices in-kernel."""
    return {
        "wq": pm["wq"].astype(jnp.bfloat16),        # (Dm, H*dk)
        "wk": pm["wk"].astype(jnp.bfloat16),        # (Dm, H*dk)
        "wv": pm["wv"].astype(jnp.bfloat16),        # (Dm, H*dv)
        "wo": pm["wfc"].astype(jnp.bfloat16),       # (H*dv, Dm)
        "g": pm["ln_g"], "b": pm["ln_b"],
    }


def _mask_to_bias(mask, shape):
    """{0,1}-style mask -> additive bf16 bias matching masked_fill(mask==0, -1e9)."""
    if mask is None:
        return jnp.zeros(shape, jnp.bfloat16)
    bias = jnp.where(mask == 0, _NEG_INF, 0.0)
    return jnp.broadcast_to(bias, shape).astype(jnp.bfloat16)


def _pick_q_tile(L):
    for t in (256, 128):
        if L % t == 0:
            return t
    return L


def decoder_layer(input_vectors, encoder_output, self_mask, cross_mask, params,
                  *, n_head, d_k, d_v, attn_dtype=jnp.bfloat16):
    B, Lq, Dm = input_vectors.shape
    Lk = encoder_output.shape[1]
    Dh = params["pos_ffn"]["w1"].shape[1]
    tq = _pick_q_tile(Lq)

    sa = _prep_mha_params(params["self_attention"])
    ca = _prep_mha_params(params["cross_attention"])
    pf = params["pos_ffn"]
    f_w1 = pf["w1"].astype(jnp.bfloat16)
    f_w2 = pf["w2"].astype(jnp.bfloat16)

    # Additive bf16 mask biases (half the mask DMA of f32, applied with one add in-kernel).
    self_bias = _mask_to_bias(self_mask, (B, Lq, Lq))
    cross_bias = _mask_to_bias(cross_mask, (B, Lq, Lk))

    def rep(shape):
        zero = (0,) * len(shape)
        return pl.BlockSpec(shape, lambda b, qi: zero)   # same block every grid step

    kernel = functools.partial(_decoder_layer_kernel, n_head=n_head, d_k=d_k, d_v=d_v,
                               inv_temp=1.0 / (d_k ** 0.5))

    dec_out, self_attn, cross_attn = pl.pallas_call(
        kernel,
        out_shape=(jax.ShapeDtypeStruct((B, Lq, Dm), jnp.float32),
                   jax.ShapeDtypeStruct((B, n_head, Lq, Lq), attn_dtype),
                   jax.ShapeDtypeStruct((B, n_head, Lq, Lk), attn_dtype)),
        grid=(B, Lq // tq),
        in_specs=[
            pl.BlockSpec((1, tq, Dm), lambda b, qi: (b, qi, 0)),   # decoder input (q tile)
            pl.BlockSpec((1, Lq, Dm), lambda b, qi: (b, 0, 0)),    # decoder input (K/V rows)
            pl.BlockSpec((1, Lk, Dm), lambda b, qi: (b, 0, 0)),    # encoder output
            pl.BlockSpec((1, tq, Lq), lambda b, qi: (b, qi, 0)),   # self-attn bias (bf16)
            pl.BlockSpec((1, tq, Lk), lambda b, qi: (b, qi, 0)),   # cross-attn bias (bf16)
            rep((Dm, n_head * d_k)), rep((Dm, n_head * d_k)),      # self wq, wk
            rep((Dm, n_head * d_v)), rep((n_head * d_v, Dm)),      # self wv, wo
            rep((1, Dm)), rep((1, Dm)),                            # self LN g, b
            rep((Dm, n_head * d_k)), rep((Dm, n_head * d_k)),      # cross wq, wk
            rep((Dm, n_head * d_v)), rep((n_head * d_v, Dm)),      # cross wv, wo
            rep((1, Dm)), rep((1, Dm)),                            # cross LN g, b
            rep((Dm, Dh)), rep((1, Dh)),                           # ffn w1, b1
            rep((Dh, Dm)), rep((1, Dm)),                           # ffn w2, b2
            rep((1, Dm)), rep((1, Dm)),                            # ffn LN g, b
        ],
        out_specs=(
            pl.BlockSpec((1, tq, Dm), lambda b, qi: (b, qi, 0)),
            pl.BlockSpec((1, n_head, tq, Lq), lambda b, qi: (b, 0, qi, 0)),
            pl.BlockSpec((1, n_head, tq, Lk), lambda b, qi: (b, 0, qi, 0)),
        ),
        compiler_params=pltpu.CompilerParams(
            dimension_semantics=("parallel", "parallel"),   # v7x: both axes shard over 2 TCs
            vmem_limit_bytes=64 * 1024 * 1024),              # explicit, valid on v5e/v6e/v7x
    )(input_vectors, input_vectors, encoder_output, self_bias, cross_bias,
      sa["wq"], sa["wk"], sa["wv"], sa["wo"], sa["g"], sa["b"],
      ca["wq"], ca["wk"], ca["wv"], ca["wo"], ca["g"], ca["b"],
      f_w1, pf["b1"], f_w2, pf["b2"], pf["ln_g"], pf["ln_b"])
    return dec_out, self_attn, cross_attn


# ------------------------- deterministic parameter init -------------------------

def init_decoder_params(key, d_model, d_inner, n_head, d_k, d_v):
    def lin(k, fan_in, fan_out):
        return jax.random.normal(k, (fan_in, fan_out), jnp.float32) * 0.02

    def mha_params(k):
        ks = jax.random.split(k, 4)
        return {
            "wq": lin(ks[0], d_model, n_head * d_k),
            "wk": lin(ks[1], d_model, n_head * d_k),
            "wv": lin(ks[2], d_model, n_head * d_v),
            "wfc": lin(ks[3], n_head * d_v, d_model),
            "ln_g": jnp.ones((1, d_model), jnp.float32),
            "ln_b": jnp.zeros((1, d_model), jnp.float32),
        }

    k_self, k_cross, k_ffn = jax.random.split(key, 3)
    kf = jax.random.split(k_ffn, 2)
    return {
        "self_attention": mha_params(k_self),
        "cross_attention": mha_params(k_cross),
        "pos_ffn": {
            "w1": lin(kf[0], d_model, d_inner),
            "b1": jnp.zeros((1, d_inner), jnp.float32),
            "w2": lin(kf[1], d_inner, d_model),
            "b2": jnp.zeros((1, d_model), jnp.float32),
            "ln_g": jnp.ones((1, d_model), jnp.float32),
            "ln_b": jnp.zeros((1, d_model), jnp.float32),
        },
    }


# ------------------------- pure-JAX f32 reference (sanity check) -------------------------

def _ref_mha(x_q, x_kv, mask, pm, n_head, d_k, d_v):
    Lq, Lk = x_q.shape[0], x_kv.shape[0]
    q = (x_q @ pm["wq"]).reshape(Lq, n_head, d_k).transpose(1, 0, 2) / (d_k ** 0.5)
    k = (x_kv @ pm["wk"]).reshape(Lk, n_head, d_k).transpose(1, 0, 2)
    v = (x_kv @ pm["wv"]).reshape(Lk, n_head, d_v).transpose(1, 0, 2)
    s = jnp.einsum('hqd,hkd->hqk', q, k)
    s = jnp.where(mask[None] == 0.0, _NEG_INF, s)
    a = jax.nn.softmax(s, axis=-1)
    ctx = jnp.einsum('hqk,hkd->hqd', a, v).transpose(1, 0, 2).reshape(Lq, n_head * d_v)
    y = ctx @ pm["wfc"] + x_q
    mean = y.mean(-1, keepdims=True)
    var = ((y - mean) ** 2).mean(-1, keepdims=True)
    y = (y - mean) / jnp.sqrt(var + _LN_EPS)
    return y * pm["ln_g"] + pm["ln_b"], a


def _ref_decoder_layer(x, enc, smask, cmask, params, n_head, d_k, d_v):
    def one(xb, eb, smb, cmb):
        d1, sa = _ref_mha(xb, xb, smb, params["self_attention"], n_head, d_k, d_v)
        d2, ca = _ref_mha(d1, eb, cmb, params["cross_attention"], n_head, d_k, d_v)
        pf = params["pos_ffn"]
        h = jnp.maximum(d2 @ pf["w1"] + pf["b1"], 0.0)
        y = h @ pf["w2"] + pf["b2"] + d2
        mean = y.mean(-1, keepdims=True)
        var = ((y - mean) ** 2).mean(-1, keepdims=True)
        y = (y - mean) / jnp.sqrt(var + _LN_EPS) * pf["ln_g"] + pf["ln_b"]
        return y, sa, ca
    return jax.vmap(one)(x, enc, smask, cmask)


# ------------------------- main -------------------------

if __name__ == "__main__":
    B, L_dec, L_enc = 2, 8, 8
    d_model, d_inner, n_head, d_k, d_v = 32, 64, 4, 8, 8

    key = jax.random.PRNGKey(0)
    k_in, k_enc, k_par = jax.random.split(key, 3)

    input_vectors = jax.random.normal(k_in, (B, L_dec, d_model), jnp.float32)
    encoder_output = jax.random.normal(k_enc, (B, L_enc, d_model), jnp.float32)

    # causal self-attention mask (mask==0 -> blocked), full cross-attention mask
    self_mask = jnp.broadcast_to(
        jnp.tril(jnp.ones((L_dec, L_dec), jnp.float32)), (B, L_dec, L_dec))
    cross_mask = jnp.ones((B, L_dec, L_enc), jnp.float32)

    params = init_decoder_params(k_par, d_model, d_inner, n_head, d_k, d_v)

    run = jax.jit(lambda x, e, sm, cm, p: decoder_layer(
        x, e, sm, cm, p, n_head=n_head, d_k=d_k, d_v=d_v))
    dec_out, self_attn, cross_attn = run(
        input_vectors, encoder_output, self_mask, cross_mask, params)
    jax.block_until_ready((dec_out, self_attn, cross_attn))

    assert dec_out.shape == (B, L_dec, d_model)
    assert self_attn.shape == (B, n_head, L_dec, L_dec)
    assert cross_attn.shape == (B, n_head, L_dec, L_enc)

    # Sanity check vs the f32 pure-JAX reference (kernel uses bf16 MXU operands,
    # bf16 attention-map outputs and an approximate reciprocal -> loose tolerances).
    ref_out, ref_sa, ref_ca = _ref_decoder_layer(
        input_vectors, encoder_output, self_mask, cross_mask, params, n_head, d_k, d_v)
    assert float(jnp.max(jnp.abs(dec_out - ref_out))) < 0.15
    assert float(jnp.max(jnp.abs(self_attn.astype(jnp.float32) - ref_sa))) < 0.05
    assert float(jnp.max(jnp.abs(cross_attn.astype(jnp.float32) - ref_ca))) < 0.05

    print("KERNEL_OK")
</pallas_src>

<mosaic_0001>
module attributes {stable_mosaic.version = 11 : i64} {
  func.func @_decoder_layer_kernel(%arg0: i32, %arg1: i32, %arg2: memref<1x8x32xf32, #tpu.memory_space<vmem>>, %arg3: memref<1x8x32xf32, #tpu.memory_space<vmem>>, %arg4: memref<1x8x32xf32, #tpu.memory_space<vmem>>, %arg5: memref<1x8x8xbf16, #tpu.memory_space<vmem>>, %arg6: memref<1x8x8xbf16, #tpu.memory_space<vmem>>, %arg7: memref<32x32xbf16, #tpu.memory_space<vmem>>, %arg8: memref<32x32xbf16, #tpu.memory_space<vmem>>, %arg9: memref<32x32xbf16, #tpu.memory_space<vmem>>, %arg10: memref<32x32xbf16, #tpu.memory_space<vmem>>, %arg11: memref<1x32xf32, #tpu.memory_space<vmem>>, %arg12: memref<1x32xf32, #tpu.memory_space<vmem>>, %arg13: memref<32x32xbf16, #tpu.memory_space<vmem>>, %arg14: memref<32x32xbf16, #tpu.memory_space<vmem>>, %arg15: memref<32x32xbf16, #tpu.memory_space<vmem>>, %arg16: memref<32x32xbf16, #tpu.memory_space<vmem>>, %arg17: memref<1x32xf32, #tpu.memory_space<vmem>>, %arg18: memref<1x32xf32, #tpu.memory_space<vmem>>, %arg19: memref<32x64xbf16, #tpu.memory_space<vmem>>, %arg20: memref<1x64xf32, #tpu.memory_space<vmem>>, %arg21: memref<64x32xbf16, #tpu.memory_space<vmem>>, %arg22: memref<1x32xf32, #tpu.memory_space<vmem>>, %arg23: memref<1x32xf32, #tpu.memory_space<vmem>>, %arg24: memref<1x32xf32, #tpu.memory_space<vmem>>, %arg25: memref<1x8x32xf32, #tpu.memory_space<vmem>>, %arg26: memref<1x4x8x8xbf16, #tpu.memory_space<vmem>>, %arg27: memref<1x4x8x8xbf16, #tpu.memory_space<vmem>>) attributes {dimension_semantics = [#tpu.dimension_semantics<parallel>, #tpu.dimension_semantics<parallel>], iteration_bounds = array<i64: 2, 1>, scalar_prefetch = 0 : i64, scratch_operands = 0 : i64, tpu.core_type = #tpu.core_type<tc>, window_params = [{transform_indices = @transform_0, window_bounds = array<i64: 1, 8, 32>}, {transform_indices = @transform_1, window_bounds = array<i64: 1, 8, 32>}, {transform_indices = @transform_2, window_bounds = array<i64: 1, 8, 32>}, {transform_indices = @transform_3, window_bounds = array<i64: 1, 8, 8>}, {transform_indices = @transform_4, window_bounds = array<i64: 1, 8, 8>}, {pipeline_mode = #tpu.pipeline_mode<synchronous>, transform_indices = @transform_5, window_bounds = array<i64: 32, 32>}, {pipeline_mode = #tpu.pipeline_mode<synchronous>, transform_indices = @transform_6, window_bounds = array<i64: 32, 32>}, {pipeline_mode = #tpu.pipeline_mode<synchronous>, transform_indices = @transform_7, window_bounds = array<i64: 32, 32>}, {pipeline_mode = #tpu.pipeline_mode<synchronous>, transform_indices = @transform_8, window_bounds = array<i64: 32, 32>}, {pipeline_mode = #tpu.pipeline_mode<synchronous>, transform_indices = @transform_9, window_bounds = array<i64: 1, 32>}, {pipeline_mode = #tpu.pipeline_mode<synchronous>, transform_indices = @transform_10, window_bounds = array<i64: 1, 32>}, {pipeline_mode = #tpu.pipeline_mode<synchronous>, transform_indices = @transform_11, window_bounds = array<i64: 32, 32>}, {pipeline_mode = #tpu.pipeline_mode<synchronous>, transform_indices = @transform_12, window_bounds = array<i64: 32, 32>}, {pipeline_mode = #tpu.pipeline_mode<synchronous>, transform_indices = @transform_13, window_bounds = array<i64: 32, 32>}, {pipeline_mode = #tpu.pipeline_mode<synchronous>, transform_indices = @transform_14, window_bounds = array<i64: 32, 32>}, {pipeline_mode = #tpu.pipeline_mode<synchronous>, transform_indices = @transform_15, window_bounds = array<i64: 1, 32>}, {pipeline_mode = #tpu.pipeline_mode<synchronous>, transform_indices = @transform_16, window_bounds = array<i64: 1, 32>}, {pipeline_mode = #tpu.pipeline_mode<synchronous>, transform_indices = @transform_17, window_bounds = array<i64: 32, 64>}, {pipeline_mode = #tpu.pipeline_mode<synchronous>, transform_indices = @transform_18, window_bounds = array<i64: 1, 64>}, {pipeline_mode = #tpu.pipeline_mode<synchronous>, transform_indices = @transform_19, window_bounds = array<i64: 64, 32>}, {pipeline_mode = #tpu.pipeline_mode<synchronous>, transform_indices = @transform_20, window_bounds = array<i64: 1, 32>}, {pipeline_mode = #tpu.pipeline_mode<synchronous>, transform_indices = @transform_21, window_bounds = array<i64: 1, 32>}, {pipeline_mode = #tpu.pipeline_mode<synchronous>, transform_indices = @transform_22, window_bounds = array<i64: 1, 32>}, {transform_indices = @transform_23, window_bounds = array<i64: 1, 8, 32>}, {transform_indices = @transform_24, window_bounds = array<i64: 1, 4, 8, 8>}, {transform_indices = @transform_25, window_bounds = array<i64: 1, 4, 8, 8>}]} {
    %c0 = arith.constant 0 : index
    %c0_0 = arith.constant 0 : index
    %c0_1 = arith.constant 0 : index
    %0 = vector.load %arg2[%c0, %c0_0, %c0_1] : memref<1x8x32xf32, #tpu.memory_space<vmem>>, vector<1x8x32xf32>
    %1 = vector.shape_cast %0 : vector<1x8x32xf32> to vector<8x32xf32>
    %c0_2 = arith.constant 0 : index
    %c0_3 = arith.constant 0 : index
    %c0_4 = arith.constant 0 : index
    %2 = vector.load %arg3[%c0_2, %c0_3, %c0_4] : memref<1x8x32xf32, #tpu.memory_space<vmem>>, vector<1x8x32xf32>
    %3 = vector.shape_cast %2 : vector<1x8x32xf32> to vector<8x32xf32>
    %c0_5 = arith.constant 0 : index
    %c0_6 = arith.constant 0 : index
    %c0_7 = arith.constant 0 : index
    %4 = vector.load %arg4[%c0_5, %c0_6, %c0_7] : memref<1x8x32xf32, #tpu.memory_space<vmem>>, vector<1x8x32xf32>
    %5 = vector.shape_cast %4 : vector<1x8x32xf32> to vector<8x32xf32>
    %c0_8 = arith.constant 0 : index
    %c0_9 = arith.constant 0 : index
    %c0_10 = arith.constant 0 : index
    %6 = vector.load %arg5[%c0_8, %c0_9, %c0_10] : memref<1x8x8xbf16, #tpu.memory_space<vmem>>, vector<1x8x8xbf16>
    %7 = vector.shape_cast %6 : vector<1x8x8xbf16> to vector<8x8xbf16>
    %8 = arith.extf %7 : vector<8x8xbf16> to vector<8x8xf32>
    %c0_11 = arith.constant 0 : index
    %c0_12 = arith.constant 0 : index
    %9 = vector.load %arg7[%c0_11, %c0_12] : memref<32x32xbf16, #tpu.memory_space<vmem>>, vector<32x32xbf16>
    %c0_13 = arith.constant 0 : index
    %c0_14 = arith.constant 0 : index
    %10 = vector.load %arg8[%c0_13, %c0_14] : memref<32x32xbf16, #tpu.memory_space<vmem>>, vector<32x32xbf16>
    %c0_15 = arith.constant 0 : index
    %c0_16 = arith.constant 0 : index
    %11 = vector.load %arg9[%c0_15, %c0_16] : memref<32x32xbf16, #tpu.memory_space<vmem>>, vector<32x32xbf16>
    %c0_17 = arith.constant 0 : index
    %c0_18 = arith.constant 0 : index
    %12 = vector.load %arg10[%c0_17, %c0_18] : memref<32x32xbf16, #tpu.memory_space<vmem>>, vector<32x32xbf16>
    %c0_19 = arith.constant 0 : index
    %c0_20 = arith.constant 0 : index
    %13 = vector.load %arg11[%c0_19, %c0_20] : memref<1x32xf32, #tpu.memory_space<vmem>>, vector<1x32xf32>
    %c0_21 = arith.constant 0 : index
    %c0_22 = arith.constant 0 : index
    %14 = vector.load %arg12[%c0_21, %c0_22] : memref<1x32xf32, #tpu.memory_space<vmem>>, vector<1x32xf32>
    %15 = arith.truncf %1 : vector<8x32xf32> to vector<8x32xbf16>
    %16 = arith.truncf %3 : vector<8x32xf32> to vector<8x32xbf16>
    %cst = arith.constant dense<0.000000e+00> : vector<8x32xf32>
    %17 = tpu.matmul %15, %9, %cst {dimension_numbers = #tpu.dot_dimension_numbers<[1], [0], [0], [1], [0, 0, 1, 1], [], []>} : vector<8x32xbf16>, vector<32x32xbf16>, vector<8x32xf32> -> vector<8x32xf32>
    %cst_23 = arith.constant 0.353553385 : f32
    %18 = vector.broadcast %cst_23 : f32 to vector<8x32xf32>
    %19 = arith.mulf %17, %18 : vector<8x32xf32>
    %cst_24 = arith.constant dense<0.000000e+00> : vector<8x32xf32>
    %20 = tpu.matmul %16, %10, %cst_24 {dimension_numbers = #tpu.dot_dimension_numbers<[1], [0], [0], [1], [0, 0, 1, 1], [], []>} : vector<8x32xbf16>, vector<32x32xbf16>, vector<8x32xf32> -> vector<8x32xf32>
    %cst_25 = arith.constant dense<0.000000e+00> : vector<8x32xf32>
    %21 = tpu.matmul %16, %11, %cst_25 {dimension_numbers = #tpu.dot_dimension_numbers<[1], [0], [0], [1], [0, 0, 1, 1], [], []>} : vector<8x32xbf16>, vector<32x32xbf16>, vector<8x32xf32> -> vector<8x32xf32>
    %22 = arith.truncf %19 : vector<8x32xf32> to vector<8x32xbf16>
    %23 = arith.truncf %20 : vector<8x32xf32> to vector<8x32xbf16>
    %24 = arith.truncf %21 : vector<8x32xf32> to vector<8x32xbf16>
    %25 = vector.extract_strided_slice %22 {offsets = [0, 0], sizes = [8, 8], strides = [1, 1]} : vector<8x32xbf16> to vector<8x8xbf16>
    %26 = vector.extract_strided_slice %23 {offsets = [0, 0], sizes = [8, 8], strides = [1, 1]} : vector<8x32xbf16> to vector<8x8xbf16>
    %27 = vector.extract_strided_slice %24 {offsets = [0, 0], sizes = [8, 8], strides = [1, 1]} : vector<8x32xbf16> to vector<8x8xbf16>
    %cst_26 = arith.constant dense<0.000000e+00> : vector<8x8xf32>
    %28 = tpu.matmul %25, %26, %cst_26 {dimension_numbers = #tpu.dot_dimension_numbers<[1], [1], [0], [0], [0, 0, 1, 0], [], []>} : vector<8x8xbf16>, vector<8x8xbf16>, vector<8x8xf32> -> vector<8x8xf32>
    %29 = arith.addf %28, %8 : vector<8x8xf32>
    %cst_27 = arith.constant dense<0xFF800000> : vector<8xf32>
    %30 = vector.multi_reduction <maximumf>, %29, %cst_27 [1] : vector<8x8xf32> to vector<8xf32>
    %31 = vector.shape_cast %30 : vector<8xf32> to vector<8x1xf32>
    %32 = vector.broadcast %31 : vector<8x1xf32> to vector<8x8xf32>
    %33 = arith.subf %29, %32 : vector<8x8xf32>
    %34 = math.exp %33 : vector<8x8xf32>
    %cst_28 = arith.constant dense<0.000000e+00> : vector<8xf32>
    %35 = vector.multi_reduction <add>, %34, %cst_28 [1] : vector<8x8xf32> to vector<8xf32>
    %36 = vector.shape_cast %35 : vector<8xf32> to vector<8x1xf32>
    %37 = tpu.reciprocal %36 {approx = true} : vector<8x1xf32> -> vector<8x1xf32>
    %38 = vector.broadcast %37 : vector<8x1xf32> to vector<8x8xf32>
    %39 = arith.mulf %34, %38 : vector<8x8xf32>
    %40 = arith.truncf %39 : vector<8x8xf32> to vector<8x8xbf16>
    %c0_29 = arith.constant 0 : index
    %c0_30 = arith.constant 0 : index
    %c0_31 = arith.constant 0 : index
    %c0_32 = arith.constant 0 : index
    %41 = vector.load %arg26[%c0_29, %c0_30, %c0_31, %c0_32] : memref<1x4x8x8xbf16, #tpu.memory_space<vmem>>, vector<1x1x8x8xbf16>
    %42 = vector.shape_cast %41 : vector<1x1x8x8xbf16> to vector<8x8xbf16>
    %43 = vector.shape_cast %40 : vector<8x8xbf16> to vector<1x1x8x8xbf16>
    tpu.vector_store %arg26[%c0_29, %c0_30, %c0_31, %c0_32], %43 {strides = array<i32>} : memref<1x4x8x8xbf16, #tpu.memory_space<vmem>>, vector<1x1x8x8xbf16>,
    %44 = arith.truncf %39 : vector<8x8xf32> to vector<8x8xbf16>
    %cst_33 = arith.constant dense<0.000000e+00> : vector<8x8xf32>
    %45 = tpu.matmul %44, %27, %cst_33 {dimension_numbers = #tpu.dot_dimension_numbers<[1], [0], [0], [1], [0, 0, 1, 1], [], []>} : vector<8x8xbf16>, vector<8x8xbf16>, vector<8x8xf32> -> vector<8x8xf32>
    %46 = vector.extract_strided_slice %22 {offsets = [0, 8], sizes = [8, 8], strides = [1, 1]} : vector<8x32xbf16> to vector<8x8xbf16>
    %47 = vector.extract_strided_slice %23 {offsets = [0, 8], sizes = [8, 8], strides = [1, 1]} : vector<8x32xbf16> to vector<8x8xbf16>
    %48 = vector.extract_strided_slice %24 {offsets = [0, 8], sizes = [8, 8], strides = [1, 1]} : vector<8x32xbf16> to vector<8x8xbf16>
    %cst_34 = arith.constant dense<0.000000e+00> : vector<8x8xf32>
    %49 = tpu.matmul %46, %47, %cst_34 {dimension_numbers = #tpu.dot_dimension_numbers<[1], [1], [0], [0], [0, 0, 1, 0], [], []>} : vector<8x8xbf16>, vector<8x8xbf16>, vector<8x8xf32> -> vector<8x8xf32>
    %50 = arith.addf %49, %8 : vector<8x8xf32>
    %cst_35 = arith.constant dense<0xFF800000> : vector<8xf32>
    %51 = vector.multi_reduction <maximumf>, %50, %cst_35 [1] : vector<8x8xf32> to vector<8xf32>
    %52 = vector.shape_cast %51 : vector<8xf32> to vector<8x1xf32>
    %53 = vector.broadcast %52 : vector<8x1xf32> to vector<8x8xf32>
    %54 = arith.subf %50, %53 : vector<8x8xf32>
    %55 = math.exp %54 : vector<8x8xf32>
    %cst_36 = arith.constant dense<0.000000e+00> : vector<8xf32>
    %56 = vector.multi_reduction <add>, %55, %cst_36 [1] : vector<8x8xf32> to vector<8xf32>
    %57 = vector.shape_cast %56 : vector<8xf32> to vector<8x1xf32>
    %58 = tpu.reciprocal %57 {approx = true} : vector<8x1xf32> -> vector<8x1xf32>
    %59 = vector.broadcast %58 : vector<8x1xf32> to vector<8x8xf32>
    %60 = arith.mulf %55, %59 : vector<8x8xf32>
    %61 = arith.truncf %60 : vector<8x8xf32> to vector<8x8xbf16>
    %c0_37 = arith.constant 0 : index
    %c1 = arith.constant 1 : index
    %c0_38 = arith.constant 0 : index
    %c0_39 = arith.constant 0 : index
    %62 = vector.load %arg26[%c0_37, %c1, %c0_38, %c0_39] : memref<1x4x8x8xbf16, #tpu.memory_space<vmem>>, vector<1x1x8x8xbf16>
    %63 = vector.shape_cast %62 : vector<1x1x8x8xbf16> to vector<8x8xbf16>
    %64 = vector.shape_cast %61 : vector<8x8xbf16> to vector<1x1x8x8xbf16>
    tpu.vector_store %arg26[%c0_37, %c1, %c0_38, %c0_39], %64 {strides = array<i32>} : memref<1x4x8x8xbf16, #tpu.memory_space<vmem>>, vector<1x1x8x8xbf16>,
    %65 = arith.truncf %60 : vector<8x8xf32> to vector<8x8xbf16>
    %cst_40 = arith.constant dense<0.000000e+00> : vector<8x8xf32>
    %66 = tpu.matmul %65, %48, %cst_40 {dimension_numbers = #tpu.dot_dimension_numbers<[1], [0], [0], [1], [0, 0, 1, 1], [], []>} : vector<8x8xbf16>, vector<8x8xbf16>, vector<8x8xf32> -> vector<8x8xf32>
    %67 = vector.extract_strided_slice %22 {offsets = [0, 16], sizes = [8, 8], strides = [1, 1]} : vector<8x32xbf16> to vector<8x8xbf16>
    %68 = vector.extract_strided_slice %23 {offsets = [0, 16], sizes = [8, 8], strides = [1, 1]} : vector<8x32xbf16> to vector<8x8xbf16>
    %69 = vector.extract_strided_slice %24 {offsets = [0, 16], sizes = [8, 8], strides = [1, 1]} : vector<8x32xbf16> to vector<8x8xbf16>
    %cst_41 = arith.constant dense<0.000000e+00> : vector<8x8xf32>
    %70 = tpu.matmul %67, %68, %cst_41 {dimension_numbers = #tpu.dot_dimension_numbers<[1], [1], [0], [0], [0, 0, 1, 0], [], []>} : vector<8x8xbf16>, vector<8x8xbf16>, vector<8x8xf32> -> vector<8x8xf32>
    %71 = arith.addf %70, %8 : vector<8x8xf32>
    %cst_42 = arith.constant dense<0xFF800000> : vector<8xf32>
    %72 = vector.multi_reduction <maximumf>, %71, %cst_42 [1] : vector<8x8xf32> to vector<8xf32>
    %73 = vector.shape_cast %72 : vector<8xf32> to vector<8x1xf32>
    %74 = vector.broadcast %73 : vector<8x1xf32> to vector<8x8xf32>
    %75 = arith.subf %71, %74 : vector<8x8xf32>
    %76 = math.exp %75 : vector<8x8xf32>
    %cst_43 = arith.constant dense<0.000000e+00> : vector<8xf32>
    %77 = vector.multi_reduction <add>, %76, %cst_43 [1] : vector<8x8xf32> to vector<8xf32>
    %78 = vector.shape_cast %77 : vector<8xf32> to vector<8x1xf32>
    %79 = tpu.reciprocal %78 {approx = true} : vector<8x1xf32> -> vector<8x1xf32>
    %80 = vector.broadcast %79 : vector<8x1xf32> to vector<8x8xf32>
    %81 = arith.mulf %76, %80 : vector<8x8xf32>
    %82 = arith.truncf %81 : vector<8x8xf32> to vector<8x8xbf16>
    %c0_44 = arith.constant 0 : index
    %c2 = arith.constant 2 : index
    %c0_45 = arith.constant 0 : index
    %c0_46 = arith.constant 0 : index
    %83 = vector.load %arg26[%c0_44, %c2, %c0_45, %c0_46] : memref<1x4x8x8xbf16, #tpu.memory_space<vmem>>, vector<1x1x8x8xbf16>
    %84 = vector.shape_cast %83 : vector<1x1x8x8xbf16> to vector<8x8xbf16>
    %85 = vector.shape_cast %82 : vector<8x8xbf16> to vector<1x1x8x8xbf16>
    tpu.vector_store %arg26[%c0_44, %c2, %c0_45, %c0_46], %85 {strides = array<i32>} : memref<1x4x8x8xbf16, #tpu.memory_space<vmem>>, vector<1x1x8x8xbf16>,
    %86 = arith.truncf %81 : vector<8x8xf32> to vector<8x8xbf16>
    %cst_47 = arith.constant dense<0.000000e+00> : vector<8x8xf32>
    %87 = tpu.matmul %86, %69, %cst_47 {dimension_numbers = #tpu.dot_dimension_numbers<[1], [0], [0], [1], [0, 0, 1, 1], [], []>} : vector<8x8xbf16>, vector<8x8xbf16>, vector<8x8xf32> -> vector<8x8xf32>
    %88 = vector.extract_strided_slice %22 {offsets = [0, 24], sizes = [8, 8], strides = [1, 1]} : vector<8x32xbf16> to vector<8x8xbf16>
    %89 = vector.extract_strided_slice %23 {offsets = [0, 24], sizes = [8, 8], strides = [1, 1]} : vector<8x32xbf16> to vector<8x8xbf16>
    %90 = vector.extract_strided_slice %24 {offsets = [0, 24], sizes = [8, 8], strides = [1, 1]} : vector<8x32xbf16> to vector<8x8xbf16>
    %cst_48 = arith.constant dense<0.000000e+00> : vector<8x8xf32>
    %91 = tpu.matmul %88, %89, %cst_48 {dimension_numbers = #tpu.dot_dimension_numbers<[1], [1], [0], [0], [0, 0, 1, 0], [], []>} : vector<8x8xbf16>, vector<8x8xbf16>, vector<8x8xf32> -> vector<8x8xf32>
    %92 = arith.addf %91, %8 : vector<8x8xf32>
    %cst_49 = arith.constant dense<0xFF800000> : vector<8xf32>
    %93 = vector.multi_reduction <maximumf>, %92, %cst_49 [1] : vector<8x8xf32> to vector<8xf32>
    %94 = vector.shape_cast %93 : vector<8xf32> to vector<8x1xf32>
    %95 = vector.broadcast %94 : vector<8x1xf32> to vector<8x8xf32>
    %96 = arith.subf %92, %95 : vector<8x8xf32>
    %97 = math.exp %96 : vector<8x8xf32>
    %cst_50 = arith.constant dense<0.000000e+00> : vector<8xf32>
    %98 = vector.multi_reduction <add>, %97, %cst_50 [1] : vector<8x8xf32> to vector<8xf32>
    %99 = vector.shape_cast %98 : vector<8xf32> to vector<8x1xf32>
    %100 = tpu.reciprocal %99 {approx = true} : vector<8x1xf32> -> vector<8x1xf32>
    %101 = vector.broadcast %100 : vector<8x1xf32> to vector<8x8xf32>
    %102 = arith.mulf %97, %101 : vector<8x8xf32>
    %103 = arith.truncf %102 : vector<8x8xf32> to vector<8x8xbf16>
    %c0_51 = arith.constant 0 : index
    %c3 = arith.constant 3 : index
    %c0_52 = arith.constant 0 : index
    %c0_53 = arith.constant 0 : index
    %104 = vector.load %arg26[%c0_51, %c3, %c0_52, %c0_53] : memref<1x4x8x8xbf16, #tpu.memory_space<vmem>>, vector<1x1x8x8xbf16>
    %105 = vector.shape_cast %104 : vector<1x1x8x8xbf16> to vector<8x8xbf16>
    %106 = vector.shape_cast %103 : vector<8x8xbf16> to vector<1x1x8x8xbf16>
    tpu.vector_store %arg26[%c0_51, %c3, %c0_52, %c0_53], %106 {strides = array<i32>} : memref<1x4x8x8xbf16, #tpu.memory_space<vmem>>, vector<1x1x8x8xbf16>,
    %107 = arith.truncf %102 : vector<8x8xf32> to vector<8x8xbf16>
    %cst_54 = arith.constant dense<0.000000e+00> : vector<8x8xf32>
    %108 = tpu.matmul %107, %90, %cst_54 {dimension_numbers = #tpu.dot_dimension_numbers<[1], [0], [0], [1], [0, 0, 1, 1], [], []>} : vector<8x8xbf16>, vector<8x8xbf16>, vector<8x8xf32> -> vector<8x8xf32>
    %109 = tpu.concatenate %45, %66, %87, %108 in 1 : vector<8x8xf32>, vector<8x8xf32>, vector<8x8xf32>, vector<8x8xf32> -> vector<8x32xf32>
    %110 = arith.truncf %109 : vector<8x32xf32> to vector<8x32xbf16>
    %cst_55 = arith.constant dense<0.000000e+00> : vector<8x32xf32>
    %111 = tpu.matmul %110, %12, %cst_55 {dimension_numbers = #tpu.dot_dimension_numbers<[1], [0], [0], [1], [0, 0, 1, 1], [], []>} : vector<8x32xbf16>, vector<32x32xbf16>, vector<8x32xf32> -> vector<8x32xf32>
    %112 = arith.addf %111, %1 : vector<8x32xf32>
    %cst_56 = arith.constant dense<0.000000e+00> : vector<8xf32>
    %113 = vector.multi_reduction <add>, %112, %cst_56 [1] : vector<8x32xf32> to vector<8xf32>
    %114 = vector.shape_cast %113 : vector<8xf32> to vector<8x1xf32>
    %cst_57 = arith.constant 3.200000e+01 : f32
    %115 = vector.broadcast %cst_57 : f32 to vector<8x1xf32>
    %116 = arith.divf %114, %115 : vector<8x1xf32>
    %117 = vector.broadcast %116 : vector<8x1xf32> to vector<8x32xf32>
    %118 = arith.subf %112, %117 : vector<8x32xf32>
    %119 = arith.mulf %118, %118 : vector<8x32xf32>
    %cst_58 = arith.constant dense<0.000000e+00> : vector<8xf32>
    %120 = vector.multi_reduction <add>, %119, %cst_58 [1] : vector<8x32xf32> to vector<8xf32>
    %121 = vector.shape_cast %120 : vector<8xf32> to vector<8x1xf32>
    %cst_59 = arith.constant 3.200000e+01 : f32
    %122 = vector.broadcast %cst_59 : f32 to vector<8x1xf32>
    %123 = arith.divf %121, %122 : vector<8x1xf32>
    %124 = vector.broadcast %116 : vector<8x1xf32> to vector<8x32xf32>
    %125 = arith.subf %112, %124 : vector<8x32xf32>
    %cst_60 = arith.constant 9.99999997E-7 : f32
    %126 = vector.broadcast %cst_60 : f32 to vector<8x1xf32>
    %127 = arith.addf %123, %126 : vector<8x1xf32>
    %128 = math.rsqrt %127 : vector<8x1xf32>
    %129 = vector.broadcast %128 : vector<8x1xf32> to vector<8x32xf32>
    %130 = arith.mulf %125, %129 : vector<8x32xf32>
    %131 = vector.broadcast %13 : vector<1x32xf32> to vector<8x32xf32>
    %132 = arith.mulf %130, %131 : vector<8x32xf32>
    %133 = vector.broadcast %14 : vector<1x32xf32> to vector<8x32xf32>
    %134 = arith.addf %132, %133 : vector<8x32xf32>
    %c0_61 = arith.constant 0 : index
    %c0_62 = arith.constant 0 : index
    %c0_63 = arith.constant 0 : index
    %135 = vector.load %arg6[%c0_61, %c0_62, %c0_63] : memref<1x8x8xbf16, #tpu.memory_space<vmem>>, vector<1x8x8xbf16>
    %136 = vector.shape_cast %135 : vector<1x8x8xbf16> to vector<8x8xbf16>
    %137 = arith.extf %136 : vector<8x8xbf16> to vector<8x8xf32>
    %c0_64 = arith.constant 0 : index
    %c0_65 = arith.constant 0 : index
    %138 = vector.load %arg13[%c0_64, %c0_65] : memref<32x32xbf16, #tpu.memory_space<vmem>>, vector<32x32xbf16>
    %c0_66 = arith.constant 0 : index
    %c0_67 = arith.constant 0 : index
    %139 = vector.load %arg14[%c0_66, %c0_67] : memref<32x32xbf16, #tpu.memory_space<vmem>>, vector<32x32xbf16>
    %c0_68 = arith.constant 0 : index
    %c0_69 = arith.constant 0 : index
    %140 = vector.load %arg15[%c0_68, %c0_69] : memref<32x32xbf16, #tpu.memory_space<vmem>>, vector<32x32xbf16>
    %c0_70 = arith.constant 0 : index
    %c0_71 = arith.constant 0 : index
    %141 = vector.load %arg16[%c0_70, %c0_71] : memref<32x32xbf16, #tpu.memory_space<vmem>>, vector<32x32xbf16>
    %c0_72 = arith.constant 0 : index
    %c0_73 = arith.constant 0 : index
    %142 = vector.load %arg17[%c0_72, %c0_73] : memref<1x32xf32, #tpu.memory_space<vmem>>, vector<1x32xf32>
    %c0_74 = arith.constant 0 : index
    %c0_75 = arith.constant 0 : index
    %143 = vector.load %arg18[%c0_74, %c0_75] : memref<1x32xf32, #tpu.memory_space<vmem>>, vector<1x32xf32>
    %144 = arith.truncf %134 : vector<8x32xf32> to vector<8x32xbf16>
    %145 = arith.truncf %5 : vector<8x32xf32> to vector<8x32xbf16>
    %cst_76 = arith.constant dense<0.000000e+00> : vector<8x32xf32>
    %146 = tpu.matmul %144, %138, %cst_76 {dimension_numbers = #tpu.dot_dimension_numbers<[1], [0], [0], [1], [0, 0, 1, 1], [], []>} : vector<8x32xbf16>, vector<32x32xbf16>, vector<8x32xf32> -> vector<8x32xf32>
    %cst_77 = arith.constant 0.353553385 : f32
    %147 = vector.broadcast %cst_77 : f32 to vector<8x32xf32>
    %148 = arith.mulf %146, %147 : vector<8x32xf32>
    %cst_78 = arith.constant dense<0.000000e+00> : vector<8x32xf32>
    %149 = tpu.matmul %145, %139, %cst_78 {dimension_numbers = #tpu.dot_dimension_numbers<[1], [0], [0], [1], [0, 0, 1, 1], [], []>} : vector<8x32xbf16>, vector<32x32xbf16>, vector<8x32xf32> -> vector<8x32xf32>
    %cst_79 = arith.constant dense<0.000000e+00> : vector<8x32xf32>
    %150 = tpu.matmul %145, %140, %cst_79 {dimension_numbers = #tpu.dot_dimension_numbers<[1], [0], [0], [1], [0, 0, 1, 1], [], []>} : vector<8x32xbf16>, vector<32x32xbf16>, vector<8x32xf32> -> vector<8x32xf32>
    %151 = arith.truncf %148 : vector<8x32xf32> to vector<8x32xbf16>
    %152 = arith.truncf %149 : vector<8x32xf32> to vector<8x32xbf16>
    %153 = arith.truncf %150 : vector<8x32xf32> to vector<8x32xbf16>
    %154 = vector.extract_strided_slice %151 {offsets = [0, 0], sizes = [8, 8], strides = [1, 1]} : vector<8x32xbf16> to vector<8x8xbf16>
    %155 = vector.extract_strided_slice %152 {offsets = [0, 0], sizes = [8, 8], strides = [1, 1]} : vector<8x32xbf16> to vector<8x8xbf16>
    %156 = vector.extract_strided_slice %153 {offsets = [0, 0], sizes = [8, 8], strides = [1, 1]} : vector<8x32xbf16> to vector<8x8xbf16>
    %cst_80 = arith.constant dense<0.000000e+00> : vector<8x8xf32>
    %157 = tpu.matmul %154, %155, %cst_80 {dimension_numbers = #tpu.dot_dimension_numbers<[1], [1], [0], [0], [0, 0, 1, 0], [], []>} : vector<8x8xbf16>, vector<8x8xbf16>, vector<8x8xf32> -> vector<8x8xf32>
    %158 = arith.addf %157, %137 : vector<8x8xf32>
    %cst_81 = arith.constant dense<0xFF800000> : vector<8xf32>
    %159 = vector.multi_reduction <maximumf>, %158, %cst_81 [1] : vector<8x8xf32> to vector<8xf32>
    %160 = vector.shape_cast %159 : vector<8xf32> to vector<8x1xf32>
    %161 = vector.broadcast %160 : vector<8x1xf32> to vector<8x8xf32>
    %162 = arith.subf %158, %161 : vector<8x8xf32>
    %163 = math.exp %162 : vector<8x8xf32>
    %cst_82 = arith.constant dense<0.000000e+00> : vector<8xf32>
    %164 = vector.multi_reduction <add>, %163, %cst_82 [1] : vector<8x8xf32> to vector<8xf32>
    %165 = vector.shape_cast %164 : vector<8xf32> to vector<8x1xf32>
    %166 = tpu.reciprocal %165 {approx = true} : vector<8x1xf32> -> vector<8x1xf32>
    %167 = vector.broadcast %166 : vector<8x1xf32> to vector<8x8xf32>
    %168 = arith.mulf %163, %167 : vector<8x8xf32>
    %169 = arith.truncf %168 : vector<8x8xf32> to vector<8x8xbf16>
    %c0_83 = arith.constant 0 : index
    %c0_84 = arith.constant 0 : index
    %c0_85 = arith.constant 0 : index
    %c0_86 = arith.constant 0 : index
    %170 = vector.load %arg27[%c0_83, %c0_84, %c0_85, %c0_86] : memref<1x4x8x8xbf16, #tpu.memory_space<vmem>>, vector<1x1x8x8xbf16>
    %171 = vector.shape_cast %170 : vector<1x1x8x8xbf16> to vector<8x8xbf16>
    %172 = vector.shape_cast %169 : vector<8x8xbf16> to vector<1x1x8x8xbf16>
    tpu.vector_store %arg27[%c0_83, %c0_84, %c0_85, %c0_86], %172 {strides = array<i32>} : memref<1x4x8x8xbf16, #tpu.memory_space<vmem>>, vector<1x1x8x8xbf16>,
    %173 = arith.truncf %168 : vector<8x8xf32> to vector<8x8xbf16>
    %cst_87 = arith.constant dense<0.000000e+00> : vector<8x8xf32>
    %174 = tpu.matmul %173, %156, %cst_87 {dimension_numbers = #tpu.dot_dimension_numbers<[1], [0], [0], [1], [0, 0, 1, 1], [], []>} : vector<8x8xbf16>, vector<8x8xbf16>, vector<8x8xf32> -> vector<8x8xf32>
    %175 = vector.extract_strided_slice %151 {offsets = [0, 8], sizes = [8, 8], strides = [1, 1]} : vector<8x32xbf16> to vector<8x8xbf16>
    %176 = vector.extract_strided_slice %152 {offsets = [0, 8], sizes = [8, 8], strides = [1, 1]} : vector<8x32xbf16> to vector<8x8xbf16>
    %177 = vector.extract_strided_slice %153 {offsets = [0, 8], sizes = [8, 8], strides = [1, 1]} : vector<8x32xbf16> to vector<8x8xbf16>
    %cst_88 = arith.constant dense<0.000000e+00> : vector<8x8xf32>
    %178 = tpu.matmul %175, %176, %cst_88 {dimension_numbers = #tpu.dot_dimension_numbers<[1], [1], [0], [0], [0, 0, 1, 0], [], []>} : vector<8x8xbf16>, vector<8x8xbf16>, vector<8x8xf32> -> vector<8x8xf32>
    %179 = arith.addf %178, %137 : vector<8x8xf32>
    %cst_89 = arith.constant dense<0xFF800000> : vector<8xf32>
    %180 = vector.multi_reduction <maximumf>, %179, %cst_89 [1] : vector<8x8xf32> to vector<8xf32>
    %181 = vector.shape_cast %180 : vector<8xf32> to vector<8x1xf32>
    %182 = vector.broadcast %181 : vector<8x1xf32> to vector<8x8xf32>
    %183 = arith.subf %179, %182 : vector<8x8xf32>
    %184 = math.exp %183 : vector<8x8xf32>
    %cst_90 = arith.constant dense<0.000000e+00> : vector<8xf32>
    %185 = vector.multi_reduction <add>, %184, %cst_90 [1] : vector<8x8xf32> to vector<8xf32>
    %186 = vector.shape_cast %185 : vector<8xf32> to vector<8x1xf32>
    %187 = tpu.reciprocal %186 {approx = true} : vector<8x1xf32> -> vector<8x1xf32>
    %188 = vector.broadcast %187 : vector<8x1xf32> to vector<8x8xf32>
    %189 = arith.mulf %184, %188 : vector<8x8xf32>
    %190 = arith.truncf %189 : vector<8x8xf32> to vector<8x8xbf16>
    %c0_91 = arith.constant 0 : index
    %c1_92 = arith.constant 1 : index
    %c0_93 = arith.constant 0 : index
    %c0_94 = arith.constant 0 : index
    %191 = vector.load %arg27[%c0_91, %c1_92, %c0_93, %c0_94] : memref<1x4x8x8xbf16, #tpu.memory_space<vmem>>, vector<1x1x8x8xbf16>
    %192 = vector.shape_cast %191 : vector<1x1x8x8xbf16> to vector<8x8xbf16>
    %193 = vector.shape_cast %190 : vector<8x8xbf16> to vector<1x1x8x8xbf16>
    tpu.vector_store %arg27[%c0_91, %c1_92, %c0_93, %c0_94], %193 {strides = array<i32>} : memref<1x4x8x8xbf16, #tpu.memory_space<vmem>>, vector<1x1x8x8xbf16>,
    %194 = arith.truncf %189 : vector<8x8xf32> to vector<8x8xbf16>
    %cst_95 = arith.constant dense<0.000000e+00> : vector<8x8xf32>
    %195 = tpu.matmul %194, %177, %cst_95 {dimension_numbers = #tpu.dot_dimension_numbers<[1], [0], [0], [1], [0, 0, 1, 1], [], []>} : vector<8x8xbf16>, vector<8x8xbf16>, vector<8x8xf32> -> vector<8x8xf32>
    %196 = vector.extract_strided_slice %151 {offsets = [0, 16], sizes = [8, 8], strides = [1, 1]} : vector<8x32xbf16> to vector<8x8xbf16>
    %197 = vector.extract_strided_slice %152 {offsets = [0, 16], sizes = [8, 8], strides = [1, 1]} : vector<8x32xbf16> to vector<8x8xbf16>
    %198 = vector.extract_strided_slice %153 {offsets = [0, 16], sizes = [8, 8], strides = [1, 1]} : vector<8x32xbf16> to vector<8x8xbf16>
    %cst_96 = arith.constant dense<0.000000e+00> : vector<8x8xf32>
    %199 = tpu.matmul %196, %197, %cst_96 {dimension_numbers = #tpu.dot_dimension_numbers<[1], [1], [0], [0], [0, 0, 1, 0], [], []>} : vector<8x8xbf16>, vector<8x8xbf16>, vector<8x8xf32> -> vector<8x8xf32>
    %200 = arith.addf %199, %137 : vector<8x8xf32>
    %cst_97 = arith.constant dense<0xFF800000> : vector<8xf32>
    %201 = vector.multi_reduction <maximumf>, %200, %cst_97 [1] : vector<8x8xf32> to vector<8xf32>
    %202 = vector.shape_cast %201 : vector<8xf32> to vector<8x1xf32>
    %203 = vector.broadcast %202 : vector<8x1xf32> to vector<8x8xf32>
    %204 = arith.subf %200, %203 : vector<8x8xf32>
    %205 = math.exp %204 : vector<8x8xf32>
    %cst_98 = arith.constant dense<0.000000e+00> : vector<8xf32>
    %206 = vector.multi_reduction <add>, %205, %cst_98 [1] : vector<8x8xf32> to vector<8xf32>
    %207 = vector.shape_cast %206 : vector<8xf32> to vector<8x1xf32>
    %208 = tpu.reciprocal %207 {approx = true} : vector<8x1xf32> -> vector<8x1xf32>
    %209 = vector.broadcast %208 : vector<8x1xf32> to vector<8x8xf32>
    %210 = arith.mulf %205, %209 : vector<8x8xf32>
    %211 = arith.truncf %210 : vector<8x8xf32> to vector<8x8xbf16>
    %c0_99 = arith.constant 0 : index
    %c2_100 = arith.constant 2 : index
    %c0_101 = arith.constant 0 : index
    %c0_102 = arith.constant 0 : index
    %212 = vector.load %arg27[%c0_99, %c2_100, %c0_101, %c0_102] : memref<1x4x8x8xbf16, #tpu.memory_space<vmem>>, vector<1x1x8x8xbf16>
    %213 = vector.shape_cast %212 : vector<1x1x8x8xbf16> to vector<8x8xbf16>
    %214 = vector.shape_cast %211 : vector<8x8xbf16> to vector<1x1x8x8xbf16>
    tpu.vector_store %arg27[%c0_99, %c2_100, %c0_101, %c0_102], %214 {strides = array<i32>} : memref<1x4x8x8xbf16, #tpu.memory_space<vmem>>, vector<1x1x8x8xbf16>,
    %215 = arith.truncf %210 : vector<8x8xf32> to vector<8x8xbf16>
    %cst_103 = arith.constant dense<0.000000e+00> : vector<8x8xf32>
    %216 = tpu.matmul %215, %198, %cst_103 {dimension_numbers = #tpu.dot_dimension_numbers<[1], [0], [0], [1], [0, 0, 1, 1], [], []>} : vector<8x8xbf16>, vector<8x8xbf16>, vector<8x8xf32> -> vector<8x8xf32>
    %217 = vector.extract_strided_slice %151 {offsets = [0, 24], sizes = [8, 8], strides = [1, 1]} : vector<8x32xbf16> to vector<8x8xbf16>
    %218 = vector.extract_strided_slice %152 {offsets = [0, 24], sizes = [8, 8], strides = [1, 1]} : vector<8x32xbf16> to vector<8x8xbf16>
    %219 = vector.extract_strided_slice %153 {offsets = [0, 24], sizes = [8, 8], strides = [1, 1]} : vector<8x32xbf16> to vector<8x8xbf16>
    %cst_104 = arith.constant dense<0.000000e+00> : vector<8x8xf32>
    %220 = tpu.matmul %217, %218, %cst_104 {dimension_numbers = #tpu.dot_dimension_numbers<[1], [1], [0], [0], [0, 0, 1, 0], [], []>} : vector<8x8xbf16>, vector<8x8xbf16>, vector<8x8xf32> -> vector<8x8xf32>
    %221 = arith.addf %220, %137 : vector<8x8xf32>
    %cst_105 = arith.constant dense<0xFF800000> : vector<8xf32>
    %222 = vector.multi_reduction <maximumf>, %221, %cst_105 [1] : vector<8x8xf32> to vector<8xf32>
    %223 = vector.shape_cast %222 : vector<8xf32> to vector<8x1xf32>
    %224 = vector.broadcast %223 : vector<8x1xf32> to vector<8x8xf32>
    %225 = arith.subf %221, %224 : vector<8x8xf32>
    %226 = math.exp %225 : vector<8x8xf32>
    %cst_106 = arith.constant dense<0.000000e+00> : vector<8xf32>
    %227 = vector.multi_reduction <add>, %226, %cst_106 [1] : vector<8x8xf32> to vector<8xf32>
    %228 = vector.shape_cast %227 : vector<8xf32> to vector<8x1xf32>
    %229 = tpu.reciprocal %228 {approx = true} : vector<8x1xf32> -> vector<8x1xf32>
    %230 = vector.broadcast %229 : vector<8x1xf32> to vector<8x8xf32>
    %231 = arith.mulf %226, %230 : vector<8x8xf32>
    %232 = arith.truncf %231 : vector<8x8xf32> to vector<8x8xbf16>
    %c0_107 = arith.constant 0 : index
    %c3_108 = arith.constant 3 : index
    %c0_109 = arith.constant 0 : index
    %c0_110 = arith.constant 0 : index
    %233 = vector.load %arg27[%c0_107, %c3_108, %c0_109, %c0_110] : memref<1x4x8x8xbf16, #tpu.memory_space<vmem>>, vector<1x1x8x8xbf16>
    %234 = vector.shape_cast %233 : vector<1x1x8x8xbf16> to vector<8x8xbf16>
    %235 = vector.shape_cast %232 : vector<8x8xbf16> to vector<1x1x8x8xbf16>
    tpu.vector_store %arg27[%c0_107, %c3_108, %c0_109, %c0_110], %235 {strides = array<i32>} : memref<1x4x8x8xbf16, #tpu.memory_space<vmem>>, vector<1x1x8x8xbf16>,
    %236 = arith.truncf %231 : vector<8x8xf32> to vector<8x8xbf16>
    %cst_111 = arith.constant dense<0.000000e+00> : vector<8x8xf32>
    %237 = tpu.matmul %236, %219, %cst_111 {dimension_numbers = #tpu.dot_dimension_numbers<[1], [0], [0], [1], [0, 0, 1, 1], [], []>} : vector<8x8xbf16>, vector<8x8xbf16>, vector<8x8xf32> -> vector<8x8xf32>
    %238 = tpu.concatenate %174, %195, %216, %237 in 1 : vector<8x8xf32>, vector<8x8xf32>, vector<8x8xf32>, vector<8x8xf32> -> vector<8x32xf32>
    %239 = arith.truncf %238 : vector<8x32xf32> to vector<8x32xbf16>
    %cst_112 = arith.constant dense<0.000000e+00> : vector<8x32xf32>
    %240 = tpu.matmul %239, %141, %cst_112 {dimension_numbers = #tpu.dot_dimension_numbers<[1], [0], [0], [1], [0, 0, 1, 1], [], []>} : vector<8x32xbf16>, vector<32x32xbf16>, vector<8x32xf32> -> vector<8x32xf32>
    %241 = arith.addf %240, %134 : vector<8x32xf32>
    %cst_113 = arith.constant dense<0.000000e+00> : vector<8xf32>
    %242 = vector.multi_reduction <add>, %241, %cst_113 [1] : vector<8x32xf32> to vector<8xf32>
    %243 = vector.shape_cast %242 : vector<8xf32> to vector<8x1xf32>
    %cst_114 = arith.constant 3.200000e+01 : f32
    %244 = vector.broadcast %cst_114 : f32 to vector<8x1xf32>
    %245 = arith.divf %243, %244 : vector<8x1xf32>
    %246 = vector.broadcast %245 : vector<8x1xf32> to vector<8x32xf32>
    %247 = arith.subf %241, %246 : vector<8x32xf32>
    %248 = arith.mulf %247, %247 : vector<8x32xf32>
    %cst_115 = arith.constant dense<0.000000e+00> : vector<8xf32>
    %249 = vector.multi_reduction <add>, %248, %cst_115 [1] : vector<8x32xf32> to vector<8xf32>
    %250 = vector.shape_cast %249 : vector<8xf32> to vector<8x1xf32>
    %cst_116 = arith.constant 3.200000e+01 : f32
    %251 = vector.broadcast %cst_116 : f32 to vector<8x1xf32>
    %252 = arith.divf %250, %251 : vector<8x1xf32>
    %253 = vector.broadcast %245 : vector<8x1xf32> to vector<8x32xf32>
    %254 = arith.subf %241, %253 : vector<8x32xf32>
    %cst_117 = arith.constant 9.99999997E-7 : f32
    %255 = vector.broadcast %cst_117 : f32 to vector<8x1xf32>
    %256 = arith.addf %252, %255 : vector<8x1xf32>
    %257 = math.rsqrt %256 : vector<8x1xf32>
    %258 = vector.broadcast %257 : vector<8x1xf32> to vector<8x32xf32>
    %259 = arith.mulf %254, %258 : vector<8x32xf32>
    %260 = vector.broadcast %142 : vector<1x32xf32> to vector<8x32xf32>
    %261 = arith.mulf %259, %260 : vector<8x32xf32>
    %262 = vector.broadcast %143 : vector<1x32xf32> to vector<8x32xf32>
    %263 = arith.addf %261, %262 : vector<8x32xf32>
    %c0_118 = arith.constant 0 : index
    %c0_119 = arith.constant 0 : index
    %264 = vector.load %arg19[%c0_118, %c0_119] : memref<32x64xbf16, #tpu.memory_space<vmem>>, vector<32x64xbf16>
    %c0_120 = arith.constant 0 : index
    %c0_121 = arith.constant 0 : index
    %265 = vector.load %arg20[%c0_120, %c0_121] : memref<1x64xf32, #tpu.memory_space<vmem>>, vector<1x64xf32>
    %c0_122 = arith.constant 0 : index
    %c0_123 = arith.constant 0 : index
    %266 = vector.load %arg21[%c0_122, %c0_123] : memref<64x32xbf16, #tpu.memory_space<vmem>>, vector<64x32xbf16>
    %c0_124 = arith.constant 0 : index
    %c0_125 = arith.constant 0 : index
    %267 = vector.load %arg22[%c0_124, %c0_125] : memref<1x32xf32, #tpu.memory_space<vmem>>, vector<1x32xf32>
    %c0_126 = arith.constant 0 : index
    %c0_127 = arith.constant 0 : index
    %268 = vector.load %arg23[%c0_126, %c0_127] : memref<1x32xf32, #tpu.memory_space<vmem>>, vector<1x32xf32>
    %c0_128 = arith.constant 0 : index
    %c0_129 = arith.constant 0 : index
    %269 = vector.load %arg24[%c0_128, %c0_129] : memref<1x32xf32, #tpu.memory_space<vmem>>, vector<1x32xf32>
    %270 = arith.truncf %263 : vector<8x32xf32> to vector<8x32xbf16>
    %cst_130 = arith.constant dense<0.000000e+00> : vector<8x64xf32>
    %271 = tpu.matmul %270, %264, %cst_130 {dimension_numbers = #tpu.dot_dimension_numbers<[1], [0], [0], [1], [0, 0, 1, 1], [], []>} : vector<8x32xbf16>, vector<32x64xbf16>, vector<8x64xf32> -> vector<8x64xf32>
    %272 = vector.broadcast %265 : vector<1x64xf32> to vector<8x64xf32>
    %273 = arith.addf %271, %272 : vector<8x64xf32>
    %cst_131 = arith.constant 0.000000e+00 : f32
    %274 = vector.broadcast %cst_131 : f32 to vector<8x64xf32>
    %275 = arith.maximumf %273, %274 : vector<8x64xf32>
    %276 = arith.truncf %275 : vector<8x64xf32> to vector<8x64xbf16>
    %cst_132 = arith.constant dense<0.000000e+00> : vector<8x32xf32>
    %277 = tpu.matmul %276, %266, %cst_132 {dimension_numbers = #tpu.dot_dimension_numbers<[1], [0], [0], [1], [0, 0, 1, 1], [], []>} : vector<8x64xbf16>, vector<64x32xbf16>, vector<8x32xf32> -> vector<8x32xf32>
    %278 = vector.broadcast %267 : vector<1x32xf32> to vector<8x32xf32>
    %279 = arith.addf %277, %278 : vector<8x32xf32>
    %280 = arith.addf %279, %263 : vector<8x32xf32>
    %cst_133 = arith.constant dense<0.000000e+00> : vector<8xf32>
    %281 = vector.multi_reduction <add>, %280, %cst_133 [1] : vector<8x32xf32> to vector<8xf32>
    %282 = vector.shape_cast %281 : vector<8xf32> to vector<8x1xf32>
    %cst_134 = arith.constant 3.200000e+01 : f32
    %283 = vector.broadcast %cst_134 : f32 to vector<8x1xf32>
    %284 = arith.divf %282, %283 : vector<8x1xf32>
    %285 = vector.broadcast %284 : vector<8x1xf32> to vector<8x32xf32>
    %286 = arith.subf %280, %285 : vector<8x32xf32>
    %287 = arith.mulf %286, %286 : vector<8x32xf32>
    %cst_135 = arith.constant dense<0.000000e+00> : vector<8xf32>
    %288 = vector.multi_reduction <add>, %287, %cst_135 [1] : vector<8x32xf32> to vector<8xf32>
    %289 = vector.shape_cast %288 : vector<8xf32> to vector<8x1xf32>
    %cst_136 = arith.constant 3.200000e+01 : f32
    %290 = vector.broadcast %cst_136 : f32 to vector<8x1xf32>
    %291 = arith.divf %289, %290 : vector<8x1xf32>
    %292 = vector.broadcast %284 : vector<8x1xf32> to vector<8x32xf32>
    %293 = arith.subf %280, %292 : vector<8x32xf32>
    %cst_137 = arith.constant 9.99999997E-7 : f32
    %294 = vector.broadcast %cst_137 : f32 to vector<8x1xf32>
    %295 = arith.addf %291, %294 : vector<8x1xf32>
    %296 = math.rsqrt %295 : vector<8x1xf32>
    %297 = vector.broadcast %296 : vector<8x1xf32> to vector<8x32xf32>
    %298 = arith.mulf %293, %297 : vector<8x32xf32>
    %299 = vector.broadcast %268 : vector<1x32xf32> to vector<8x32xf32>
    %300 = arith.mulf %298, %299 : vector<8x32xf32>
    %301 = vector.broadcast %269 : vector<1x32xf32> to vector<8x32xf32>
    %302 = arith.addf %300, %301 : vector<8x32xf32>
    %c0_138 = arith.constant 0 : index
    %c0_139 = arith.constant 0 : index
    %c0_140 = arith.constant 0 : index
    %303 = vector.load %arg25[%c0_138, %c0_139, %c0_140] : memref<1x8x32xf32, #tpu.memory_space<vmem>>, vector<1x8x32xf32>
    %304 = vector.shape_cast %303 : vector<1x8x32xf32> to vector<8x32xf32>
    %305 = vector.shape_cast %302 : vector<8x32xf32> to vector<1x8x32xf32>
    tpu.vector_store %arg25[%c0_138, %c0_139, %c0_140], %305 {strides = array<i32>} : memref<1x8x32xf32, #tpu.memory_space<vmem>>, vector<1x8x32xf32>,
    return
  }
  func.func @transform_0(%arg0: i32, %arg1: i32) -> (i32, i32, i32) {
    %c0_i32 = arith.constant 0 : i32
    %c0_i32_0 = arith.constant 0 : i32
    return %arg0, %arg1, %c0_i32 : i32, i32, i32
  }
  func.func @transform_1(%arg0: i32, %arg1: i32) -> (i32, i32, i32) {
    %c0_i32 = arith.constant 0 : i32
    %c0_i32_0 = arith.constant 0 : i32
    %c0_i32_1 = arith.constant 0 : i32
    return %arg0, %c0_i32, %c0_i32_0 : i32, i32, i32
  }
  func.func @transform_2(%arg0: i32, %arg1: i32) -> (i32, i32, i32) {
    %c0_i32 = arith.constant 0 : i32
    %c0_i32_0 = arith.constant 0 : i32
    %c0_i32_1 = arith.constant 0 : i32
    return %arg0, %c0_i32, %c0_i32_0 : i32, i32, i32
  }
  func.func @transform_3(%arg0: i32, %arg1: i32) -> (i32, i32, i32) {
    %c0_i32 = arith.constant 0 : i32
    %c0_i32_0 = arith.constant 0 : i32
    return %arg0, %arg1, %c0_i32 : i32, i32, i32
  }
  func.func @transform_4(%arg0: i32, %arg1: i32) -> (i32, i32, i32) {
    %c0_i32 = arith.constant 0 : i32
    %c0_i32_0 = arith.constant 0 : i32
    return %arg0, %arg1, %c0_i32 : i32, i32, i32
  }
  func.func @transform_5(%arg0: i32, %arg1: i32) -> (i32, i32) {
    %c0_i32 = arith.constant 0 : i32
    %c0_i32_0 = arith.constant 0 : i32
    %c0_i32_1 = arith.constant 0 : i32
    return %c0_i32, %c0_i32_0 : i32, i32
  }
  func.func @transform_6(%arg0: i32, %arg1: i32) -> (i32, i32) {
    %c0_i32 = arith.constant 0 : i32
    %c0_i32_0 = arith.constant 0 : i32
    %c0_i32_1 = arith.constant 0 : i32
    return %c0_i32, %c0_i32_0 : i32, i32
  }
  func.func @transform_7(%arg0: i32, %arg1: i32) -> (i32, i32) {
    %c0_i32 = arith.constant 0 : i32
    %c0_i32_0 = arith.constant 0 : i32
    %c0_i32_1 = arith.constant 0 : i32
    return %c0_i32, %c0_i32_0 : i32, i32
  }
  func.func @transform_8(%arg0: i32, %arg1: i32) -> (i32, i32) {
    %c0_i32 = arith.constant 0 : i32
    %c0_i32_0 = arith.constant 0 : i32
    %c0_i32_1 = arith.constant 0 : i32
    return %c0_i32, %c0_i32_0 : i32, i32
  }
  func.func @transform_9(%arg0: i32, %arg1: i32) -> (i32, i32) {
    %c0_i32 = arith.constant 0 : i32
    %c0_i32_0 = arith.constant 0 : i32
    %c0_i32_1 = arith.constant 0 : i32
    return %c0_i32, %c0_i32_0 : i32, i32
  }
  func.func @transform_10(%arg0: i32, %arg1: i32) -> (i32, i32) {
    %c0_i32 = arith.constant 0 : i32
    %c0_i32_0 = arith.constant 0 : i32
    %c0_i32_1 = arith.constant 0 : i32
    return %c0_i32, %c0_i32_0 : i32, i32
  }
  func.func @transform_11(%arg0: i32, %arg1: i32) -> (i32, i32) {
    %c0_i32 = arith.constant 0 : i32
    %c0_i32_0 = arith.constant 0 : i32
    %c0_i32_1 = arith.constant 0 : i32
    return %c0_i32, %c0_i32_0 : i32, i32
  }
  func.func @transform_12(%arg0: i32, %arg1: i32) -> (i32, i32) {
    %c0_i32 = arith.constant 0 : i32
    %c0_i32_0 = arith.constant 0 : i32
    %c0_i32_1 = arith.constant 0 : i32
    return %c0_i32, %c0_i32_0 : i32, i32
  }
  func.func @transform_13(%arg0: i32, %arg1: i32) -> (i32, i32) {
    %c0_i32 = arith.constant 0 : i32
    %c0_i32_0 = arith.constant 0 : i32
    %c0_i32_1 = arith.constant 0 : i32
    return %c0_i32, %c0_i32_0 : i32, i32
  }
  func.func @transform_14(%arg0: i32, %arg1: i32) -> (i32, i32) {
    %c0_i32 = arith.constant 0 : i32
    %c0_i32_0 = arith.constant 0 : i32
    %c0_i32_1 = arith.constant 0 : i32
    return %c0_i32, %c0_i32_0 : i32, i32
  }
  func.func @transform_15(%arg0: i32, %arg1: i32) -> (i32, i32) {
    %c0_i32 = arith.constant 0 : i32
    %c0_i32_0 = arith.constant 0 : i32
    %c0_i32_1 = arith.constant 0 : i32
    return %c0_i32, %c0_i32_0 : i32, i32
  }
  func.func @transform_16(%arg0: i32, %arg1: i32) -> (i32, i32) {
    %c0_i32 = arith.constant 0 : i32
    %c0_i32_0 = arith.constant 0 : i32
    %c0_i32_1 = arith.constant 0 : i32
    return %c0_i32, %c0_i32_0 : i32, i32
  }
  func.func @transform_17(%arg0: i32, %arg1: i32) -> (i32, i32) {
    %c0_i32 = arith.constant 0 : i32
    %c0_i32_0 = arith.constant 0 : i32
    %c0_i32_1 = arith.constant 0 : i32
    return %c0_i32, %c0_i32_0 : i32, i32
  }
  func.func @transform_18(%arg0: i32, %arg1: i32) -> (i32, i32) {
    %c0_i32 = arith.constant 0 : i32
    %c0_i32_0 = arith.constant 0 : i32
    %c0_i32_1 = arith.constant 0 : i32
    return %c0_i32, %c0_i32_0 : i32, i32
  }
  func.func @transform_19(%arg0: i32, %arg1: i32) -> (i32, i32) {
    %c0_i32 = arith.constant 0 : i32
    %c0_i32_0 = arith.constant 0 : i32
    %c0_i32_1 = arith.constant 0 : i32
    return %c0_i32, %c0_i32_0 : i32, i32
  }
  func.func @transform_20(%arg0: i32, %arg1: i32) -> (i32, i32) {
    %c0_i32 = arith.constant 0 : i32
    %c0_i32_0 = arith.constant 0 : i32
    %c0_i32_1 = arith.constant 0 : i32
    return %c0_i32, %c0_i32_0 : i32, i32
  }
  func.func @transform_21(%arg0: i32, %arg1: i32) -> (i32, i32) {
    %c0_i32 = arith.constant 0 : i32
    %c0_i32_0 = arith.constant 0 : i32
    %c0_i32_1 = arith.constant 0 : i32
    return %c0_i32, %c0_i32_0 : i32, i32
  }
  func.func @transform_22(%arg0: i32, %arg1: i32) -> (i32, i32) {
    %c0_i32 = arith.constant 0 : i32
    %c0_i32_0 = arith.constant 0 : i32
    %c0_i32_1 = arith.constant 0 : i32
    return %c0_i32, %c0_i32_0 : i32, i32
  }
  func.func @transform_23(%arg0: i32, %arg1: i32) -> (i32, i32, i32) {
    %c0_i32 = arith.constant 0 : i32
    %c0_i32_0 = arith.constant 0 : i32
    return %arg0, %arg1, %c0_i32 : i32, i32, i32
  }
  func.func @transform_24(%arg0: i32, %arg1: i32) -> (i32, i32, i32, i32) {
    %c0_i32 = arith.constant 0 : i32
    %c0_i32_0 = arith.constant 0 : i32
    %c0_i32_1 = arith.constant 0 : i32
    return %arg0, %c0_i32, %arg1, %c0_i32_0 : i32, i32, i32, i32
  }
  func.func @transform_25(%arg0: i32, %arg1: i32) -> (i32, i32, i32, i32) {
    %c0_i32 = arith.constant 0 : i32
    %c0_i32_0 = arith.constant 0 : i32
    %c0_i32_1 = arith.constant 0 : i32
    return %arg0, %c0_i32, %arg1, %c0_i32_0 : i32, i32, i32, i32
  }
}

</mosaic_0001>

<llo_original>
// kernel: _lambda_.1
$region0: #{_lambda_.1}
  #allocation0 [shape = 'u32[]', space=smem, size = 0x4, offset = 0x4, fixed_abs, tag = 'smem constant byte address 0x4 - core index']
  #allocation1 [shape = 'u32[144,128]{1,0:T(1,128)}', space=vmem, size = 0x12000, scoped, tag = 'internal scratch']
  %s0 = inlined_call_operand.vmem [shape: f32[2,8,32], index: 0, kind: input, shape index: {}, may-alias: {0,1}]
  %s1 = inlined_call_operand.vmem [shape: f32[2,8,32], index: 1, kind: input, shape index: {}, may-alias: {0,1}]
  %s2 = inlined_call_operand.vmem [shape: f32[2,8,32], index: 2, kind: input, shape index: {}]
  %s3 = inlined_call_operand.vmem [shape: bf16[2,8,8], index: 3, kind: input, shape index: {}]
  %s4 = inlined_call_operand.vmem [shape: bf16[2,8,8], index: 4, kind: input, shape index: {}]
  %s5 = inlined_call_operand.vmem [shape: bf16[32,32], index: 5, kind: input, shape index: {}]
  %s6 = inlined_call_operand.vmem [shape: bf16[32,32], index: 6, kind: input, shape index: {}]
  %s7 = inlined_call_operand.vmem [shape: bf16[32,32], index: 7, kind: input, shape index: {}]
  %s8 = inlined_call_operand.vmem [shape: bf16[32,32], index: 8, kind: input, shape index: {}]
  %s9 = inlined_call_operand.vmem [shape: f32[1,32], index: 9, kind: input, shape index: {}]
  %s10 = inlined_call_operand.vmem [shape: f32[1,32], index: 10, kind: input, shape index: {}]
  %s11 = inlined_call_operand.vmem [shape: bf16[32,32], index: 11, kind: input, shape index: {}]
  %s12 = inlined_call_operand.vmem [shape: bf16[32,32], index: 12, kind: input, shape index: {}]
  %s13 = inlined_call_operand.vmem [shape: bf16[32,32], index: 13, kind: input, shape index: {}]
  %s14 = inlined_call_operand.vmem [shape: bf16[32,32], index: 14, kind: input, shape index: {}]
  %s15 = inlined_call_operand.vmem [shape: f32[1,32], index: 15, kind: input, shape index: {}]
  %s16 = inlined_call_operand.vmem [shape: f32[1,32], index: 16, kind: input, shape index: {}]
  %s17 = inlined_call_operand.vmem [shape: bf16[32,64], index: 17, kind: input, shape index: {}]
  %s18 = inlined_call_operand.vmem [shape: f32[1,64], index: 18, kind: input, shape index: {}]
  %s19 = inlined_call_operand.vmem [shape: bf16[64,32], index: 19, kind: input, shape index: {}]
  %s20 = inlined_call_operand.vmem [shape: f32[1,32], index: 20, kind: input, shape index: {}]
  %s21 = inlined_call_operand.vmem [shape: f32[1,32], index: 21, kind: input, shape index: {}]
  %s22 = inlined_call_operand.vmem [shape: f32[1,32], index: 22, kind: input, shape index: {}]
  %s23 = inlined_call_operand.hbm [shape: f32[2,8,32], index: 23, kind: output, shape index: {0}]
  %s24 = inlined_call_operand.hbm [shape: bf16[2,4,8,8], index: 24, kind: output, shape index: {1}]
  %s25 = inlined_call_operand.hbm [shape: bf16[2,4,8,8], index: 25, kind: output, shape index: {2}]
  %26 = xla_tuple %s23, %s24, %s25
  %s27 = sld [smem:[#allocation0]]
  $region141: #{_lambda_.1} parent=0
    _
  %s29 = ssub.s32 1, %s27
  %s30 = scalar_select 0, %s29, %s27
  $region1: #{_lambda_.1} parent=0
    #allocation2 [shape = 'u8[8192]{0}', space=vmem, size = 0x2000, scoped, tag = 'output window, operand 0']
    #allocation3 [shape = 's32[2]{0}', space=sflag, size = 0x8, scoped, tag = 'scoped memory for _lambda_.1']
    #allocation4 [shape = 'u8[16384]{0}', space=vmem, size = 0x4000, scoped, tag = 'output window, operand 1']
    #allocation5 [shape = 's32[2]{0}', space=sflag, size = 0x8, scoped, tag = 'scoped memory for _lambda_.1']
    #allocation6 [shape = 'u8[16384]{0}', space=vmem, size = 0x4000, scoped, tag = 'output window, operand 2']
    %31 = vsyncpa [#allocation3], 0
    %s32 = scalar_lea.sflag [#allocation3], 1
    %33 = vsyncpa %s32, 0
    %34 = vsyncpa [#allocation5], 0
    %s35 = scalar_lea.sflag [#allocation5], 1
    %36 = vsyncpa %s35, 0
    loop: start=0, step=1, limit=4
    $region2: #{_lambda_.1} parent=1 // loop_pre_header
      _
    $region3: #{_lambda_.1} parent=1 // loop_header
      %s38 = sphi 0, %s42
      %p39 = scmp.ge.s32.totalorder %s38, 4
      %s45 = sphi 0, %s57
      %s46 = sphi 0, %s53
      %s47 = sphi 0, %s45
      %s48 = sphi 0, %s46
      %s49 = sphi 0, %s47
      %s50 = sphi 0, %s48
      %s62 = sphi 0, %s64
      %s65 = sphi 0, %s62
      %s66 = sphi 0, %s65
      %s82 = sphi 0, %s66
      %s88 = sphi 0, %s90
      %s91 = sphi 0, %s88
      %s92 = sphi 0, %s91
      %s108 = sphi 0, %s92
      %s114 = sphi 0, %s116
      %s117 = sphi 0, %s114
      %s118 = sphi 0, %s117
      %s134 = sphi 0, %s118
      %s142 = sphi 0, %s144
      %s145 = sphi 0, %s142
      %s146 = sphi 0, %s145
      %s162 = sphi 0, %s146
      %s170 = sphi 0, %s172
      %s173 = sphi 0, %s170
      %s174 = sphi 0, %s173
      %s190 = sphi 0, %s174
      %s194 = sphi 0, %s194
      %s196 = sphi 0, %s194
      %s197 = sphi 0, %s196
      %s211 = sphi 0, %s197
      %s215 = sphi 0, %s215
      %s217 = sphi 0, %s215
      %s218 = sphi 0, %s217
      %s232 = sphi 0, %s218
      %s236 = sphi 0, %s236
      %s238 = sphi 0, %s236
      %s239 = sphi 0, %s238
      %s253 = sphi 0, %s239
      %s257 = sphi 0, %s257
      %s259 = sphi 0, %s257
      %s260 = sphi 0, %s259
      %s274 = sphi 0, %s260
      %s278 = sphi 0, %s278
      %s280 = sphi 0, %s278
      %s281 = sphi 0, %s280
      %s295 = sphi 0, %s281
      %s299 = sphi 0, %s299
      %s301 = sphi 0, %s299
      %s302 = sphi 0, %s301
      %s316 = sphi 0, %s302
      %s320 = sphi 0, %s320
      %s322 = sphi 0, %s320
      %s323 = sphi 0, %s322
      %s337 = sphi 0, %s323
      %s341 = sphi 0, %s341
      %s343 = sphi 0, %s341
      %s344 = sphi 0, %s343
      %s358 = sphi 0, %s344
      %s362 = sphi 0, %s362
      %s364 = sphi 0, %s362
      %s365 = sphi 0, %s364
      %s379 = sphi 0, %s365
      %s383 = sphi 0, %s383
      %s385 = sphi 0, %s383
      %s386 = sphi 0, %s385
      %s400 = sphi 0, %s386
      %s404 = sphi 0, %s404
      %s406 = sphi 0, %s404
      %s407 = sphi 0, %s406
      %s421 = sphi 0, %s407
      %s425 = sphi 0, %s425
      %s427 = sphi 0, %s425
      %s428 = sphi 0, %s427
      %s442 = sphi 0, %s428
      %s446 = sphi 0, %s446
      %s448 = sphi 0, %s446
      %s449 = sphi 0, %s448
      %s463 = sphi 0, %s449
      %s467 = sphi 0, %s467
      %s469 = sphi 0, %s467
      %s470 = sphi 0, %s469
      %s484 = sphi 0, %s470
      %s488 = sphi 0, %s488
      %s490 = sphi 0, %s488
      %s491 = sphi 0, %s490
      %s505 = sphi 0, %s491
      %s509 = sphi 0, %s509
      %s511 = sphi 0, %s509
      %s512 = sphi 0, %s511
      %s526 = sphi 0, %s512
      %s530 = sphi 0, %s530
      %s532 = sphi 0, %s530
      %s533 = sphi 0, %s532
      %s547 = sphi 0, %s533
      %s551 = sphi 0, %s551
      %s553 = sphi 0, %s551
      %s554 = sphi 0, %s553
      %s568 = sphi 0, %s554
      %s576 = sphi 0, %s578
      %s579 = sphi 0, %s576
      %s580 = sphi 0, %s579
      %s596 = sphi 0, %s580
      %s604 = sphi 0, %s606
      %s607 = sphi 0, %s604
      %s608 = sphi 0, %s607
      %s624 = sphi 0, %s608
      %s632 = sphi 0, %s634
      %s635 = sphi 0, %s632
      %s636 = sphi 0, %s635
      %s652 = sphi 0, %s636
    $region4: #{_lambda_.1} parent=1 // loop_header_branch
      %41 = sbr.rel (%p39) target = $region8
    $region5: #{_lambda_.1} parent=1 // loop_body
      %s43 = ssub.s32 %s38, 1
      %s44 = ssub.s32 %s38, 2
      %s51 = sadd.s32 1, %s46
      %p52 = scmp.ge.s32.totalorder %s51, 1
      %s53 = scalar_select %p52, 0, %s51
      %s54 = sadd.s32 1, %s45
      %s55 = scalar_select %p52, %s54, %s45
      %p56 = scmp.ge.s32.totalorder %s55, 2
      %s57 = scalar_select %p56, 0, %s55
      %s58 = ssub.s32 %s45, %s57
      %s59 = ssub.s32 %s46, %s53
      %s60 = sor.u32 %s58, %s59
      %p61 = scmp.eq.s32.totalorder %s60, 0
      %s63 = sadd.s32 %s62, 1
      %s64 = scalar_select %p61, %s62, %s63
      %p67 = pneg %p61
      %p68 = scmp.eq.s32.totalorder %s38, 1
      %p69 = por %p67, %p68
      %p70 = scmp.ne.s32.totalorder %s62, %s65
      %p71 = scmp.eq.s32.totalorder %s38, 0
      %p72 = por %p70, %p71
      %p73 = scmp.ne.s32.totalorder %s62, %s65
      %p74 = scmp.eq.s32.totalorder %s43, 1
      %p75 = por %p73, %p74
      %p76 = scmp.ne.s32.totalorder %s65, %s66
      %p77 = scmp.eq.s32.totalorder %s43, 0
      %p78 = por %p76, %p77
      %p79 = scmp.ne.s32.totalorder %s65, %s66
      %p80 = scmp.eq.s32.totalorder %s44, 1
      %p81 = por %p79, %p80
      %p83 = scmp.ne.s32.totalorder %s66, %s82
      %p84 = scmp.eq.s32.totalorder %s44, 0
      %p85 = por %p83, %p84
      %s86 = ssub.s32 %s45, %s57
      %p87 = scmp.eq.s32.totalorder %s86, 0
      %s89 = sadd.s32 %s88, 1
      %s90 = scalar_select %p87, %s88, %s89
      %p93 = pneg %p87
      %p94 = scmp.eq.s32.totalorder %s38, 1
      %p95 = por %p93, %p94
      %p96 = scmp.ne.s32.totalorder %s88, %s91
      %p97 = scmp.eq.s32.totalorder %s38, 0
      %p98 = por %p96, %p97
      %p99 = scmp.ne.s32.totalorder %s88, %s91
      %p100 = scmp.eq.s32.totalorder %s43, 1
      %p101 = por %p99, %p100
      %p102 = scmp.ne.s32.totalorder %s91, %s92
      %p103 = scmp.eq.s32.totalorder %s43, 0
      %p104 = por %p102, %p103
      %p105 = scmp.ne.s32.totalorder %s91, %s92
      %p106 = scmp.eq.s32.totalorder %s44, 1
      %p107 = por %p105, %p106
      %p109 = scmp.ne.s32.totalorder %s92, %s108
      %p110 = scmp.eq.s32.totalorder %s44, 0
      %p111 = por %p109, %p110
      %s112 = ssub.s32 %s45, %s57
      %p113 = scmp.eq.s32.totalorder %s112, 0
      %s115 = sadd.s32 %s114, 1
      %s116 = scalar_select %p113, %s114, %s115
      %p119 = pneg %p113
      %p120 = scmp.eq.s32.totalorder %s38, 1
      %p121 = por %p119, %p120
      %p122 = scmp.ne.s32.totalorder %s114, %s117
      %p123 = scmp.eq.s32.totalorder %s38, 0
      %p124 = por %p122, %p123
      %p125 = scmp.ne.s32.totalorder %s114, %s117
      %p126 = scmp.eq.s32.totalorder %s43, 1
      %p127 = por %p125, %p126
      %p128 = scmp.ne.s32.totalorder %s117, %s118
      %p129 = scmp.eq.s32.totalorder %s43, 0
      %p130 = por %p128, %p129
      %p131 = scmp.ne.s32.totalorder %s117, %s118
      %p132 = scmp.eq.s32.totalorder %s44, 1
      %p133 = por %p131, %p132
      %p135 = scmp.ne.s32.totalorder %s118, %s134
      %p136 = scmp.eq.s32.totalorder %s44, 0
      %p137 = por %p135, %p136
      %s138 = ssub.s32 %s45, %s57
      %s139 = ssub.s32 %s46, %s53
      %s140 = sor.u32 %s138, %s139
      %p141 = scmp.eq.s32.totalorder %s140, 0
      %s143 = sadd.s32 %s142, 1
      %s144 = scalar_select %p141, %s142, %s143
      %p147 = pneg %p141
      %p148 = scmp.eq.s32.totalorder %s38, 1
      %p149 = por %p147, %p148
      %p150 = scmp.ne.s32.totalorder %s142, %s145
      %p151 = scmp.eq.s32.totalorder %s38, 0
      %p152 = por %p150, %p151
      %p153 = scmp.ne.s32.totalorder %s142, %s145
      %p154 = scmp.eq.s32.totalorder %s43, 1
      %p155 = por %p153, %p154
      %p156 = scmp.ne.s32.totalorder %s145, %s146
      %p157 = scmp.eq.s32.totalorder %s43, 0
      %p158 = por %p156, %p157
      %p159 = scmp.ne.s32.totalorder %s145, %s146
      %p160 = scmp.eq.s32.totalorder %s44, 1
      %p161 = por %p159, %p160
      %p163 = scmp.ne.s32.totalorder %s146, %s162
      %p164 = scmp.eq.s32.totalorder %s44, 0
      %p165 = por %p163, %p164
      %s166 = ssub.s32 %s45, %s57
      %s167 = ssub.s32 %s46, %s53
      %s168 = sor.u32 %s166, %s167
      %p169 = scmp.eq.s32.totalorder %s168, 0
      %s171 = sadd.s32 %s170, 1
      %s172 = scalar_select %p169, %s170, %s171
      %p175 = pneg %p169
      %p176 = scmp.eq.s32.totalorder %s38, 1
      %p177 = por %p175, %p176
      %p178 = scmp.ne.s32.totalorder %s170, %s173
      %p179 = scmp.eq.s32.totalorder %s38, 0
      %p180 = por %p178, %p179
      %p181 = scmp.ne.s32.totalorder %s170, %s173
      %p182 = scmp.eq.s32.totalorder %s43, 1
      %p183 = por %p181, %p182
      %p184 = scmp.ne.s32.totalorder %s173, %s174
      %p185 = scmp.eq.s32.totalorder %s43, 0
      %p186 = por %p184, %p185
      %p187 = scmp.ne.s32.totalorder %s173, %s174
      %p188 = scmp.eq.s32.totalorder %s44, 1
      %p189 = por %p187, %p188
      %p191 = scmp.ne.s32.totalorder %s174, %s190
      %p192 = scmp.eq.s32.totalorder %s44, 0
      %p193 = por %p191, %p192
      %s195 = sadd.s32 %s194, 1
      %p198 = scmp.eq.s32.totalorder %s38, 1
      %p199 = scmp.ne.s32.totalorder %s194, %s196
      %p200 = scmp.eq.s32.totalorder %s38, 0
      %p201 = por %p199, %p200
      %p202 = scmp.ne.s32.totalorder %s194, %s196
      %p203 = scmp.eq.s32.totalorder %s43, 1
      %p204 = por %p202, %p203
      %p205 = scmp.ne.s32.totalorder %s196, %s197
      %p206 = scmp.eq.s32.totalorder %s43, 0
      %p207 = por %p205, %p206
      %p208 = scmp.ne.s32.totalorder %s196, %s197
      %p209 = scmp.eq.s32.totalorder %s44, 1
      %p210 = por %p208, %p209
      %p212 = scmp.ne.s32.totalorder %s197, %s211
      %p213 = scmp.eq.s32.totalorder %s44, 0
      %p214 = por %p212, %p213
      %s216 = sadd.s32 %s215, 1
      %p219 = scmp.eq.s32.totalorder %s38, 1
      %p220 = scmp.ne.s32.totalorder %s215, %s217
      %p221 = scmp.eq.s32.totalorder %s38, 0
      %p222 = por %p220, %p221
      %p223 = scmp.ne.s32.totalorder %s215, %s217
      %p224 = scmp.eq.s32.totalorder %s43, 1
      %p225 = por %p223, %p224
      %p226 = scmp.ne.s32.totalorder %s217, %s218
      %p227 = scmp.eq.s32.totalorder %s43, 0
      %p228 = por %p226, %p227
      %p229 = scmp.ne.s32.totalorder %s217, %s218
      %p230 = scmp.eq.s32.totalorder %s44, 1
      %p231 = por %p229, %p230
      %p233 = scmp.ne.s32.totalorder %s218, %s232
      %p234 = scmp.eq.s32.totalorder %s44, 0
      %p235 = por %p233, %p234
      %s237 = sadd.s32 %s236, 1
      %p240 = scmp.eq.s32.totalorder %s38, 1
      %p241 = scmp.ne.s32.totalorder %s236, %s238
      %p242 = scmp.eq.s32.totalorder %s38, 0
      %p243 = por %p241, %p242
      %p244 = scmp.ne.s32.totalorder %s236, %s238
      %p245 = scmp.eq.s32.totalorder %s43, 1
      %p246 = por %p244, %p245
      %p247 = scmp.ne.s32.totalorder %s238, %s239
      %p248 = scmp.eq.s32.totalorder %s43, 0
      %p249 = por %p247, %p248
      %p250 = scmp.ne.s32.totalorder %s238, %s239
      %p251 = scmp.eq.s32.totalorder %s44, 1
      %p252 = por %p250, %p251
      %p254 = scmp.ne.s32.totalorder %s239, %s253
      %p255 = scmp.eq.s32.totalorder %s44, 0
      %p256 = por %p254, %p255
      %s258 = sadd.s32 %s257, 1
      %p261 = scmp.eq.s32.totalorder %s38, 1
      %p262 = scmp.ne.s32.totalorder %s257, %s259
      %p263 = scmp.eq.s32.totalorder %s38, 0
      %p264 = por %p262, %p263
      %p265 = scmp.ne.s32.totalorder %s257, %s259
      %p266 = scmp.eq.s32.totalorder %s43, 1
      %p267 = por %p265, %p266
      %p268 = scmp.ne.s32.totalorder %s259, %s260
      %p269 = scmp.eq.s32.totalorder %s43, 0
      %p270 = por %p268, %p269
      %p271 = scmp.ne.s32.totalorder %s259, %s260
      %p272 = scmp.eq.s32.totalorder %s44, 1
      %p273 = por %p271, %p272
      %p275 = scmp.ne.s32.totalorder %s260, %s274
      %p276 = scmp.eq.s32.totalorder %s44, 0
      %p277 = por %p275, %p276
      %s279 = sadd.s32 %s278, 1
      %p282 = scmp.eq.s32.totalorder %s38, 1
      %p283 = scmp.ne.s32.totalorder %s278, %s280
      %p284 = scmp.eq.s32.totalorder %s38, 0
      %p285 = por %p283, %p284
      %p286 = scmp.ne.s32.totalorder %s278, %s280
      %p287 = scmp.eq.s32.totalorder %s43, 1
      %p288 = por %p286, %p287
      %p289 = scmp.ne.s32.totalorder %s280, %s281
      %p290 = scmp.eq.s32.totalorder %s43, 0
      %p291 = por %p289, %p290
      %p292 = scmp.ne.s32.totalorder %s280, %s281
      %p293 = scmp.eq.s32.totalorder %s44, 1
      %p294 = por %p292, %p293
      %p296 = scmp.ne.s32.totalorder %s281, %s295
      %p297 = scmp.eq.s32.totalorder %s44, 0
      %p298 = por %p296, %p297
      %s300 = sadd.s32 %s299, 1
      %p303 = scmp.eq.s32.totalorder %s38, 1
      %p304 = scmp.ne.s32.totalorder %s299, %s301
      %p305 = scmp.eq.s32.totalorder %s38, 0
      %p306 = por %p304, %p305
      %p307 = scmp.ne.s32.totalorder %s299, %s301
      %p308 = scmp.eq.s32.totalorder %s43, 1
      %p309 = por %p307, %p308
      %p310 = scmp.ne.s32.totalorder %s301, %s302
      %p311 = scmp.eq.s32.totalorder %s43, 0
      %p312 = por %p310, %p311
      %p313 = scmp.ne.s32.totalorder %s301, %s302
      %p314 = scmp.eq.s32.totalorder %s44, 1
      %p315 = por %p313, %p314
      %p317 = scmp.ne.s32.totalorder %s302, %s316
      %p318 = scmp.eq.s32.totalorder %s44, 0
      %p319 = por %p317, %p318
      %s321 = sadd.s32 %s320, 1
      %p324 = scmp.eq.s32.totalorder %s38, 1
      %p325 = scmp.ne.s32.totalorder %s320, %s322
      %p326 = scmp.eq.s32.totalorder %s38, 0
      %p327 = por %p325, %p326
      %p328 = scmp.ne.s32.totalorder %s320, %s322
      %p329 = scmp.eq.s32.totalorder %s43, 1
      %p330 = por %p328, %p329
      %p331 = scmp.ne.s32.totalorder %s322, %s323
      %p332 = scmp.eq.s32.totalorder %s43, 0
      %p333 = por %p331, %p332
      %p334 = scmp.ne.s32.totalorder %s322, %s323
      %p335 = scmp.eq.s32.totalorder %s44, 1
      %p336 = por %p334, %p335
      %p338 = scmp.ne.s32.totalorder %s323, %s337
      %p339 = scmp.eq.s32.totalorder %s44, 0
      %p340 = por %p338, %p339
      %s342 = sadd.s32 %s341, 1
      %p345 = scmp.eq.s32.totalorder %s38, 1
      %p346 = scmp.ne.s32.totalorder %s341, %s343
      %p347 = scmp.eq.s32.totalorder %s38, 0
      %p348 = por %p346, %p347
      %p349 = scmp.ne.s32.totalorder %s341, %s343
      %p350 = scmp.eq.s32.totalorder %s43, 1
      %p351 = por %p349, %p350
      %p352 = scmp.ne.s32.totalorder %s343, %s344
      %p353 = scmp.eq.s32.totalorder %s43, 0
      %p354 = por %p352, %p353
      %p355 = scmp.ne.s32.totalorder %s343, %s344
      %p356 = scmp.eq.s32.totalorder %s44, 1
      %p357 = por %p355, %p356
      %p359 = scmp.ne.s32.totalorder %s344, %s358
      %p360 = scmp.eq.s32.totalorder %s44, 0
      %p361 = por %p359, %p360
      %s363 = sadd.s32 %s362, 1
      %p366 = scmp.eq.s32.totalorder %s38, 1
      %p367 = scmp.ne.s32.totalorder %s362, %s364
      %p368 = scmp.eq.s32.totalorder %s38, 0
      %p369 = por %p367, %p368
      %p370 = scmp.ne.s32.totalorder %s362, %s364
      %p371 = scmp.eq.s32.totalorder %s43, 1
      %p372 = por %p370, %p371
      %p373 = scmp.ne.s32.totalorder %s364, %s365
      %p374 = scmp.eq.s32.totalorder %s43, 0
      %p375 = por %p373, %p374
      %p376 = scmp.ne.s32.totalorder %s364, %s365
      %p377 = scmp.eq.s32.totalorder %s44, 1
      %p378 = por %p376, %p377
      %p380 = scmp.ne.s32.totalorder %s365, %s379
      %p381 = scmp.eq.s32.totalorder %s44, 0
      %p382 = por %p380, %p381
      %s384 = sadd.s32 %s383, 1
      %p387 = scmp.eq.s32.totalorder %s38, 1
      %p388 = scmp.ne.s32.totalorder %s383, %s385
      %p389 = scmp.eq.s32.totalorder %s38, 0
      %p390 = por %p388, %p389
      %p391 = scmp.ne.s32.totalorder %s383, %s385
      %p392 = scmp.eq.s32.totalorder %s43, 1
      %p393 = por %p391, %p392
      %p394 = scmp.ne.s32.totalorder %s385, %s386
      %p395 = scmp.eq.s32.totalorder %s43, 0
      %p396 = por %p394, %p395
      %p397 = scmp.ne.s32.totalorder %s385, %s386
      %p398 = scmp.eq.s32.totalorder %s44, 1
      %p399 = por %p397, %p398
      %p401 = scmp.ne.s32.totalorder %s386, %s400
      %p402 = scmp.eq.s32.totalorder %s44, 0
      %p403 = por %p401, %p402
      %s405 = sadd.s32 %s404, 1
      %p408 = scmp.eq.s32.totalorder %s38, 1
      %p409 = scmp.ne.s32.totalorder %s404, %s406
      %p410 = scmp.eq.s32.totalorder %s38, 0
      %p411 = por %p409, %p410
      %p412 = scmp.ne.s32.totalorder %s404, %s406
      %p413 = scmp.eq.s32.totalorder %s43, 1
      %p414 = por %p412, %p413
      %p415 = scmp.ne.s32.totalorder %s406, %s407
      %p416 = scmp.eq.s32.totalorder %s43, 0
      %p417 = por %p415, %p416
      %p418 = scmp.ne.s32.totalorder %s406, %s407
      %p419 = scmp.eq.s32.totalorder %s44, 1
      %p420 = por %p418, %p419
      %p422 = scmp.ne.s32.totalorder %s407, %s421
      %p423 = scmp.eq.s32.totalorder %s44, 0
      %p424 = por %p422, %p423
      %s426 = sadd.s32 %s425, 1
      %p429 = scmp.eq.s32.totalorder %s38, 1
      %p430 = scmp.ne.s32.totalorder %s425, %s427
      %p431 = scmp.eq.s32.totalorder %s38, 0
      %p432 = por %p430, %p431
      %p433 = scmp.ne.s32.totalorder %s425, %s427
      %p434 = scmp.eq.s32.totalorder %s43, 1
      %p435 = por %p433, %p434
      %p436 = scmp.ne.s32.totalorder %s427, %s428
      %p437 = scmp.eq.s32.totalorder %s43, 0
      %p438 = por %p436, %p437
      %p439 = scmp.ne.s32.totalorder %s427, %s428
      %p440 = scmp.eq.s32.totalorder %s44, 1
      %p441 = por %p439, %p440
      %p443 = scmp.ne.s32.totalorder %s428, %s442
      %p444 = scmp.eq.s32.totalorder %s44, 0
      %p445 = por %p443, %p444
      %s447 = sadd.s32 %s446, 1
      %p450 = scmp.eq.s32.totalorder %s38, 1
      %p451 = scmp.ne.s32.totalorder %s446, %s448
      %p452 = scmp.eq.s32.totalorder %s38, 0
      %p453 = por %p451, %p452
      %p454 = scmp.ne.s32.totalorder %s446, %s448
      %p455 = scmp.eq.s32.totalorder %s43, 1
      %p456 = por %p454, %p455
      %p457 = scmp.ne.s32.totalorder %s448, %s449
      %p458 = scmp.eq.s32.totalorder %s43, 0
      %p459 = por %p457, %p458
      %p460 = scmp.ne.s32.totalorder %s448, %s449
      %p461 = scmp.eq.s32.totalorder %s44, 1
      %p462 = por %p460, %p461
      %p464 = scmp.ne.s32.totalorder %s449, %s463
      %p465 = scmp.eq.s32.totalorder %s44, 0
      %p466 = por %p464, %p465
      %s468 = sadd.s32 %s467, 1
      %p471 = scmp.eq.s32.totalorder %s38, 1
      %p472 = scmp.ne.s32.totalorder %s467, %s469
      %p473 = scmp.eq.s32.totalorder %s38, 0
      %p474 = por %p472, %p473
      %p475 = scmp.ne.s32.totalorder %s467, %s469
      %p476 = scmp.eq.s32.totalorder %s43, 1
      %p477 = por %p475, %p476
      %p478 = scmp.ne.s32.totalorder %s469, %s470
      %p479 = scmp.eq.s32.totalorder %s43, 0
      %p480 = por %p478, %p479
      %p481 = scmp.ne.s32.totalorder %s469, %s470
      %p482 = scmp.eq.s32.totalorder %s44, 1
      %p483 = por %p481, %p482
      %p485 = scmp.ne.s32.totalorder %s470, %s484
      %p486 = scmp.eq.s32.totalorder %s44, 0
      %p487 = por %p485, %p486
      %s489 = sadd.s32 %s488, 1
      %p492 = scmp.eq.s32.totalorder %s38, 1
      %p493 = scmp.ne.s32.totalorder %s488, %s490
      %p494 = scmp.eq.s32.totalorder %s38, 0
      %p495 = por %p493, %p494
      %p496 = scmp.ne.s32.totalorder %s488, %s490
      %p497 = scmp.eq.s32.totalorder %s43, 1
      %p498 = por %p496, %p497
      %p499 = scmp.ne.s32.totalorder %s490, %s491
      %p500 = scmp.eq.s32.totalorder %s43, 0
      %p501 = por %p499, %p500
      %p502 = scmp.ne.s32.totalorder %s490, %s491
      %p503 = scmp.eq.s32.totalorder %s44, 1
      %p504 = por %p502, %p503
      %p506 = scmp.ne.s32.totalorder %s491, %s505
      %p507 = scmp.eq.s32.totalorder %s44, 0
      %p508 = por %p506, %p507
      %s510 = sadd.s32 %s509, 1
      %p513 = scmp.eq.s32.totalorder %s38, 1
      %p514 = scmp.ne.s32.totalorder %s509, %s511
      %p515 = scmp.eq.s32.totalorder %s38, 0
      %p516 = por %p514, %p515
      %p517 = scmp.ne.s32.totalorder %s509, %s511
      %p518 = scmp.eq.s32.totalorder %s43, 1
      %p519 = por %p517, %p518
      %p520 = scmp.ne.s32.totalorder %s511, %s512
      %p521 = scmp.eq.s32.totalorder %s43, 0
      %p522 = por %p520, %p521
      %p523 = scmp.ne.s32.totalorder %s511, %s512
      %p524 = scmp.eq.s32.totalorder %s44, 1
      %p525 = por %p523, %p524
      %p527 = scmp.ne.s32.totalorder %s512, %s526
      %p528 = scmp.eq.s32.totalorder %s44, 0
      %p529 = por %p527, %p528
      %s531 = sadd.s32 %s530, 1
      %p534 = scmp.eq.s32.totalorder %s38, 1
      %p535 = scmp.ne.s32.totalorder %s530, %s532
      %p536 = scmp.eq.s32.totalorder %s38, 0
      %p537 = por %p535, %p536
      %p538 = scmp.ne.s32.totalorder %s530, %s532
      %p539 = scmp.eq.s32.totalorder %s43, 1
      %p540 = por %p538, %p539
      %p541 = scmp.ne.s32.totalorder %s532, %s533
      %p542 = scmp.eq.s32.totalorder %s43, 0
      %p543 = por %p541, %p542
      %p544 = scmp.ne.s32.totalorder %s532, %s533
      %p545 = scmp.eq.s32.totalorder %s44, 1
      %p546 = por %p544, %p545
      %p548 = scmp.ne.s32.totalorder %s533, %s547
      %p549 = scmp.eq.s32.totalorder %s44, 0
      %p550 = por %p548, %p549
      %s552 = sadd.s32 %s551, 1
      %p555 = scmp.eq.s32.totalorder %s38, 1
      %p556 = scmp.ne.s32.totalorder %s551, %s553
      %p557 = scmp.eq.s32.totalorder %s38, 0
      %p558 = por %p556, %p557
      %p559 = scmp.ne.s32.totalorder %s551, %s553
      %p560 = scmp.eq.s32.totalorder %s43, 1
      %p561 = por %p559, %p560
      %p562 = scmp.ne.s32.totalorder %s553, %s554
      %p563 = scmp.eq.s32.totalorder %s43, 0
      %p564 = por %p562, %p563
      %p565 = scmp.ne.s32.totalorder %s553, %s554
      %p566 = scmp.eq.s32.totalorder %s44, 1
      %p567 = por %p565, %p566
      %p569 = scmp.ne.s32.totalorder %s554, %s568
      %p570 = scmp.eq.s32.totalorder %s44, 0
      %p571 = por %p569, %p570
      %s572 = ssub.s32 %s45, %s57
      %s573 = ssub.s32 %s46, %s53
      %s574 = sor.u32 %s572, %s573
      %p575 = scmp.eq.s32.totalorder %s574, 0
      %s577 = sadd.s32 %s576, 1
      %s578 = scalar_select %p575, %s576, %s577
      %p581 = pneg %p575
      %p582 = scmp.eq.s32.totalorder %s38, 1
      %p583 = por %p581, %p582
      %p584 = scmp.ne.s32.totalorder %s576, %s579
      %p585 = scmp.eq.s32.totalorder %s38, 0
      %p586 = por %p584, %p585
      %p587 = scmp.ne.s32.totalorder %s576, %s579
      %p588 = scmp.eq.s32.totalorder %s43, 1
      %p589 = por %p587, %p588
      %p590 = scmp.ne.s32.totalorder %s579, %s580
      %p591 = scmp.eq.s32.totalorder %s43, 0
      %p592 = por %p590, %p591
      %p593 = scmp.ne.s32.totalorder %s579, %s580
      %p594 = scmp.eq.s32.totalorder %s44, 1
      %p595 = por %p593, %p594
      %p597 = scmp.ne.s32.totalorder %s580, %s596
      %p598 = scmp.eq.s32.totalorder %s44, 0
      %p599 = por %p597, %p598
      %s600 = ssub.s32 %s45, %s57
      %s601 = ssub.s32 %s46, %s53
      %s602 = sor.u32 %s600, %s601
      %p603 = scmp.eq.s32.totalorder %s602, 0
      %s605 = sadd.s32 %s604, 1
      %s606 = scalar_select %p603, %s604, %s605
      %p609 = pneg %p603
      %p610 = scmp.eq.s32.totalorder %s38, 1
      %p611 = por %p609, %p610
      %p612 = scmp.ne.s32.totalorder %s604, %s607
      %p613 = scmp.eq.s32.totalorder %s38, 0
      %p614 = por %p612, %p613
      %p615 = scmp.ne.s32.totalorder %s604, %s607
      %p616 = scmp.eq.s32.totalorder %s43, 1
      %p617 = por %p615, %p616
      %p618 = scmp.ne.s32.totalorder %s607, %s608
      %p619 = scmp.eq.s32.totalorder %s43, 0
      %p620 = por %p618, %p619
      %p621 = scmp.ne.s32.totalorder %s607, %s608
      %p622 = scmp.eq.s32.totalorder %s44, 1
      %p623 = por %p621, %p622
      %p625 = scmp.ne.s32.totalorder %s608, %s624
      %p626 = scmp.eq.s32.totalorder %s44, 0
      %p627 = por %p625, %p626
      %s628 = ssub.s32 %s45, %s57
      %s629 = ssub.s32 %s46, %s53
      %s630 = sor.u32 %s628, %s629
      %p631 = scmp.eq.s32.totalorder %s630, 0
      %s633 = sadd.s32 %s632, 1
      %s634 = scalar_select %p631, %s632, %s633
      %p637 = pneg %p631
      %p638 = scmp.eq.s32.totalorder %s38, 1
      %p639 = por %p637, %p638
      %p640 = scmp.ne.s32.totalorder %s632, %s635
      %p641 = scmp.eq.s32.totalorder %s38, 0
      %p642 = por %p640, %p641
      %p643 = scmp.ne.s32.totalorder %s632, %s635
      %p644 = scmp.eq.s32.totalorder %s43, 1
      %p645 = por %p643, %p644
      %p646 = scmp.ne.s32.totalorder %s635, %s636
      %p647 = scmp.eq.s32.totalorder %s43, 0
      %p648 = por %p646, %p647
      %p649 = scmp.ne.s32.totalorder %s635, %s636
      %p650 = scmp.eq.s32.totalorder %s44, 1
      %p651 = por %p649, %p650
      %p653 = scmp.ne.s32.totalorder %s636, %s652
      %p654 = scmp.eq.s32.totalorder %s44, 0
      %p655 = por %p653, %p654
      %p656 = scmp.le.s32.totalorder 1, %s38
      %p657 = scmp.lt.s32.totalorder %s38, 3
      %p658 = pnand %p656, %p657
      %p659 = pneg %p658
      // Predicated region
      $region9: #{_lambda_.1} parent=5 // pred_check
        _
      $region10: #{_lambda_.1} parent=5 // pred_check_branch
        %661 = sbr.rel (%p658) target = $region12
      $region11: #{_lambda_.1} parent=5 // pred_region
        %s662 = ssub.s32 %s38, 1
        // Predicated region
        $region13: #{_lambda_.1} parent=11 // pred_check
          %p663 = pneg %p207
        $region14: #{_lambda_.1} parent=11 // pred_check_branch
          %665 = sbr.rel (%p663) target = $region16
        $region15: #{_lambda_.1} parent=11 // pred_region
          _
        $region16: #{_lambda_.1} parent=11 // pred_fallthru
          _
        // Predicated region
        $region17: #{_lambda_.1} parent=11 // pred_check
          %p666 = pneg %p228
        $region18: #{_lambda_.1} parent=11 // pred_check_branch
          %668 = sbr.rel (%p666) target = $region20
        $region19: #{_lambda_.1} parent=11 // pred_region
          _
        $region20: #{_lambda_.1} parent=11 // pred_fallthru
          _
        // Predicated region
        $region21: #{_lambda_.1} parent=11 // pred_check
          %p669 = pneg %p249
        $region22: #{_lambda_.1} parent=11 // pred_check_branch
          %671 = sbr.rel (%p669) target = $region24
        $region23: #{_lambda_.1} parent=11 // pred_region
          _
        $region24: #{_lambda_.1} parent=11 // pred_fallthru
          _
        // Predicated region
        $region25: #{_lambda_.1} parent=11 // pred_check
          %p672 = pneg %p270
        $region26: #{_lambda_.1} parent=11 // pred_check_branch
          %674 = sbr.rel (%p672) target = $region28
        $region27: #{_lambda_.1} parent=11 // pred_region
          _
        $region28: #{_lambda_.1} parent=11 // pred_fallthru
          _
        // Predicated region
        $region29: #{_lambda_.1} parent=11 // pred_check
          %p675 = pneg %p291
        $region30: #{_lambda_.1} parent=11 // pred_check_branch
          %677 = sbr.rel (%p675) target = $region32
        $region31: #{_lambda_.1} parent=11 // pred_region
          _
        $region32: #{_lambda_.1} parent=11 // pred_fallthru
          _
        // Predicated region
        $region33: #{_lambda_.1} parent=11 // pred_check
          %p678 = pneg %p312
        $region34: #{_lambda_.1} parent=11 // pred_check_branch
          %680 = sbr.rel (%p678) target = $region36
        $region35: #{_lambda_.1} parent=11 // pred_region
          _
        $region36: #{_lambda_.1} parent=11 // pred_fallthru
          _
        // Predicated region
        $region37: #{_lambda_.1} parent=11 // pred_check
          %p681 = pneg %p333
        $region38: #{_lambda_.1} parent=11 // pred_check_branch
          %683 = sbr.rel (%p681) target = $region40
        $region39: #{_lambda_.1} parent=11 // pred_region
          _
        $region40: #{_lambda_.1} parent=11 // pred_fallthru
          _
        // Predicated region
        $region41: #{_lambda_.1} parent=11 // pred_check
          %p684 = pneg %p354
        $region42: #{_lambda_.1} parent=11 // pred_check_branch
          %686 = sbr.rel (%p684) target = $region44
        $region43: #{_lambda_.1} parent=11 // pred_region
          _
        $region44: #{_lambda_.1} parent=11 // pred_fallthru
          _
        // Predicated region
        $region45: #{_lambda_.1} parent=11 // pred_check
          %p687 = pneg %p375
        $region46: #{_lambda_.1} parent=11 // pred_check_branch
          %689 = sbr.rel (%p687) target = $region48
        $region47: #{_lambda_.1} parent=11 // pred_region
          _
        $region48: #{_lambda_.1} parent=11 // pred_fallthru
          _
        // Predicated region
        $region49: #{_lambda_.1} parent=11 // pred_check
          %p690 = pneg %p396
        $region50: #{_lambda_.1} parent=11 // pred_check_branch
          %692 = sbr.rel (%p690) target = $region52
        $region51: #{_lambda_.1} parent=11 // pred_region
          _
        $region52: #{_lambda_.1} parent=11 // pred_fallthru
          _
        // Predicated region
        $region53: #{_lambda_.1} parent=11 // pred_check
          %p693 = pneg %p417
        $region54: #{_lambda_.1} parent=11 // pred_check_branch
          %695 = sbr.rel (%p693) target = $region56
        $region55: #{_lambda_.1} parent=11 // pred_region
          _
        $region56: #{_lambda_.1} parent=11 // pred_fallthru
          _
        // Predicated region
        $region57: #{_lambda_.1} parent=11 // pred_check
          %p696 = pneg %p438
        $region58: #{_lambda_.1} parent=11 // pred_check_branch
          %698 = sbr.rel (%p696) target = $region60
        $region59: #{_lambda_.1} parent=11 // pred_region
          _
        $region60: #{_lambda_.1} parent=11 // pred_fallthru
          _
        // Predicated region
        $region61: #{_lambda_.1} parent=11 // pred_check
          %p699 = pneg %p459
        $region62: #{_lambda_.1} parent=11 // pred_check_branch
          %701 = sbr.rel (%p699) target = $region64
        $region63: #{_lambda_.1} parent=11 // pred_region
          _
        $region64: #{_lambda_.1} parent=11 // pred_fallthru
          _
        // Predicated region
        $region65: #{_lambda_.1} parent=11 // pred_check
          %p702 = pneg %p480
        $region66: #{_lambda_.1} parent=11 // pred_check_branch
          %704 = sbr.rel (%p702) target = $region68
        $region67: #{_lambda_.1} parent=11 // pred_region
          _
        $region68: #{_lambda_.1} parent=11 // pred_fallthru
          _
        // Predicated region
        $region69: #{_lambda_.1} parent=11 // pred_check
          %p705 = pneg %p501
        $region70: #{_lambda_.1} parent=11 // pred_check_branch
          %707 = sbr.rel (%p705) target = $region72
        $region71: #{_lambda_.1} parent=11 // pred_region
          _
        $region72: #{_lambda_.1} parent=11 // pred_fallthru
          _
        // Predicated region
        $region73: #{_lambda_.1} parent=11 // pred_check
          %p708 = pneg %p522
        $region74: #{_lambda_.1} parent=11 // pred_check_branch
          %710 = sbr.rel (%p708) target = $region76
        $region75: #{_lambda_.1} parent=11 // pred_region
          _
        $region76: #{_lambda_.1} parent=11 // pred_fallthru
          _
        // Predicated region
        $region77: #{_lambda_.1} parent=11 // pred_check
          %p711 = pneg %p543
        $region78: #{_lambda_.1} parent=11 // pred_check_branch
          %713 = sbr.rel (%p711) target = $region80
        $region79: #{_lambda_.1} parent=11 // pred_region
          _
        $region80: #{_lambda_.1} parent=11 // pred_fallthru
          _
        // Predicated region
        $region81: #{_lambda_.1} parent=11 // pred_check
          %p714 = pneg %p564
        $region82: #{_lambda_.1} parent=11 // pred_check_branch
          %716 = sbr.rel (%p714) target = $region84
        $region83: #{_lambda_.1} parent=11 // pred_region
          _
        $region84: #{_lambda_.1} parent=11 // pred_fallthru
          _
      $region12: #{_lambda_.1} parent=5 // pred_fallthru
        _
      %p717 = scmp.lt.s32.totalorder %s38, 2
      // Predicated region
      $region85: #{_lambda_.1} parent=5 // pred_check
        %p718 = pneg %p717
      $region86: #{_lambda_.1} parent=5 // pred_check_branch
        %720 = sbr.rel (%p718) target = $region88
      $region87: #{_lambda_.1} parent=5 // pred_region
        // Predicated region
        $region89: #{_lambda_.1} parent=87 // pred_check
          %p721 = pneg %p72
        $region90: #{_lambda_.1} parent=87 // pred_check_branch
          %723 = sbr.rel (%p721) target = $region92
        $region91: #{_lambda_.1} parent=87 // pred_region
          %p724 = scmp.lt.s32.totalorder %s45, 1
          %s725 = scalar_select %p724, %s45, 1
          %p726 = scmp.lt.s32.totalorder %s46, 0
          %s727 = scalar_select %p726, %s46, 0
          %s728 = sadd.s32 %s727, %s725
          %s729 = smul.addr %s728, 8
          %s730 = scalar_lea.vmem %s0, %s729
        $region92: #{_lambda_.1} parent=87 // pred_fallthru
          _
        // Predicated region
        $region93: #{_lambda_.1} parent=87 // pred_check
          %p731 = pneg %p98
        $region94: #{_lambda_.1} parent=87 // pred_check_branch
          %733 = sbr.rel (%p731) target = $region96
        $region95: #{_lambda_.1} parent=87 // pred_region
          %p734 = scmp.lt.s32.totalorder %s45, 1
          %s735 = scalar_select %p734, %s45, 1
          %s736 = smul.addr %s735, 8
          %s737 = scalar_lea.vmem %s1, %s736
        $region96: #{_lambda_.1} parent=87 // pred_fallthru
          _
        // Predicated region
        $region97: #{_lambda_.1} parent=87 // pred_check
          %p738 = pneg %p124
        $region98: #{_lambda_.1} parent=87 // pred_check_branch
          %740 = sbr.rel (%p738) target = $region100
        $region99: #{_lambda_.1} parent=87 // pred_region
          %p741 = scmp.lt.s32.totalorder %s45, 1
          %s742 = scalar_select %p741, %s45, 1
          %s743 = smul.addr %s742, 8
          %s744 = scalar_lea.vmem %s2, %s743
        $region100: #{_lambda_.1} parent=87 // pred_fallthru
          _
        // Predicated region
        $region101: #{_lambda_.1} parent=87 // pred_check
          %p745 = pneg %p152
        $region102: #{_lambda_.1} parent=87 // pred_check_branch
          %747 = sbr.rel (%p745) target = $region104
        $region103: #{_lambda_.1} parent=87 // pred_region
          %p748 = scmp.lt.s32.totalorder %s45, 1
          %s749 = scalar_select %p748, %s45, 1
          %p750 = scmp.lt.s32.totalorder %s46, 0
          %s751 = scalar_select %p750, %s46, 0
          %s752 = sadd.s32 %s751, %s749
          %s753 = smul.addr %s752, 4
          %s754 = scalar_lea.vmem %s3, %s753
        $region104: #{_lambda_.1} parent=87 // pred_fallthru
          _
        // Predicated region
        $region105: #{_lambda_.1} parent=87 // pred_check
          %p755 = pneg %p180
        $region106: #{_lambda_.1} parent=87 // pred_check_branch
          %757 = sbr.rel (%p755) target = $region108
        $region107: #{_lambda_.1} parent=87 // pred_region
          %p758 = scmp.lt.s32.totalorder %s45, 1
          %s759 = scalar_select %p758, %s45, 1
          %p760 = scmp.lt.s32.totalorder %s46, 0
          %s761 = scalar_select %p760, %s46, 0
          %s762 = sadd.s32 %s761, %s759
          %s763 = smul.addr %s762, 4
          %s764 = scalar_lea.vmem %s4, %s763
        $region108: #{_lambda_.1} parent=87 // pred_fallthru
          _
      $region88: #{_lambda_.1} parent=5 // pred_fallthru
        _
      %p765 = scmp.le.s32.totalorder 1, %s38
      %p766 = scmp.lt.s32.totalorder %s38, 3
      %p767 = pnand %p765, %p766
      %p768 = pneg %p767
      // Predicated region
      $region109: #{_lambda_.1} parent=5 // pred_check
        _
      $region110: #{_lambda_.1} parent=5 // pred_check_branch
        %770 = sbr.rel (%p767) target = $region112
      $region111: #{_lambda_.1} parent=5 // pred_region
        %s771 = ssub.s32 %s38, 1
        %p772 = scmp.lt.s32.totalorder %s47, 1
        %s773 = scalar_select %p772, %s47, 1
        %p774 = scmp.lt.s32.totalorder %s48, 0
        %s775 = scalar_select %p774, %s48, 0
        %s776 = sadd.s32 %s775, %s773
        %s777 = smul.addr %s776, 8
        %s778 = scalar_lea.vmem %s0, %s777
        %p779 = pneg %p78
        %p780 = pneg %p75
        %p781 = scmp.lt.s32.totalorder %s47, 1
        %s782 = scalar_select %p781, %s47, 1
        %s783 = smul.addr %s782, 8
        %s784 = scalar_lea.vmem %s1, %s783
        %p785 = pneg %p104
        %p786 = pneg %p101
        %p787 = scmp.lt.s32.totalorder %s47, 1
        %s788 = scalar_select %p787, %s47, 1
        %s789 = smul.addr %s788, 8
        %s790 = scalar_lea.vmem %s2, %s789
        %p791 = pneg %p130
        %p792 = pneg %p127
        %p793 = scmp.lt.s32.totalorder %s47, 1
        %s794 = scalar_select %p793, %s47, 1
        %p795 = scmp.lt.s32.totalorder %s48, 0
        %s796 = scalar_select %p795, %s48, 0
        %s797 = sadd.s32 %s796, %s794
        %s798 = smul.addr %s797, 4
        %s799 = scalar_lea.vmem %s3, %s798
        %p800 = pneg %p158
        %p801 = pneg %p155
        %p802 = scmp.lt.s32.totalorder %s47, 1
        %s803 = scalar_select %p802, %s47, 1
        %p804 = scmp.lt.s32.totalorder %s48, 0
        %s805 = scalar_select %p804, %s48, 0
        %s806 = sadd.s32 %s805, %s803
        %s807 = smul.addr %s806, 4
        %s808 = scalar_lea.vmem %s4, %s807
        %p809 = pneg %p186
        %p810 = pneg %p183
        %p811 = pneg %p207
        %p812 = pneg %p204
        %p813 = pneg %p228
        %p814 = pneg %p225
        %p815 = pneg %p249
        %p816 = pneg %p246
        %p817 = pneg %p270
        %p818 = pneg %p267
        %p819 = pneg %p291
        %p820 = pneg %p288
        %p821 = pneg %p312
        %p822 = pneg %p309
        %p823 = pneg %p333
        %p824 = pneg %p330
        %p825 = pneg %p354
        %p826 = pneg %p351
        %p827 = pneg %p375
        %p828 = pneg %p372
        %p829 = pneg %p396
        %p830 = pneg %p393
        %p831 = pneg %p417
        %p832 = pneg %p414
        %p833 = pneg %p438
        %p834 = pneg %p435
        %p835 = pneg %p459
        %p836 = pneg %p456
        %p837 = pneg %p480
        %p838 = pneg %p477
        %p839 = pneg %p501
        %p840 = pneg %p498
        %p841 = pneg %p522
        %p842 = pneg %p519
        %p843 = pneg %p543
        %p844 = pneg %p540
        %p845 = pneg %p564
        %p846 = pneg %p561
        %p847 = pneg %p592
        %p848 = pneg %p589
        %s849 = sand.u32 %s579, 1
        %s850 = scalar_lea.sflag [#allocation3], %s849
        %s851 = sand.u32 %s579, 1
        %s852 = smul.addr %s851, 8
        %s853 = scalar_lea.vmem [#allocation2], %s852
        %p854 = pneg %p620
        %p855 = pneg %p617
        %s856 = sand.u32 %s43, 1
        %s857 = scalar_lea.sflag [#allocation5], %s856
        %s858 = sand.u32 %s607, 1
        %s859 = smul.addr %s858, 16
        %s860 = scalar_lea.vmem [#allocation4], %s859
        %p861 = pneg %p648
        %p862 = pneg %p645
        %s863 = sand.u32 %s43, 1
        %s864 = scalar_lea.sflag [#allocation5], %s863
        %s865 = sand.u32 %s635, 1
        %s866 = smul.addr %s865, 16
        %s867 = scalar_lea.vmem [#allocation6], %s866
        %p868 = scmp.lt.s32.totalorder %s47, 1
        %s869 = scalar_select %p868, %s47, 1
        %p870 = scmp.lt.s32.totalorder %s48, 0
        %s871 = scalar_select %p870, %s48, 0
        %s872 = sadd.s32 %s871, %s869
        %s873 = smul.addr %s872, 8
        %s874 = scalar_lea.vmem %s0, %s873
        %p875 = scmp.lt.s32.totalorder %s47, 1
        %s876 = scalar_select %p875, %s47, 1
        %s877 = smul.addr %s876, 8
        %s878 = scalar_lea.vmem %s1, %s877
        %p879 = scmp.lt.s32.totalorder %s47, 1
        %s880 = scalar_select %p879, %s47, 1
        %s881 = smul.addr %s880, 8
        %s882 = scalar_lea.vmem %s2, %s881
        %p883 = scmp.lt.s32.totalorder %s47, 1
        %s884 = scalar_select %p883, %s47, 1
        %p885 = scmp.lt.s32.totalorder %s48, 0
        %s886 = scalar_select %p885, %s48, 0
        %s887 = sadd.s32 %s886, %s884
        %s888 = smul.addr %s887, 4
        %s889 = scalar_lea.vmem %s3, %s888
        %p890 = scmp.lt.s32.totalorder %s47, 1
        %s891 = scalar_select %p890, %s47, 1
        %p892 = scmp.lt.s32.totalorder %s48, 0
        %s893 = scalar_select %p892, %s48, 0
        %s894 = sadd.s32 %s893, %s891
        %s895 = smul.addr %s894, 4
        %s896 = scalar_lea.vmem %s4, %s895
        %v898 = vld [vmem:[%s874] sm:$0xff]
        %v899 = vld [vmem:[%s878] sm:$0xff]
        %v900 = vld [vmem:[%s882] sm:$0xff]
        %v901 = vld [vmem:[%s889] sm:$0xf]
        %v902 = vunpack.c.l.bf16 %v901
        %v903 = vld [vmem:[%s5] sm:$0xf]
        %v904 = vld [vmem:[%s5 + $0x4] sm:$0xf]
        %v905 = vld [vmem:[%s5 + $0x8] sm:$0xf]
        %v906 = vld [vmem:[%s5 + $0xc] sm:$0xf]
        %v907 = vld [vmem:[%s6] sm:$0xf]
        %v908 = vld [vmem:[%s6 + $0x4] sm:$0xf]
        %v909 = vld [vmem:[%s6 + $0x8] sm:$0xf]
        %v910 = vld [vmem:[%s6 + $0xc] sm:$0xf]
        %v911 = vld [vmem:[%s7] sm:$0xf]
        %v912 = vld [vmem:[%s7 + $0x4] sm:$0xf]
        %v913 = vld [vmem:[%s7 + $0x8] sm:$0xf]
        %v914 = vld [vmem:[%s7 + $0xc] sm:$0xf]
        %v915 = vld [vmem:[%s8] sm:$0xf]
        %v916 = vld [vmem:[%s8 + $0x4] sm:$0xf]
        %v917 = vld [vmem:[%s8 + $0x8] sm:$0xf]
        %v918 = vld [vmem:[%s8 + $0xc] sm:$0xf]
        %v919 = vld [vmem:[%s9] sm:$0x1]
        %v920 = vld [vmem:[%s10] sm:$0x1]
        %v921 = vpack.c.bf16 %v898, %v898
        %v922 = vpack.c.bf16 %v899, %v899
        %v927 = vunpack.c.l.b16 %v903
        %v928 = vunpack.c.l.b16 %v904
        %v929 = vunpack.c.l.b16 %v905
        %v930 = vunpack.c.l.b16 %v906
        %v931 = vpack.c.b16 %v928, %v927
        %v932 = vpack.c.b16 %v930, %v929
        %vm935 = vcmask 261120
        %v937 = vsel %vm935, %v921, 0
        %939 = vmatprep.subr.bf16.mxu0 0
        %940 = vmatpush1.bf16.msra.mxu0 0
        %941 = vmatprep.subr.bf16.mxu0 0
        %942 = vmatpush1.bf16.msra.mxu0 0
        %943 = vmatprep.subr.bf16.mxu0 0
        %944 = vmatpush1.bf16.msra.mxu0 0
        %945 = vmatprep.subr.bf16.mxu0 0
        %946 = vmatpush1.bf16.msra.mxu0 0
        %947 = vmatprep.subr.bf16.mxu0 0
        %948 = vmatpush1.bf16.msra.mxu0 0
        %949 = vmatprep.subr.bf16.mxu0 0
        %950 = vmatpush1.bf16.msra.mxu0 0
        %951 = vmatprep.subr.bf16.mxu0 0
        %952 = vmatpush1.bf16.msra.mxu0 %v932
        %953 = vmatprep.subr.bf16.mxu0 0
        %954 = vmatpush1.bf16.msra.mxu0 %v931
        %955 = vmatprep.subr.bf16.mxu0 0
        %956 = vmatpush2.bf16.msra.mxu0 0
        %957 = vmatprep.subr.bf16.mxu0 0
        %958 = vmatpush2.bf16.msra.mxu0 0
        %959 = vmatprep.subr.bf16.mxu0 0
        %960 = vmatpush2.bf16.msra.mxu0 0
        %961 = vmatprep.subr.bf16.mxu0 0
        %962 = vmatpush2.bf16.msra.mxu0 0
        %963 = vmatprep.subr.bf16.mxu0 0
        %964 = vmatpush2.bf16.msra.mxu0 0
        %965 = vmatprep.subr.bf16.mxu0 0
        %966 = vmatpush2.bf16.msra.mxu0 0
        %967 = vmatprep.subr.bf16.mxu0 0
        %968 = vmatpush2.bf16.msra.mxu0 0
        %969 = vmatprep.subr.bf16.mxu0 0
        %970 = vmatpush2.bf16.msra.mxu0 0
        %971 = vmatprep.mubr.bf16.mxu0 0
        %972 = vmatmul.mubr.bf16.gmra.mxu0 %v937
        %v973 = vpop.f32.mrf.mxu0
        %v974 = vadd.f32 0.0, %v973
        %v975 = vpop.f32.mrf.mxu0
        %v976 = vpop.f32.mrf.mxu0
        %v977 = vpop.f32.mrf.mxu0
        %978 = vdwg.mxu0
        %v979 = vmul.f32 %v974, 0.35355338
        %v984 = vunpack.c.l.b16 %v907
        %v985 = vunpack.c.l.b16 %v908
        %v986 = vunpack.c.l.b16 %v909
        %v987 = vunpack.c.l.b16 %v910
        %v988 = vpack.c.b16 %v985, %v984
        %v989 = vpack.c.b16 %v987, %v986
        %v993 = vsel %vm935, %v922, 0
        %995 = vmatprep.subr.bf16.mxu0 0
        %996 = vmatpush1.bf16.msra.mxu0 0
        %997 = vmatprep.subr.bf16.mxu0 0
        %998 = vmatpush1.bf16.msra.mxu0 0
        %999 = vmatprep.subr.bf16.mxu0 0
        %1000 = vmatpush1.bf16.msra.mxu0 0
        %1001 = vmatprep.subr.bf16.mxu0 0
        %1002 = vmatpush1.bf16.msra.mxu0 0
        %1003 = vmatprep.subr.bf16.mxu0 0
        %1004 = vmatpush1.bf16.msra.mxu0 0
        %1005 = vmatprep.subr.bf16.mxu0 0
        %1006 = vmatpush1.bf16.msra.mxu0 0
        %1007 = vmatprep.subr.bf16.mxu0 0
        %1008 = vmatpush1.bf16.msra.mxu0 %v989
        %1009 = vmatprep.subr.bf16.mxu0 0
        %1010 = vmatpush1.bf16.msra.mxu0 %v988
        %1011 = vmatprep.subr.bf16.mxu0 0
        %1012 = vmatpush2.bf16.msra.mxu0 0
        %1013 = vmatprep.subr.bf16.mxu0 0
        %1014 = vmatpush2.bf16.msra.mxu0 0
        %1015 = vmatprep.subr.bf16.mxu0 0
        %1016 = vmatpush2.bf16.msra.mxu0 0
        %1017 = vmatprep.subr.bf16.mxu0 0
        %1018 = vmatpush2.bf16.msra.mxu0 0
        %1019 = vmatprep.subr.bf16.mxu0 0
        %1020 = vmatpush2.bf16.msra.mxu0 0
        %1021 = vmatprep.subr.bf16.mxu0 0
        %1022 = vmatpush2.bf16.msra.mxu0 0
        %1023 = vmatprep.subr.bf16.mxu0 0
        %1024 = vmatpush2.bf16.msra.mxu0 0
        %1025 = vmatprep.subr.bf16.mxu0 0
        %1026 = vmatpush2.bf16.msra.mxu0 0
        %1027 = vmatprep.mubr.bf16.mxu0 0
        %1028 = vmatmul.mubr.bf16.gmra.mxu0 %v993
        %v1029 = vpop.f32.mrf.mxu0
        %v1030 = vadd.f32 0.0, %v1029
        %v1031 = vpop.f32.mrf.mxu0
        %v1032 = vpop.f32.mrf.mxu0
        %v1033 = vpop.f32.mrf.mxu0
        %1034 = vdwg.mxu0
        %v1039 = vunpack.c.l.b16 %v911
        %v1040 = vunpack.c.l.b16 %v912
        %v1041 = vunpack.c.l.b16 %v913
        %v1042 = vunpack.c.l.b16 %v914
        %v1043 = vpack.c.b16 %v1040, %v1039
        %v1044 = vpack.c.b16 %v1042, %v1041
        %1047 = vmatprep.subr.bf16.mxu0 0
        %1048 = vmatpush1.bf16.msra.mxu0 0
        %1049 = vmatprep.subr.bf16.mxu0 0
        %1050 = vmatpush1.bf16.msra.mxu0 0
        %1051 = vmatprep.subr.bf16.mxu0 0
        %1052 = vmatpush1.bf16.msra.mxu0 0
        %1053 = vmatprep.subr.bf16.mxu0 0
        %1054 = vmatpush1.bf16.msra.mxu0 0
        %1055 = vmatprep.subr.bf16.mxu0 0
        %1056 = vmatpush1.bf16.msra.mxu0 0
        %1057 = vmatprep.subr.bf16.mxu0 0
        %1058 = vmatpush1.bf16.msra.mxu0 0
        %1059 = vmatprep.subr.bf16.mxu0 0
        %1060 = vmatpush1.bf16.msra.mxu0 %v1044
        %1061 = vmatprep.subr.bf16.mxu0 0
        %1062 = vmatpush1.bf16.msra.mxu0 %v1043
        %1063 = vmatprep.subr.bf16.mxu0 0
        %1064 = vmatpush2.bf16.msra.mxu0 0
        %1065 = vmatprep.subr.bf16.mxu0 0
        %1066 = vmatpush2.bf16.msra.mxu0 0
        %1067 = vmatprep.subr.bf16.mxu0 0
        %1068 = vmatpush2.bf16.msra.mxu0 0
        %1069 = vmatprep.subr.bf16.mxu0 0
        %1070 = vmatpush2.bf16.msra.mxu0 0
        %1071 = vmatprep.subr.bf16.mxu0 0
        %1072 = vmatpush2.bf16.msra.mxu0 0
        %1073 = vmatprep.subr.bf16.mxu0 0
        %1074 = vmatpush2.bf16.msra.mxu0 0
        %1075 = vmatprep.subr.bf16.mxu0 0
        %1076 = vmatpush2.bf16.msra.mxu0 0
        %1077 = vmatprep.subr.bf16.mxu0 0
        %1078 = vmatpush2.bf16.msra.mxu0 0
        %1079 = vmatprep.mubr.bf16.mxu0 0
        %1080 = vmatmul.mubr.bf16.gmra.mxu0 %v993
        %v1081 = vpop.f32.mrf.mxu0
        %v1082 = vadd.f32 0.0, %v1081
        %v1083 = vpop.f32.mrf.mxu0
        %v1084 = vpop.f32.mrf.mxu0
        %v1085 = vpop.f32.mrf.mxu0
        %1086 = vdwg.mxu0
        %v1087 = vpack.c.bf16 %v979, %v979
        %v1088 = vpack.c.bf16 %v1030, %v1030
        %v1089 = vpack.c.bf16 %v1082, %v1082
        %vm1090 = vcmask 64512
        %v1092 = vsel %vm1090, %v1087, 0
        %v1095 = vsel %vm1090, %v1088, 0
        %1097 = vmatprep.subr.bf16.mxu0 0
        %1098 = vmatpush1.bf16.xpose.msra.mxu0 0
        %1099 = vmatprep.subr.bf16.mxu0 0
        %1100 = vmatpush1.bf16.xpose.msra.mxu0 0
        %1101 = vmatprep.subr.bf16.mxu0 0
        %1102 = vmatpush1.bf16.xpose.msra.mxu0 0
        %1103 = vmatprep.subr.bf16.mxu0 0
        %1104 = vmatpush1.bf16.xpose.msra.mxu0 0
        %1105 = vmatprep.subr.bf16.mxu0 0
        %1106 = vmatpush1.bf16.xpose.msra.mxu0 0
        %1107 = vmatprep.subr.bf16.mxu0 0
        %1108 = vmatpush1.bf16.xpose.msra.mxu0 0
        %1109 = vmatprep.subr.bf16.mxu0 0
        %1110 = vmatpush1.bf16.xpose.msra.mxu0 0
        %1111 = vmatprep.subr.bf16.mxu0 0
        %1112 = vmatpush1.bf16.xpose.msra.mxu0 %v1095
        %1113 = vmatprep.subr.bf16.mxu0 0
        %1114 = vmatpush2.bf16.xpose.msra.mxu0 0
        %1115 = vmatprep.subr.bf16.mxu0 0
        %1116 = vmatpush2.bf16.xpose.msra.mxu0 0
        %1117 = vmatprep.subr.bf16.mxu0 0
        %1118 = vmatpush2.bf16.xpose.msra.mxu0 0
        %1119 = vmatprep.subr.bf16.mxu0 0
        %1120 = vmatpush2.bf16.xpose.msra.mxu0 0
        %1121 = vmatprep.subr.bf16.mxu0 0
        %1122 = vmatpush2.bf16.xpose.msra.mxu0 0
        %1123 = vmatprep.subr.bf16.mxu0 0
        %1124 = vmatpush2.bf16.xpose.msra.mxu0 0
        %1125 = vmatprep.subr.bf16.mxu0 0
        %1126 = vmatpush2.bf16.xpose.msra.mxu0 0
        %1127 = vmatprep.subr.bf16.mxu0 0
        %1128 = vmatpush2.bf16.xpose.msra.mxu0 0
        %1129 = vmatprep.mubr.bf16.mxu0 0
        %1130 = vmatmul.mubr.bf16.gmra.mxu0 %v1092
        %v1131 = vpop.f32.mrf.mxu0
        %v1132 = vadd.f32 %v902, %v1131
        %v1133 = vpop.f32.mrf.mxu0
        %v1134 = vpop.f32.mrf.mxu0
        %v1135 = vpop.f32.mrf.mxu0
        %1136 = vdwg.mxu0
        %v1137 = vsel %vm1090, %v1132, -inf
        %1138 = vmax.xlane.f32.xlu0 %v1137
        %v1139 = vpop.xlane.xlu0 %1138
        %v1140 = vsub.f32 %v1132, %v1139
        %v1141 = vmul.f32 %v1140, 1.442695
        %v1142 = vpow.pop %v1141
        %v1143 = vsel %vm1090, %v1142, 0.0
        %1144 = vadd.xlane.f32.xlu0 %v1143
        %v1145 = vpop.xlane.xlu0 %1144
        %v1146 = vrcp.pop %v1145
        %v1147 = vmul.f32 %v1142, %v1146
        %v1148 = vpack.c.bf16 %v1147, %v1147
        %vm1149 = vcmask 60416
        %1150 = vst.msk [vmem:[%s860] sm:$0xf] %vm1149, %v1148
        %v1152 = vsel %vm1090, %v1148, 0
        %vm1154 = vcmask 1043456
        %v1156 = vsel %vm1154, %v1089, 0
        %1158 = vmatprep.subr.bf16.mxu0 0
        %1159 = vmatpush1.bf16.msra.mxu0 0
        %1160 = vmatprep.subr.bf16.mxu0 0
        %1161 = vmatpush1.bf16.msra.mxu0 0
        %1162 = vmatprep.subr.bf16.mxu0 0
        %1163 = vmatpush1.bf16.msra.mxu0 0
        %1164 = vmatprep.subr.bf16.mxu0 0
        %1165 = vmatpush1.bf16.msra.mxu0 0
        %1166 = vmatprep.subr.bf16.mxu0 0
        %1167 = vmatpush1.bf16.msra.mxu0 0
        %1168 = vmatprep.subr.bf16.mxu0 0
        %1169 = vmatpush1.bf16.msra.mxu0 0
        %1170 = vmatprep.subr.bf16.mxu0 0
        %1171 = vmatpush1.bf16.msra.mxu0 0
        %1172 = vmatprep.subr.bf16.mxu0 0
        %1173 = vmatpush1.bf16.msra.mxu0 %v1156
        %1174 = vmatprep.subr.bf16.mxu0 0
        %1175 = vmatpush2.bf16.msra.mxu0 0
        %1176 = vmatprep.subr.bf16.mxu0 0
        %1177 = vmatpush2.bf16.msra.mxu0 0
        %1178 = vmatprep.subr.bf16.mxu0 0
        %1179 = vmatpush2.bf16.msra.mxu0 0
        %1180 = vmatprep.subr.bf16.mxu0 0
        %1181 = vmatpush2.bf16.msra.mxu0 0
        %1182 = vmatprep.subr.bf16.mxu0 0
        %1183 = vmatpush2.bf16.msra.mxu0 0
        %1184 = vmatprep.subr.bf16.mxu0 0
        %1185 = vmatpush2.bf16.msra.mxu0 0
        %1186 = vmatprep.subr.bf16.mxu0 0
        %1187 = vmatpush2.bf16.msra.mxu0 0
        %1188 = vmatprep.subr.bf16.mxu0 0
        %1189 = vmatpush2.bf16.msra.mxu0 0
        %1190 = vmatprep.mubr.bf16.mxu0 0
        %1191 = vmatmul.mubr.bf16.gmra.mxu0 %v1152
        %v1192 = vpop.f32.mrf.mxu0
        %v1193 = vadd.f32 0.0, %v1192
        %v1194 = vpop.f32.mrf.mxu0
        %v1195 = vpop.f32.mrf.mxu0
        %v1196 = vpop.f32.mrf.mxu0
        %1197 = vdwg.mxu0
        %1199 = vrot.lane.b32.xlu0 %v1087, 120
        %v1200 = vpop.permute.xlu0 %1199
        %1202 = vrot.lane.b32.xlu0 %v1088, 120
        %v1203 = vpop.permute.xlu0 %1202
        %v1205 = vsel %vm1090, %v1200, 0
        %v1208 = vsel %vm1090, %v1203, 0
        %1210 = vmatprep.subr.bf16.mxu0 0
        %1211 = vmatpush1.bf16.xpose.msra.mxu0 0
        %1212 = vmatprep.subr.bf16.mxu0 0
        %1213 = vmatpush1.bf16.xpose.msra.mxu0 0
        %1214 = vmatprep.subr.bf16.mxu0 0
        %1215 = vmatpush1.bf16.xpose.msra.mxu0 0
        %1216 = vmatprep.subr.bf16.mxu0 0
        %1217 = vmatpush1.bf16.xpose.msra.mxu0 0
        %1218 = vmatprep.subr.bf16.mxu0 0
        %1219 = vmatpush1.bf16.xpose.msra.mxu0 0
        %1220 = vmatprep.subr.bf16.mxu0 0
        %1221 = vmatpush1.bf16.xpose.msra.mxu0 0
        %1222 = vmatprep.subr.bf16.mxu0 0
        %1223 = vmatpush1.bf16.xpose.msra.mxu0 0
        %1224 = vmatprep.subr.bf16.mxu0 0
        %1225 = vmatpush1.bf16.xpose.msra.mxu0 %v1208
        %1226 = vmatprep.subr.bf16.mxu0 0
        %1227 = vmatpush2.bf16.xpose.msra.mxu0 0
        %1228 = vmatprep.subr.bf16.mxu0 0
        %1229 = vmatpush2.bf16.xpose.msra.mxu0 0
        %1230 = vmatprep.subr.bf16.mxu0 0
        %1231 = vmatpush2.bf16.xpose.msra.mxu0 0
        %1232 = vmatprep.subr.bf16.mxu0 0
        %1233 = vmatpush2.bf16.xpose.msra.mxu0 0
        %1234 = vmatprep.subr.bf16.mxu0 0
        %1235 = vmatpush2.bf16.xpose.msra.mxu0 0
        %1236 = vmatprep.subr.bf16.mxu0 0
        %1237 = vmatpush2.bf16.xpose.msra.mxu0 0
        %1238 = vmatprep.subr.bf16.mxu0 0
        %1239 = vmatpush2.bf16.xpose.msra.mxu0 0
        %1240 = vmatprep.subr.bf16.mxu0 0
        %1241 = vmatpush2.bf16.xpose.msra.mxu0 0
        %1242 = vmatprep.mubr.bf16.mxu0 0
        %1243 = vmatmul.mubr.bf16.gmra.mxu0 %v1205
        %v1244 = vpop.f32.mrf.mxu0
        %v1245 = vadd.f32 %v902, %v1244
        %v1246 = vpop.f32.mrf.mxu0
        %v1247 = vpop.f32.mrf.mxu0
        %v1248 = vpop.f32.mrf.mxu0
        %1249 = vdwg.mxu0
        %v1250 = vsel %vm1090, %v1245, -inf
        %1251 = vmax.xlane.f32.xlu0 %v1250
        %v1252 = vpop.xlane.xlu0 %1251
        %v1253 = vsub.f32 %v1245, %v1252
        %v1254 = vmul.f32 %v1253, 1.442695
        %v1255 = vpow.pop %v1254
        %v1256 = vsel %vm1090, %v1255, 0.0
        %1257 = vadd.xlane.f32.xlu0 %v1256
        %v1258 = vpop.xlane.xlu0 %1257
        %v1259 = vrcp.pop %v1258
        %v1260 = vmul.f32 %v1255, %v1259
        %v1261 = vpack.c.bf16 %v1260, %v1260
        %s1262 = scalar_lea.vmem %s860, 4 [#allocation4]
        %1263 = vst.msk [vmem:[%s1262] sm:$0xf] %vm1149, %v1261
        %1265 = vrot.lane.b32.xlu0 %v1089, 120
        %v1266 = vpop.permute.xlu0 %1265
        %v1268 = vsel %vm1090, %v1261, 0
        %v1271 = vsel %vm1154, %v1266, 0
        %1273 = vmatprep.subr.bf16.mxu0 0
        %1274 = vmatpush1.bf16.msra.mxu0 0
        %1275 = vmatprep.subr.bf16.mxu0 0
        %1276 = vmatpush1.bf16.msra.mxu0 0
        %1277 = vmatprep.subr.bf16.mxu0 0
        %1278 = vmatpush1.bf16.msra.mxu0 0
        %1279 = vmatprep.subr.bf16.mxu0 0
        %1280 = vmatpush1.bf16.msra.mxu0 0
        %1281 = vmatprep.subr.bf16.mxu0 0
        %1282 = vmatpush1.bf16.msra.mxu0 0
        %1283 = vmatprep.subr.bf16.mxu0 0
        %1284 = vmatpush1.bf16.msra.mxu0 0
        %1285 = vmatprep.subr.bf16.mxu0 0
        %1286 = vmatpush1.bf16.msra.mxu0 0
        %1287 = vmatprep.subr.bf16.mxu0 0
        %1288 = vmatpush1.bf16.msra.mxu0 %v1271
        %1289 = vmatprep.subr.bf16.mxu0 0
        %1290 = vmatpush2.bf16.msra.mxu0 0
        %1291 = vmatprep.subr.bf16.mxu0 0
        %1292 = vmatpush2.bf16.msra.mxu0 0
        %1293 = vmatprep.subr.bf16.mxu0 0
        %1294 = vmatpush2.bf16.msra.mxu0 0
        %1295 = vmatprep.subr.bf16.mxu0 0
        %1296 = vmatpush2.bf16.msra.mxu0 0
        %1297 = vmatprep.subr.bf16.mxu0 0
        %1298 = vmatpush2.bf16.msra.mxu0 0
        %1299 = vmatprep.subr.bf16.mxu0 0
        %1300 = vmatpush2.bf16.msra.mxu0 0
        %1301 = vmatprep.subr.bf16.mxu0 0
        %1302 = vmatpush2.bf16.msra.mxu0 0
        %1303 = vmatprep.subr.bf16.mxu0 0
        %1304 = vmatpush2.bf16.msra.mxu0 0
        %1305 = vmatprep.mubr.bf16.mxu0 0
        %1306 = vmatmul.mubr.bf16.gmra.mxu0 %v1268
        %v1307 = vpop.f32.mrf.mxu0
        %v1308 = vadd.f32 0.0, %v1307
        %v1309 = vpop.f32.mrf.mxu0
        %v1310 = vpop.f32.mrf.mxu0
        %v1311 = vpop.f32.mrf.mxu0
        %1312 = vdwg.mxu0
        %1313 = vrot.lane.b32.xlu0 %v1087, 112
        %v1314 = vpop.permute.xlu0 %1313
        %1315 = vrot.lane.b32.xlu0 %v1088, 112
        %v1316 = vpop.permute.xlu0 %1315
        %v1318 = vsel %vm1090, %v1314, 0
        %v1321 = vsel %vm1090, %v1316, 0
        %1323 = vmatprep.subr.bf16.mxu0 0
        %1324 = vmatpush1.bf16.xpose.msra.mxu0 0
        %1325 = vmatprep.subr.bf16.mxu0 0
        %1326 = vmatpush1.bf16.xpose.msra.mxu0 0
        %1327 = vmatprep.subr.bf16.mxu0 0
        %1328 = vmatpush1.bf16.xpose.msra.mxu0 0
        %1329 = vmatprep.subr.bf16.mxu0 0
        %1330 = vmatpush1.bf16.xpose.msra.mxu0 0
        %1331 = vmatprep.subr.bf16.mxu0 0
        %1332 = vmatpush1.bf16.xpose.msra.mxu0 0
        %1333 = vmatprep.subr.bf16.mxu0 0
        %1334 = vmatpush1.bf16.xpose.msra.mxu0 0
        %1335 = vmatprep.subr.bf16.mxu0 0
        %1336 = vmatpush1.bf16.xpose.msra.mxu0 0
        %1337 = vmatprep.subr.bf16.mxu0 0
        %1338 = vmatpush1.bf16.xpose.msra.mxu0 %v1321
        %1339 = vmatprep.subr.bf16.mxu0 0
        %1340 = vmatpush2.bf16.xpose.msra.mxu0 0
        %1341 = vmatprep.subr.bf16.mxu0 0
        %1342 = vmatpush2.bf16.xpose.msra.mxu0 0
        %1343 = vmatprep.subr.bf16.mxu0 0
        %1344 = vmatpush2.bf16.xpose.msra.mxu0 0
        %1345 = vmatprep.subr.bf16.mxu0 0
        %1346 = vmatpush2.bf16.xpose.msra.mxu0 0
        %1347 = vmatprep.subr.bf16.mxu0 0
        %1348 = vmatpush2.bf16.xpose.msra.mxu0 0
        %1349 = vmatprep.subr.bf16.mxu0 0
        %1350 = vmatpush2.bf16.xpose.msra.mxu0 0
        %1351 = vmatprep.subr.bf16.mxu0 0
        %1352 = vmatpush2.bf16.xpose.msra.mxu0 0
        %1353 = vmatprep.subr.bf16.mxu0 0
        %1354 = vmatpush2.bf16.xpose.msra.mxu0 0
        %1355 = vmatprep.mubr.bf16.mxu0 0
        %1356 = vmatmul.mubr.bf16.gmra.mxu0 %v1318
        %v1357 = vpop.f32.mrf.mxu0
        %v1358 = vadd.f32 %v902, %v1357
        %v1359 = vpop.f32.mrf.mxu0
        %v1360 = vpop.f32.mrf.mxu0
        %v1361 = vpop.f32.mrf.mxu0
        %1362 = vdwg.mxu0
        %v1363 = vsel %vm1090, %v1358, -inf
        %1364 = vmax.xlane.f32.xlu0 %v1363
        %v1365 = vpop.xlane.xlu0 %1364
        %v1366 = vsub.f32 %v1358, %v1365
        %v1367 = vmul.f32 %v1366, 1.442695
        %v1368 = vpow.pop %v1367
        %v1369 = vsel %vm1090, %v1368, 0.0
        %1370 = vadd.xlane.f32.xlu0 %v1369
        %v1371 = vpop.xlane.xlu0 %1370
        %v1372 = vrcp.pop %v1371
        %v1373 = vmul.f32 %v1368, %v1372
        %v1374 = vpack.c.bf16 %v1373, %v1373
        %s1375 = scalar_lea.vmem %s860, 8 [#allocation4]
        %1376 = vst.msk [vmem:[%s1375] sm:$0xf] %vm1149, %v1374
        %1377 = vrot.lane.b32.xlu0 %v1089, 112
        %v1378 = vpop.permute.xlu0 %1377
        %v1380 = vsel %vm1090, %v1374, 0
        %v1383 = vsel %vm1154, %v1378, 0
        %1385 = vmatprep.subr.bf16.mxu0 0
        %1386 = vmatpush1.bf16.msra.mxu0 0
        %1387 = vmatprep.subr.bf16.mxu0 0
        %1388 = vmatpush1.bf16.msra.mxu0 0
        %1389 = vmatprep.subr.bf16.mxu0 0
        %1390 = vmatpush1.bf16.msra.mxu0 0
        %1391 = vmatprep.subr.bf16.mxu0 0
        %1392 = vmatpush1.bf16.msra.mxu0 0
        %1393 = vmatprep.subr.bf16.mxu0 0
        %1394 = vmatpush1.bf16.msra.mxu0 0
        %1395 = vmatprep.subr.bf16.mxu0 0
        %1396 = vmatpush1.bf16.msra.mxu0 0
        %1397 = vmatprep.subr.bf16.mxu0 0
        %1398 = vmatpush1.bf16.msra.mxu0 0
        %1399 = vmatprep.subr.bf16.mxu0 0
        %1400 = vmatpush1.bf16.msra.mxu0 %v1383
        %1401 = vmatprep.subr.bf16.mxu0 0
        %1402 = vmatpush2.bf16.msra.mxu0 0
        %1403 = vmatprep.subr.bf16.mxu0 0
        %1404 = vmatpush2.bf16.msra.mxu0 0
        %1405 = vmatprep.subr.bf16.mxu0 0
        %1406 = vmatpush2.bf16.msra.mxu0 0
        %1407 = vmatprep.subr.bf16.mxu0 0
        %1408 = vmatpush2.bf16.msra.mxu0 0
        %1409 = vmatprep.subr.bf16.mxu0 0
        %1410 = vmatpush2.bf16.msra.mxu0 0
        %1411 = vmatprep.subr.bf16.mxu0 0
        %1412 = vmatpush2.bf16.msra.mxu0 0
        %1413 = vmatprep.subr.bf16.mxu0 0
        %1414 = vmatpush2.bf16.msra.mxu0 0
        %1415 = vmatprep.subr.bf16.mxu0 0
        %1416 = vmatpush2.bf16.msra.mxu0 0
        %1417 = vmatprep.mubr.bf16.mxu0 0
        %1418 = vmatmul.mubr.bf16.gmra.mxu0 %v1380
        %v1419 = vpop.f32.mrf.mxu0
        %v1420 = vadd.f32 0.0, %v1419
        %v1421 = vpop.f32.mrf.mxu0
        %v1422 = vpop.f32.mrf.mxu0
        %v1423 = vpop.f32.mrf.mxu0
        %1424 = vdwg.mxu0
        %1425 = vrot.lane.b32.xlu0 %v1087, 104
        %v1426 = vpop.permute.xlu0 %1425
        %1427 = vrot.lane.b32.xlu0 %v1088, 104
        %v1428 = vpop.permute.xlu0 %1427
        %v1430 = vsel %vm1090, %v1426, 0
        %v1433 = vsel %vm1090, %v1428, 0
        %1435 = vmatprep.subr.bf16.mxu0 0
        %1436 = vmatpush1.bf16.xpose.msra.mxu0 0
        %1437 = vmatprep.subr.bf16.mxu0 0
        %1438 = vmatpush1.bf16.xpose.msra.mxu0 0
        %1439 = vmatprep.subr.bf16.mxu0 0
        %1440 = vmatpush1.bf16.xpose.msra.mxu0 0
        %1441 = vmatprep.subr.bf16.mxu0 0
        %1442 = vmatpush1.bf16.xpose.msra.mxu0 0
        %1443 = vmatprep.subr.bf16.mxu0 0
        %1444 = vmatpush1.bf16.xpose.msra.mxu0 0
        %1445 = vmatprep.subr.bf16.mxu0 0
        %1446 = vmatpush1.bf16.xpose.msra.mxu0 0
        %1447 = vmatprep.subr.bf16.mxu0 0
        %1448 = vmatpush1.bf16.xpose.msra.mxu0 0
        %1449 = vmatprep.subr.bf16.mxu0 0
        %1450 = vmatpush1.bf16.xpose.msra.mxu0 %v1433
        %1451 = vmatprep.subr.bf16.mxu0 0
        %1452 = vmatpush2.bf16.xpose.msra.mxu0 0
        %1453 = vmatprep.subr.bf16.mxu0 0
        %1454 = vmatpush2.bf16.xpose.msra.mxu0 0
        %1455 = vmatprep.subr.bf16.mxu0 0
        %1456 = vmatpush2.bf16.xpose.msra.mxu0 0
        %1457 = vmatprep.subr.bf16.mxu0 0
        %1458 = vmatpush2.bf16.xpose.msra.mxu0 0
        %1459 = vmatprep.subr.bf16.mxu0 0
        %1460 = vmatpush2.bf16.xpose.msra.mxu0 0
        %1461 = vmatprep.subr.bf16.mxu0 0
        %1462 = vmatpush2.bf16.xpose.msra.mxu0 0
        %1463 = vmatprep.subr.bf16.mxu0 0
        %1464 = vmatpush2.bf16.xpose.msra.mxu0 0
        %1465 = vmatprep.subr.bf16.mxu0 0
        %1466 = vmatpush2.bf16.xpose.msra.mxu0 0
        %1467 = vmatprep.mubr.bf16.mxu0 0
        %1468 = vmatmul.mubr.bf16.gmra.mxu0 %v1430
        %v1469 = vpop.f32.mrf.mxu0
        %v1470 = vadd.f32 %v902, %v1469
        %v1471 = vpop.f32.mrf.mxu0
        %v1472 = vpop.f32.mrf.mxu0
        %v1473 = vpop.f32.mrf.mxu0
        %1474 = vdwg.mxu0
        %v1475 = vsel %vm1090, %v1470, -inf
        %1476 = vmax.xlane.f32.xlu0 %v1475
        %v1477 = vpop.xlane.xlu0 %1476
        %v1478 = vsub.f32 %v1470, %v1477
        %v1479 = vmul.f32 %v1478, 1.442695
        %v1480 = vpow.pop %v1479
        %v1481 = vsel %vm1090, %v1480, 0.0
        %1482 = vadd.xlane.f32.xlu0 %v1481
        %v1483 = vpop.xlane.xlu0 %1482
        %v1484 = vrcp.pop %v1483
        %v1485 = vmul.f32 %v1480, %v1484
        %v1486 = vpack.c.bf16 %v1485, %v1485
        %s1487 = scalar_lea.vmem %s860, 12 [#allocation4]
        %1488 = vst.msk [vmem:[%s1487] sm:$0xf] %vm1149, %v1486
        %1489 = vrot.lane.b32.xlu0 %v1089, 104
        %v1490 = vpop.permute.xlu0 %1489
        %v1492 = vsel %vm1090, %v1486, 0
        %v1495 = vsel %vm1154, %v1490, 0
        %1497 = vmatprep.subr.bf16.mxu0 0
        %1498 = vmatpush1.bf16.msra.mxu0 0
        %1499 = vmatprep.subr.bf16.mxu0 0
        %1500 = vmatpush1.bf16.msra.mxu0 0
        %1501 = vmatprep.subr.bf16.mxu0 0
        %1502 = vmatpush1.bf16.msra.mxu0 0
        %1503 = vmatprep.subr.bf16.mxu0 0
        %1504 = vmatpush1.bf16.msra.mxu0 0
        %1505 = vmatprep.subr.bf16.mxu0 0
        %1506 = vmatpush1.bf16.msra.mxu0 0
        %1507 = vmatprep.subr.bf16.mxu0 0
        %1508 = vmatpush1.bf16.msra.mxu0 0
        %1509 = vmatprep.subr.bf16.mxu0 0
        %1510 = vmatpush1.bf16.msra.mxu0 0
        %1511 = vmatprep.subr.bf16.mxu0 0
        %1512 = vmatpush1.bf16.msra.mxu0 %v1495
        %1513 = vmatprep.subr.bf16.mxu0 0
        %1514 = vmatpush2.bf16.msra.mxu0 0
        %1515 = vmatprep.subr.bf16.mxu0 0
        %1516 = vmatpush2.bf16.msra.mxu0 0
        %1517 = vmatprep.subr.bf16.mxu0 0
        %1518 = vmatpush2.bf16.msra.mxu0 0
        %1519 = vmatprep.subr.bf16.mxu0 0
        %1520 = vmatpush2.bf16.msra.mxu0 0
        %1521 = vmatprep.subr.bf16.mxu0 0
        %1522 = vmatpush2.bf16.msra.mxu0 0
        %1523 = vmatprep.subr.bf16.mxu0 0
        %1524 = vmatpush2.bf16.msra.mxu0 0
        %1525 = vmatprep.subr.bf16.mxu0 0
        %1526 = vmatpush2.bf16.msra.mxu0 0
        %1527 = vmatprep.subr.bf16.mxu0 0
        %1528 = vmatpush2.bf16.msra.mxu0 0
        %1529 = vmatprep.mubr.bf16.mxu0 0
        %1530 = vmatmul.mubr.bf16.gmra.mxu0 %v1492
        %v1531 = vpop.f32.mrf.mxu0
        %v1532 = vadd.f32 0.0, %v1531
        %v1533 = vpop.f32.mrf.mxu0
        %v1534 = vpop.f32.mrf.mxu0
        %v1535 = vpop.f32.mrf.mxu0
        %1536 = vdwg.mxu0
        %1538 = vrot.lane.b32.xlu0 %v1308, 8
        %v1539 = vpop.permute.xlu0 %1538
        %1542 = vrot.lane.b32.xlu0 %v1420, 16
        %v1543 = vpop.permute.xlu0 %1542
        %1546 = vrot.lane.b32.xlu0 %v1532, 24
        %v1547 = vpop.permute.xlu0 %1546
        %v1549 = vsel %vm1090, %v1193, %v1539
        %vm1550 = vcmask 130048
        %v1551 = vsel %vm1550, %v1549, %v1543
        %vm1552 = vcmask 195584
        %v1553 = vsel %vm1552, %v1551, %v1547
        %v1554 = vpack.c.bf16 %v1553, %v1553
        %v1559 = vunpack.c.l.b16 %v915
        %v1560 = vunpack.c.l.b16 %v916
        %v1561 = vunpack.c.l.b16 %v917
        %v1562 = vunpack.c.l.b16 %v918
        %v1563 = vpack.c.b16 %v1560, %v1559
        %v1564 = vpack.c.b16 %v1562, %v1561
        %v1568 = vsel %vm935, %v1554, 0
        %1570 = vmatprep.subr.bf16.mxu0 0
        %1571 = vmatpush1.bf16.msra.mxu0 0
        %1572 = vmatprep.subr.bf16.mxu0 0
        %1573 = vmatpush1.bf16.msra.mxu0 0
        %1574 = vmatprep.subr.bf16.mxu0 0
        %1575 = vmatpush1.bf16.msra.mxu0 0
        %1576 = vmatprep.subr.bf16.mxu0 0
        %1577 = vmatpush1.bf16.msra.mxu0 0
        %1578 = vmatprep.subr.bf16.mxu0 0
        %1579 = vmatpush1.bf16.msra.mxu0 0
        %1580 = vmatprep.subr.bf16.mxu0 0
        %1581 = vmatpush1.bf16.msra.mxu0 0
        %1582 = vmatprep.subr.bf16.mxu0 0
        %1583 = vmatpush1.bf16.msra.mxu0 %v1564
        %1584 = vmatprep.subr.bf16.mxu0 0
        %1585 = vmatpush1.bf16.msra.mxu0 %v1563
        %1586 = vmatprep.subr.bf16.mxu0 0
        %1587 = vmatpush2.bf16.msra.mxu0 0
        %1588 = vmatprep.subr.bf16.mxu0 0
        %1589 = vmatpush2.bf16.msra.mxu0 0
        %1590 = vmatprep.subr.bf16.mxu0 0
        %1591 = vmatpush2.bf16.msra.mxu0 0
        %1592 = vmatprep.subr.bf16.mxu0 0
        %1593 = vmatpush2.bf16.msra.mxu0 0
        %1594 = vmatprep.subr.bf16.mxu0 0
        %1595 = vmatpush2.bf16.msra.mxu0 0
        %1596 = vmatprep.subr.bf16.mxu0 0
        %1597 = vmatpush2.bf16.msra.mxu0 0
        %1598 = vmatprep.subr.bf16.mxu0 0
        %1599 = vmatpush2.bf16.msra.mxu0 0
        %1600 = vmatprep.subr.bf16.mxu0 0
        %1601 = vmatpush2.bf16.msra.mxu0 0
        %1602 = vmatprep.mubr.bf16.mxu0 0
        %1603 = vmatmul.mubr.bf16.gmra.mxu0 %v1568
        %v1604 = vpop.f32.mrf.mxu0
        %v1605 = vadd.f32 %v898, %v1604
        %v1606 = vpop.f32.mrf.mxu0
        %v1607 = vpop.f32.mrf.mxu0
        %v1608 = vpop.f32.mrf.mxu0
        %1609 = vdwg.mxu0
        %v1610 = vsel %vm935, %v1605, 0.0
        %1611 = vadd.xlane.f32.xlu0 %v1610
        %v1612 = vpop.xlane.xlu0 %1611
        %v1613 = vrcp.pop 32.0
        %v1614 = vmul.f32 %v1612, %v1613
        %v1615 = vsub.f32 %v1605, %v1614
        %v1616 = vmul.f32 %v1615, %v1615
        %v1617 = vsel %vm935, %v1616, 0.0
        %1618 = vadd.xlane.f32.xlu0 %v1617
        %v1619 = vpop.xlane.xlu0 %1618
        %v1620 = vmul.f32 %v1619, %v1613
        %v1621 = vadd.f32 %v1620, 1e-06
        %v1622 = vrsqrt.pop %v1621
        %v1623 = vmul.f32 %v1615, %v1622
        %v1625 = vlaneseq
        %v1626 = vshrl.u32 %v1625, 7
        %v1627 = vsub.s32 0, %v1626
        %v1628 = vrot.slane %v919, %v1627
        %v1630 = vmul.f32 %v1623, %v1628
        %v1632 = vlaneseq
        %v1633 = vshrl.u32 %v1632, 7
        %v1634 = vsub.s32 0, %v1633
        %v1635 = vrot.slane %v920, %v1634
        %v1637 = vadd.f32 %v1630, %v1635
        %v1638 = vld [vmem:[%s896] sm:$0xf]
        %v1639 = vunpack.c.l.bf16 %v1638
        %v1640 = vld [vmem:[%s11] sm:$0xf]
        %v1641 = vld [vmem:[%s11 + $0x4] sm:$0xf]
        %v1642 = vld [vmem:[%s11 + $0x8] sm:$0xf]
        %v1643 = vld [vmem:[%s11 + $0xc] sm:$0xf]
        %v1644 = vld [vmem:[%s12] sm:$0xf]
        %v1645 = vld [vmem:[%s12 + $0x4] sm:$0xf]
        %v1646 = vld [vmem:[%s12 + $0x8] sm:$0xf]
        %v1647 = vld [vmem:[%s12 + $0xc] sm:$0xf]
        %v1648 = vld [vmem:[%s13] sm:$0xf]
        %v1649 = vld [vmem:[%s13 + $0x4] sm:$0xf]
        %v1650 = vld [vmem:[%s13 + $0x8] sm:$0xf]
        %v1651 = vld [vmem:[%s13 + $0xc] sm:$0xf]
        %v1652 = vld [vmem:[%s14] sm:$0xf]
        %v1653 = vld [vmem:[%s14 + $0x4] sm:$0xf]
        %v1654 = vld [vmem:[%s14 + $0x8] sm:$0xf]
        %v1655 = vld [vmem:[%s14 + $0xc] sm:$0xf]
        %v1656 = vld [vmem:[%s15] sm:$0x1]
        %v1657 = vld [vmem:[%s16] sm:$0x1]
        %v1658 = vpack.c.bf16 %v1637, %v1637
        %v1659 = vpack.c.bf16 %v900, %v900
        %v1664 = vunpack.c.l.b16 %v1640
        %v1665 = vunpack.c.l.b16 %v1641
        %v1666 = vunpack.c.l.b16 %v1642
        %v1667 = vunpack.c.l.b16 %v1643
        %v1668 = vpack.c.b16 %v1665, %v1664
        %v1669 = vpack.c.b16 %v1667, %v1666
        %v1673 = vsel %vm935, %v1658, 0
        %1675 = vmatprep.subr.bf16.mxu0 0
        %1676 = vmatpush1.bf16.msra.mxu0 0
        %1677 = vmatprep.subr.bf16.mxu0 0
        %1678 = vmatpush1.bf16.msra.mxu0 0
        %1679 = vmatprep.subr.bf16.mxu0 0
        %1680 = vmatpush1.bf16.msra.mxu0 0
        %1681 = vmatprep.subr.bf16.mxu0 0
        %1682 = vmatpush1.bf16.msra.mxu0 0
        %1683 = vmatprep.subr.bf16.mxu0 0
        %1684 = vmatpush1.bf16.msra.mxu0 0
        %1685 = vmatprep.subr.bf16.mxu0 0
        %1686 = vmatpush1.bf16.msra.mxu0 0
        %1687 = vmatprep.subr.bf16.mxu0 0
        %1688 = vmatpush1.bf16.msra.mxu0 %v1669
        %1689 = vmatprep.subr.bf16.mxu0 0
        %1690 = vmatpush1.bf16.msra.mxu0 %v1668
        %1691 = vmatprep.subr.bf16.mxu0 0
        %1692 = vmatpush2.bf16.msra.mxu0 0
        %1693 = vmatprep.subr.bf16.mxu0 0
        %1694 = vmatpush2.bf16.msra.mxu0 0
        %1695 = vmatprep.subr.bf16.mxu0 0
        %1696 = vmatpush2.bf16.msra.mxu0 0
        %1697 = vmatprep.subr.bf16.mxu0 0
        %1698 = vmatpush2.bf16.msra.mxu0 0
        %1699 = vmatprep.subr.bf16.mxu0 0
        %1700 = vmatpush2.bf16.msra.mxu0 0
        %1701 = vmatprep.subr.bf16.mxu0 0
        %1702 = vmatpush2.bf16.msra.mxu0 0
        %1703 = vmatprep.subr.bf16.mxu0 0
        %1704 = vmatpush2.bf16.msra.mxu0 0
        %1705 = vmatprep.subr.bf16.mxu0 0
        %1706 = vmatpush2.bf16.msra.mxu0 0
        %1707 = vmatprep.mubr.bf16.mxu0 0
        %1708 = vmatmul.mubr.bf16.gmra.mxu0 %v1673
        %v1709 = vpop.f32.mrf.mxu0
        %v1710 = vadd.f32 0.0, %v1709
        %v1711 = vpop.f32.mrf.mxu0
        %v1712 = vpop.f32.mrf.mxu0
        %v1713 = vpop.f32.mrf.mxu0
        %1714 = vdwg.mxu0
        %v1715 = vmul.f32 %v1710, 0.35355338
        %v1720 = vunpack.c.l.b16 %v1644
        %v1721 = vunpack.c.l.b16 %v1645
        %v1722 = vunpack.c.l.b16 %v1646
        %v1723 = vunpack.c.l.b16 %v1647
        %v1724 = vpack.c.b16 %v1721, %v1720
        %v1725 = vpack.c.b16 %v1723, %v1722
        %v1729 = vsel %vm935, %v1659, 0
        %1731 = vmatprep.subr.bf16.mxu0 0
        %1732 = vmatpush1.bf16.msra.mxu0 0
        %1733 = vmatprep.subr.bf16.mxu0 0
        %1734 = vmatpush1.bf16.msra.mxu0 0
        %1735 = vmatprep.subr.bf16.mxu0 0
        %1736 = vmatpush1.bf16.msra.mxu0 0
        %1737 = vmatprep.subr.bf16.mxu0 0
        %1738 = vmatpush1.bf16.msra.mxu0 0
        %1739 = vmatprep.subr.bf16.mxu0 0
        %1740 = vmatpush1.bf16.msra.mxu0 0
        %1741 = vmatprep.subr.bf16.mxu0 0
        %1742 = vmatpush1.bf16.msra.mxu0 0
        %1743 = vmatprep.subr.bf16.mxu0 0
        %1744 = vmatpush1.bf16.msra.mxu0 %v1725
        %1745 = vmatprep.subr.bf16.mxu0 0
        %1746 = vmatpush1.bf16.msra.mxu0 %v1724
        %1747 = vmatprep.subr.bf16.mxu0 0
        %1748 = vmatpush2.bf16.msra.mxu0 0
        %1749 = vmatprep.subr.bf16.mxu0 0
        %1750 = vmatpush2.bf16.msra.mxu0 0
        %1751 = vmatprep.subr.bf16.mxu0 0
        %1752 = vmatpush2.bf16.msra.mxu0 0
        %1753 = vmatprep.subr.bf16.mxu0 0
        %1754 = vmatpush2.bf16.msra.mxu0 0
        %1755 = vmatprep.subr.bf16.mxu0 0
        %1756 = vmatpush2.bf16.msra.mxu0 0
        %1757 = vmatprep.subr.bf16.mxu0 0
        %1758 = vmatpush2.bf16.msra.mxu0 0
        %1759 = vmatprep.subr.bf16.mxu0 0
        %1760 = vmatpush2.bf16.msra.mxu0 0
        %1761 = vmatprep.subr.bf16.mxu0 0
        %1762 = vmatpush2.bf16.msra.mxu0 0
        %1763 = vmatprep.mubr.bf16.mxu0 0
        %1764 = vmatmul.mubr.bf16.gmra.mxu0 %v1729
        %v1765 = vpop.f32.mrf.mxu0
        %v1766 = vadd.f32 0.0, %v1765
        %v1767 = vpop.f32.mrf.mxu0
        %v1768 = vpop.f32.mrf.mxu0
        %v1769 = vpop.f32.mrf.mxu0
        %1770 = vdwg.mxu0
        %v1775 = vunpack.c.l.b16 %v1648
        %v1776 = vunpack.c.l.b16 %v1649
        %v1777 = vunpack.c.l.b16 %v1650
        %v1778 = vunpack.c.l.b16 %v1651
        %v1779 = vpack.c.b16 %v1776, %v1775
        %v1780 = vpack.c.b16 %v1778, %v1777
        %1783 = vmatprep.subr.bf16.mxu0 0
        %1784 = vmatpush1.bf16.msra.mxu0 0
        %1785 = vmatprep.subr.bf16.mxu0 0
        %1786 = vmatpush1.bf16.msra.mxu0 0
        %1787 = vmatprep.subr.bf16.mxu0 0
        %1788 = vmatpush1.bf16.msra.mxu0 0
        %1789 = vmatprep.subr.bf16.mxu0 0
        %1790 = vmatpush1.bf16.msra.mxu0 0
        %1791 = vmatprep.subr.bf16.mxu0 0
        %1792 = vmatpush1.bf16.msra.mxu0 0
        %1793 = vmatprep.subr.bf16.mxu0 0
        %1794 = vmatpush1.bf16.msra.mxu0 0
        %1795 = vmatprep.subr.bf16.mxu0 0
        %1796 = vmatpush1.bf16.msra.mxu0 %v1780
        %1797 = vmatprep.subr.bf16.mxu0 0
        %1798 = vmatpush1.bf16.msra.mxu0 %v1779
        %1799 = vmatprep.subr.bf16.mxu0 0
        %1800 = vmatpush2.bf16.msra.mxu0 0
        %1801 = vmatprep.subr.bf16.mxu0 0
        %1802 = vmatpush2.bf16.msra.mxu0 0
        %1803 = vmatprep.subr.bf16.mxu0 0
        %1804 = vmatpush2.bf16.msra.mxu0 0
        %1805 = vmatprep.subr.bf16.mxu0 0
        %1806 = vmatpush2.bf16.msra.mxu0 0
        %1807 = vmatprep.subr.bf16.mxu0 0
        %1808 = vmatpush2.bf16.msra.mxu0 0
        %1809 = vmatprep.subr.bf16.mxu0 0
        %1810 = vmatpush2.bf16.msra.mxu0 0
        %1811 = vmatprep.subr.bf16.mxu0 0
        %1812 = vmatpush2.bf16.msra.mxu0 0
        %1813 = vmatprep.subr.bf16.mxu0 0
        %1814 = vmatpush2.bf16.msra.mxu0 0
        %1815 = vmatprep.mubr.bf16.mxu0 0
        %1816 = vmatmul.mubr.bf16.gmra.mxu0 %v1729
        %v1817 = vpop.f32.mrf.mxu0
        %v1818 = vadd.f32 0.0, %v1817
        %v1819 = vpop.f32.mrf.mxu0
        %v1820 = vpop.f32.mrf.mxu0
        %v1821 = vpop.f32.mrf.mxu0
        %1822 = vdwg.mxu0
        %v1823 = vpack.c.bf16 %v1715, %v1715
        %v1824 = vpack.c.bf16 %v1766, %v1766
        %v1825 = vpack.c.bf16 %v1818, %v1818
        %v1827 = vsel %vm1090, %v1823, 0
        %v1830 = vsel %vm1090, %v1824, 0
        %1832 = vmatprep.subr.bf16.mxu0 0
        %1833 = vmatpush1.bf16.xpose.msra.mxu0 0
        %1834 = vmatprep.subr.bf16.mxu0 0
        %1835 = vmatpush1.bf16.xpose.msra.mxu0 0
        %1836 = vmatprep.subr.bf16.mxu0 0
        %1837 = vmatpush1.bf16.xpose.msra.mxu0 0
        %1838 = vmatprep.subr.bf16.mxu0 0
        %1839 = vmatpush1.bf16.xpose.msra.mxu0 0
        %1840 = vmatprep.subr.bf16.mxu0 0
        %1841 = vmatpush1.bf16.xpose.msra.mxu0 0
        %1842 = vmatprep.subr.bf16.mxu0 0
        %1843 = vmatpush1.bf16.xpose.msra.mxu0 0
        %1844 = vmatprep.subr.bf16.mxu0 0
        %1845 = vmatpush1.bf16.xpose.msra.mxu0 0
        %1846 = vmatprep.subr.bf16.mxu0 0
        %1847 = vmatpush1.bf16.xpose.msra.mxu0 %v1830
        %1848 = vmatprep.subr.bf16.mxu0 0
        %1849 = vmatpush2.bf16.xpose.msra.mxu0 0
        %1850 = vmatprep.subr.bf16.mxu0 0
        %1851 = vmatpush2.bf16.xpose.msra.mxu0 0
        %1852 = vmatprep.subr.bf16.mxu0 0
        %1853 = vmatpush2.bf16.xpose.msra.mxu0 0
        %1854 = vmatprep.subr.bf16.mxu0 0
        %1855 = vmatpush2.bf16.xpose.msra.mxu0 0
        %1856 = vmatprep.subr.bf16.mxu0 0
        %1857 = vmatpush2.bf16.xpose.msra.mxu0 0
        %1858 = vmatprep.subr.bf16.mxu0 0
        %1859 = vmatpush2.bf16.xpose.msra.mxu0 0
        %1860 = vmatprep.subr.bf16.mxu0 0
        %1861 = vmatpush2.bf16.xpose.msra.mxu0 0
        %1862 = vmatprep.subr.bf16.mxu0 0
        %1863 = vmatpush2.bf16.xpose.msra.mxu0 0
        %1864 = vmatprep.mubr.bf16.mxu0 0
        %1865 = vmatmul.mubr.bf16.gmra.mxu0 %v1827
        %v1866 = vpop.f32.mrf.mxu0
        %v1867 = vadd.f32 %v1639, %v1866
        %v1868 = vpop.f32.mrf.mxu0
        %v1869 = vpop.f32.mrf.mxu0
        %v1870 = vpop.f32.mrf.mxu0
        %1871 = vdwg.mxu0
        %v1872 = vsel %vm1090, %v1867, -inf
        %1873 = vmax.xlane.f32.xlu0 %v1872
        %v1874 = vpop.xlane.xlu0 %1873
        %v1875 = vsub.f32 %v1867, %v1874
        %v1876 = vmul.f32 %v1875, 1.442695
        %v1877 = vpow.pop %v1876
        %v1878 = vsel %vm1090, %v1877, 0.0
        %1879 = vadd.xlane.f32.xlu0 %v1878
        %v1880 = vpop.xlane.xlu0 %1879
        %v1881 = vrcp.pop %v1880
        %v1882 = vmul.f32 %v1877, %v1881
        %v1883 = vpack.c.bf16 %v1882, %v1882
        %1884 = vst.msk [vmem:[%s867] sm:$0xf] %vm1149, %v1883
        %v1886 = vsel %vm1090, %v1883, 0
        %v1889 = vsel %vm1154, %v1825, 0
        %1891 = vmatprep.subr.bf16.mxu0 0
        %1892 = vmatpush1.bf16.msra.mxu0 0
        %1893 = vmatprep.subr.bf16.mxu0 0
        %1894 = vmatpush1.bf16.msra.mxu0 0
        %1895 = vmatprep.subr.bf16.mxu0 0
        %1896 = vmatpush1.bf16.msra.mxu0 0
        %1897 = vmatprep.subr.bf16.mxu0 0
        %1898 = vmatpush1.bf16.msra.mxu0 0
        %1899 = vmatprep.subr.bf16.mxu0 0
        %1900 = vmatpush1.bf16.msra.mxu0 0
        %1901 = vmatprep.subr.bf16.mxu0 0
        %1902 = vmatpush1.bf16.msra.mxu0 0
        %1903 = vmatprep.subr.bf16.mxu0 0
        %1904 = vmatpush1.bf16.msra.mxu0 0
        %1905 = vmatprep.subr.bf16.mxu0 0
        %1906 = vmatpush1.bf16.msra.mxu0 %v1889
        %1907 = vmatprep.subr.bf16.mxu0 0
        %1908 = vmatpush2.bf16.msra.mxu0 0
        %1909 = vmatprep.subr.bf16.mxu0 0
        %1910 = vmatpush2.bf16.msra.mxu0 0
        %1911 = vmatprep.subr.bf16.mxu0 0
        %1912 = vmatpush2.bf16.msra.mxu0 0
        %1913 = vmatprep.subr.bf16.mxu0 0
        %1914 = vmatpush2.bf16.msra.mxu0 0
        %1915 = vmatprep.subr.bf16.mxu0 0
        %1916 = vmatpush2.bf16.msra.mxu0 0
        %1917 = vmatprep.subr.bf16.mxu0 0
        %1918 = vmatpush2.bf16.msra.mxu0 0
        %1919 = vmatprep.subr.bf16.mxu0 0
        %1920 = vmatpush2.bf16.msra.mxu0 0
        %1921 = vmatprep.subr.bf16.mxu0 0
        %1922 = vmatpush2.bf16.msra.mxu0 0
        %1923 = vmatprep.mubr.bf16.mxu0 0
        %1924 = vmatmul.mubr.bf16.gmra.mxu0 %v1886
        %v1925 = vpop.f32.mrf.mxu0
        %v1926 = vadd.f32 0.0, %v1925
        %v1927 = vpop.f32.mrf.mxu0
        %v1928 = vpop.f32.mrf.mxu0
        %v1929 = vpop.f32.mrf.mxu0
        %1930 = vdwg.mxu0
        %1932 = vrot.lane.b32.xlu0 %v1823, 120
        %v1933 = vpop.permute.xlu0 %1932
        %1935 = vrot.lane.b32.xlu0 %v1824, 120
        %v1936 = vpop.permute.xlu0 %1935
        %v1938 = vsel %vm1090, %v1933, 0
        %v1941 = vsel %vm1090, %v1936, 0
        %1943 = vmatprep.subr.bf16.mxu0 0
        %1944 = vmatpush1.bf16.xpose.msra.mxu0 0
        %1945 = vmatprep.subr.bf16.mxu0 0
        %1946 = vmatpush1.bf16.xpose.msra.mxu0 0
        %1947 = vmatprep.subr.bf16.mxu0 0
        %1948 = vmatpush1.bf16.xpose.msra.mxu0 0
        %1949 = vmatprep.subr.bf16.mxu0 0
        %1950 = vmatpush1.bf16.xpose.msra.mxu0 0
        %1951 = vmatprep.subr.bf16.mxu0 0
        %1952 = vmatpush1.bf16.xpose.msra.mxu0 0
        %1953 = vmatprep.subr.bf16.mxu0 0
        %1954 = vmatpush1.bf16.xpose.msra.mxu0 0
        %1955 = vmatprep.subr.bf16.mxu0 0
        %1956 = vmatpush1.bf16.xpose.msra.mxu0 0
        %1957 = vmatprep.subr.bf16.mxu0 0
        %1958 = vmatpush1.bf16.xpose.msra.mxu0 %v1941
        %1959 = vmatprep.subr.bf16.mxu0 0
        %1960 = vmatpush2.bf16.xpose.msra.mxu0 0
        %1961 = vmatprep.subr.bf16.mxu0 0
        %1962 = vmatpush2.bf16.xpose.msra.mxu0 0
        %1963 = vmatprep.subr.bf16.mxu0 0
        %1964 = vmatpush2.bf16.xpose.msra.mxu0 0
        %1965 = vmatprep.subr.bf16.mxu0 0
        %1966 = vmatpush2.bf16.xpose.msra.mxu0 0
        %1967 = vmatprep.subr.bf16.mxu0 0
        %1968 = vmatpush2.bf16.xpose.msra.mxu0 0
        %1969 = vmatprep.subr.bf16.mxu0 0
        %1970 = vmatpush2.bf16.xpose.msra.mxu0 0
        %1971 = vmatprep.subr.bf16.mxu0 0
        %1972 = vmatpush2.bf16.xpose.msra.mxu0 0
        %1973 = vmatprep.subr.bf16.mxu0 0
        %1974 = vmatpush2.bf16.xpose.msra.mxu0 0
        %1975 = vmatprep.mubr.bf16.mxu0 0
        %1976 = vmatmul.mubr.bf16.gmra.mxu0 %v1938
        %v1977 = vpop.f32.mrf.mxu0
        %v1978 = vadd.f32 %v1639, %v1977
        %v1979 = vpop.f32.mrf.mxu0
        %v1980 = vpop.f32.mrf.mxu0
        %v1981 = vpop.f32.mrf.mxu0
        %1982 = vdwg.mxu0
        %v1983 = vsel %vm1090, %v1978, -inf
        %1984 = vmax.xlane.f32.xlu0 %v1983
        %v1985 = vpop.xlane.xlu0 %1984
        %v1986 = vsub.f32 %v1978, %v1985
        %v1987 = vmul.f32 %v1986, 1.442695
        %v1988 = vpow.pop %v1987
        %v1989 = vsel %vm1090, %v1988, 0.0
        %1990 = vadd.xlane.f32.xlu0 %v1989
        %v1991 = vpop.xlane.xlu0 %1990
        %v1992 = vrcp.pop %v1991
        %v1993 = vmul.f32 %v1988, %v1992
        %v1994 = vpack.c.bf16 %v1993, %v1993
        %s1995 = scalar_lea.vmem %s867, 4 [#allocation6]
        %1996 = vst.msk [vmem:[%s1995] sm:$0xf] %vm1149, %v1994
        %1998 = vrot.lane.b32.xlu0 %v1825, 120
        %v1999 = vpop.permute.xlu0 %1998
        %v2001 = vsel %vm1090, %v1994, 0
        %v2004 = vsel %vm1154, %v1999, 0
        %2006 = vmatprep.subr.bf16.mxu0 0
        %2007 = vmatpush1.bf16.msra.mxu0 0
        %2008 = vmatprep.subr.bf16.mxu0 0
        %2009 = vmatpush1.bf16.msra.mxu0 0
        %2010 = vmatprep.subr.bf16.mxu0 0
        %2011 = vmatpush1.bf16.msra.mxu0 0
        %2012 = vmatprep.subr.bf16.mxu0 0
        %2013 = vmatpush1.bf16.msra.mxu0 0
        %2014 = vmatprep.subr.bf16.mxu0 0
        %2015 = vmatpush1.bf16.msra.mxu0 0
        %2016 = vmatprep.subr.bf16.mxu0 0
        %2017 = vmatpush1.bf16.msra.mxu0 0
        %2018 = vmatprep.subr.bf16.mxu0 0
        %2019 = vmatpush1.bf16.msra.mxu0 0
        %2020 = vmatprep.subr.bf16.mxu0 0
        %2021 = vmatpush1.bf16.msra.mxu0 %v2004
        %2022 = vmatprep.subr.bf16.mxu0 0
        %2023 = vmatpush2.bf16.msra.mxu0 0
        %2024 = vmatprep.subr.bf16.mxu0 0
        %2025 = vmatpush2.bf16.msra.mxu0 0
        %2026 = vmatprep.subr.bf16.mxu0 0
        %2027 = vmatpush2.bf16.msra.mxu0 0
        %2028 = vmatprep.subr.bf16.mxu0 0
        %2029 = vmatpush2.bf16.msra.mxu0 0
        %2030 = vmatprep.subr.bf16.mxu0 0
        %2031 = vmatpush2.bf16.msra.mxu0 0
        %2032 = vmatprep.subr.bf16.mxu0 0
        %2033 = vmatpush2.bf16.msra.mxu0 0
        %2034 = vmatprep.subr.bf16.mxu0 0
        %2035 = vmatpush2.bf16.msra.mxu0 0
        %2036 = vmatprep.subr.bf16.mxu0 0
        %2037 = vmatpush2.bf16.msra.mxu0 0
        %2038 = vmatprep.mubr.bf16.mxu0 0
        %2039 = vmatmul.mubr.bf16.gmra.mxu0 %v2001
        %v2040 = vpop.f32.mrf.mxu0
        %v2041 = vadd.f32 0.0, %v2040
        %v2042 = vpop.f32.mrf.mxu0
        %v2043 = vpop.f32.mrf.mxu0
        %v2044 = vpop.f32.mrf.mxu0
        %2045 = vdwg.mxu0
        %2046 = vrot.lane.b32.xlu0 %v1823, 112
        %v2047 = vpop.permute.xlu0 %2046
        %2048 = vrot.lane.b32.xlu0 %v1824, 112
        %v2049 = vpop.permute.xlu0 %2048
        %v2051 = vsel %vm1090, %v2047, 0
        %v2054 = vsel %vm1090, %v2049, 0
        %2056 = vmatprep.subr.bf16.mxu0 0
        %2057 = vmatpush1.bf16.xpose.msra.mxu0 0
        %2058 = vmatprep.subr.bf16.mxu0 0
        %2059 = vmatpush1.bf16.xpose.msra.mxu0 0
        %2060 = vmatprep.subr.bf16.mxu0 0
        %2061 = vmatpush1.bf16.xpose.msra.mxu0 0
        %2062 = vmatprep.subr.bf16.mxu0 0
        %2063 = vmatpush1.bf16.xpose.msra.mxu0 0
        %2064 = vmatprep.subr.bf16.mxu0 0
        %2065 = vmatpush1.bf16.xpose.msra.mxu0 0
        %2066 = vmatprep.subr.bf16.mxu0 0
        %2067 = vmatpush1.bf16.xpose.msra.mxu0 0
        %2068 = vmatprep.subr.bf16.mxu0 0
        %2069 = vmatpush1.bf16.xpose.msra.mxu0 0
        %2070 = vmatprep.subr.bf16.mxu0 0
        %2071 = vmatpush1.bf16.xpose.msra.mxu0 %v2054
        %2072 = vmatprep.subr.bf16.mxu0 0
        %2073 = vmatpush2.bf16.xpose.msra.mxu0 0
        %2074 = vmatprep.subr.bf16.mxu0 0
        %2075 = vmatpush2.bf16.xpose.msra.mxu0 0
        %2076 = vmatprep.subr.bf16.mxu0 0
        %2077 = vmatpush2.bf16.xpose.msra.mxu0 0
        %2078 = vmatprep.subr.bf16.mxu0 0
        %2079 = vmatpush2.bf16.xpose.msra.mxu0 0
        %2080 = vmatprep.subr.bf16.mxu0 0
        %2081 = vmatpush2.bf16.xpose.msra.mxu0 0
        %2082 = vmatprep.subr.bf16.mxu0 0
        %2083 = vmatpush2.bf16.xpose.msra.mxu0 0
        %2084 = vmatprep.subr.bf16.mxu0 0
        %2085 = vmatpush2.bf16.xpose.msra.mxu0 0
        %2086 = vmatprep.subr.bf16.mxu0 0
        %2087 = vmatpush2.bf16.xpose.msra.mxu0 0
        %2088 = vmatprep.mubr.bf16.mxu0 0
        %2089 = vmatmul.mubr.bf16.gmra.mxu0 %v2051
        %v2090 = vpop.f32.mrf.mxu0
        %v2091 = vadd.f32 %v1639, %v2090
        %v2092 = vpop.f32.mrf.mxu0
        %v2093 = vpop.f32.mrf.mxu0
        %v2094 = vpop.f32.mrf.mxu0
        %2095 = vdwg.mxu0
        %v2096 = vsel %vm1090, %v2091, -inf
        %2097 = vmax.xlane.f32.xlu0 %v2096
        %v2098 = vpop.xlane.xlu0 %2097
        %v2099 = vsub.f32 %v2091, %v2098
        %v2100 = vmul.f32 %v2099, 1.442695
        %v2101 = vpow.pop %v2100
        %v2102 = vsel %vm1090, %v2101, 0.0
        %2103 = vadd.xlane.f32.xlu0 %v2102
        %v2104 = vpop.xlane.xlu0 %2103
        %v2105 = vrcp.pop %v2104
        %v2106 = vmul.f32 %v2101, %v2105
        %v2107 = vpack.c.bf16 %v2106, %v2106
        %s2108 = scalar_lea.vmem %s867, 8 [#allocation6]
        %2109 = vst.msk [vmem:[%s2108] sm:$0xf] %vm1149, %v2107
        %2110 = vrot.lane.b32.xlu0 %v1825, 112
        %v2111 = vpop.permute.xlu0 %2110
        %v2113 = vsel %vm1090, %v2107, 0
        %v2116 = vsel %vm1154, %v2111, 0
        %2118 = vmatprep.subr.bf16.mxu0 0
        %2119 = vmatpush1.bf16.msra.mxu0 0
        %2120 = vmatprep.subr.bf16.mxu0 0
        %2121 = vmatpush1.bf16.msra.mxu0 0
        %2122 = vmatprep.subr.bf16.mxu0 0
        %2123 = vmatpush1.bf16.msra.mxu0 0
        %2124 = vmatprep.subr.bf16.mxu0 0
        %2125 = vmatpush1.bf16.msra.mxu0 0
        %2126 = vmatprep.subr.bf16.mxu0 0
        %2127 = vmatpush1.bf16.msra.mxu0 0
        %2128 = vmatprep.subr.bf16.mxu0 0
        %2129 = vmatpush1.bf16.msra.mxu0 0
        %2130 = vmatprep.subr.bf16.mxu0 0
        %2131 = vmatpush1.bf16.msra.mxu0 0
        %2132 = vmatprep.subr.bf16.mxu0 0
        %2133 = vmatpush1.bf16.msra.mxu0 %v2116
        %2134 = vmatprep.subr.bf16.mxu0 0
        %2135 = vmatpush2.bf16.msra.mxu0 0
        %2136 = vmatprep.subr.bf16.mxu0 0
        %2137 = vmatpush2.bf16.msra.mxu0 0
        %2138 = vmatprep.subr.bf16.mxu0 0
        %2139 = vmatpush2.bf16.msra.mxu0 0
        %2140 = vmatprep.subr.bf16.mxu0 0
        %2141 = vmatpush2.bf16.msra.mxu0 0
        %2142 = vmatprep.subr.bf16.mxu0 0
        %2143 = vmatpush2.bf16.msra.mxu0 0
        %2144 = vmatprep.subr.bf16.mxu0 0
        %2145 = vmatpush2.bf16.msra.mxu0 0
        %2146 = vmatprep.subr.bf16.mxu0 0
        %2147 = vmatpush2.bf16.msra.mxu0 0
        %2148 = vmatprep.subr.bf16.mxu0 0
        %2149 = vmatpush2.bf16.msra.mxu0 0
        %2150 = vmatprep.mubr.bf16.mxu0 0
        %2151 = vmatmul.mubr.bf16.gmra.mxu0 %v2113
        %v2152 = vpop.f32.mrf.mxu0
        %v2153 = vadd.f32 0.0, %v2152
        %v2154 = vpop.f32.mrf.mxu0
        %v2155 = vpop.f32.mrf.mxu0
        %v2156 = vpop.f32.mrf.mxu0
        %2157 = vdwg.mxu0
        %2158 = vrot.lane.b32.xlu0 %v1823, 104
        %v2159 = vpop.permute.xlu0 %2158
        %2160 = vrot.lane.b32.xlu0 %v1824, 104
        %v2161 = vpop.permute.xlu0 %2160
        %v2163 = vsel %vm1090, %v2159, 0
        %v2166 = vsel %vm1090, %v2161, 0
        %2168 = vmatprep.subr.bf16.mxu0 0
        %2169 = vmatpush1.bf16.xpose.msra.mxu0 0
        %2170 = vmatprep.subr.bf16.mxu0 0
        %2171 = vmatpush1.bf16.xpose.msra.mxu0 0
        %2172 = vmatprep.subr.bf16.mxu0 0
        %2173 = vmatpush1.bf16.xpose.msra.mxu0 0
        %2174 = vmatprep.subr.bf16.mxu0 0
        %2175 = vmatpush1.bf16.xpose.msra.mxu0 0
        %2176 = vmatprep.subr.bf16.mxu0 0
        %2177 = vmatpush1.bf16.xpose.msra.mxu0 0
        %2178 = vmatprep.subr.bf16.mxu0 0
        %2179 = vmatpush1.bf16.xpose.msra.mxu0 0
        %2180 = vmatprep.subr.bf16.mxu0 0
        %2181 = vmatpush1.bf16.xpose.msra.mxu0 0
        %2182 = vmatprep.subr.bf16.mxu0 0
        %2183 = vmatpush1.bf16.xpose.msra.mxu0 %v2166
        %2184 = vmatprep.subr.bf16.mxu0 0
        %2185 = vmatpush2.bf16.xpose.msra.mxu0 0
        %2186 = vmatprep.subr.bf16.mxu0 0
        %2187 = vmatpush2.bf16.xpose.msra.mxu0 0
        %2188 = vmatprep.subr.bf16.mxu0 0
        %2189 = vmatpush2.bf16.xpose.msra.mxu0 0
        %2190 = vmatprep.subr.bf16.mxu0 0
        %2191 = vmatpush2.bf16.xpose.msra.mxu0 0
        %2192 = vmatprep.subr.bf16.mxu0 0
        %2193 = vmatpush2.bf16.xpose.msra.mxu0 0
        %2194 = vmatprep.subr.bf16.mxu0 0
        %2195 = vmatpush2.bf16.xpose.msra.mxu0 0
        %2196 = vmatprep.subr.bf16.mxu0 0
        %2197 = vmatpush2.bf16.xpose.msra.mxu0 0
        %2198 = vmatprep.subr.bf16.mxu0 0
        %2199 = vmatpush2.bf16.xpose.msra.mxu0 0
        %2200 = vmatprep.mubr.bf16.mxu0 0
        %2201 = vmatmul.mubr.bf16.gmra.mxu0 %v2163
        %v2202 = vpop.f32.mrf.mxu0
        %v2203 = vadd.f32 %v1639, %v2202
        %v2204 = vpop.f32.mrf.mxu0
        %v2205 = vpop.f32.mrf.mxu0
        %v2206 = vpop.f32.mrf.mxu0
        %2207 = vdwg.mxu0
        %v2208 = vsel %vm1090, %v2203, -inf
        %2209 = vmax.xlane.f32.xlu0 %v2208
        %v2210 = vpop.xlane.xlu0 %2209
        %v2211 = vsub.f32 %v2203, %v2210
        %v2212 = vmul.f32 %v2211, 1.442695
        %v2213 = vpow.pop %v2212
        %v2214 = vsel %vm1090, %v2213, 0.0
        %2215 = vadd.xlane.f32.xlu0 %v2214
        %v2216 = vpop.xlane.xlu0 %2215
        %v2217 = vrcp.pop %v2216
        %v2218 = vmul.f32 %v2213, %v2217
        %v2219 = vpack.c.bf16 %v2218, %v2218
        %s2220 = scalar_lea.vmem %s867, 12 [#allocation6]
        %2221 = vst.msk [vmem:[%s2220] sm:$0xf] %vm1149, %v2219
        %2222 = vrot.lane.b32.xlu0 %v1825, 104
        %v2223 = vpop.permute.xlu0 %2222
        %v2225 = vsel %vm1090, %v2219, 0
        %v2228 = vsel %vm1154, %v2223, 0
        %2230 = vmatprep.subr.bf16.mxu0 0
        %2231 = vmatpush1.bf16.msra.mxu0 0
        %2232 = vmatprep.subr.bf16.mxu0 0
        %2233 = vmatpush1.bf16.msra.mxu0 0
        %2234 = vmatprep.subr.bf16.mxu0 0
        %2235 = vmatpush1.bf16.msra.mxu0 0
        %2236 = vmatprep.subr.bf16.mxu0 0
        %2237 = vmatpush1.bf16.msra.mxu0 0
        %2238 = vmatprep.subr.bf16.mxu0 0
        %2239 = vmatpush1.bf16.msra.mxu0 0
        %2240 = vmatprep.subr.bf16.mxu0 0
        %2241 = vmatpush1.bf16.msra.mxu0 0
        %2242 = vmatprep.subr.bf16.mxu0 0
        %2243 = vmatpush1.bf16.msra.mxu0 0
        %2244 = vmatprep.subr.bf16.mxu0 0
        %2245 = vmatpush1.bf16.msra.mxu0 %v2228
        %2246 = vmatprep.subr.bf16.mxu0 0
        %2247 = vmatpush2.bf16.msra.mxu0 0
        %2248 = vmatprep.subr.bf16.mxu0 0
        %2249 = vmatpush2.bf16.msra.mxu0 0
        %2250 = vmatprep.subr.bf16.mxu0 0
        %2251 = vmatpush2.bf16.msra.mxu0 0
        %2252 = vmatprep.subr.bf16.mxu0 0
        %2253 = vmatpush2.bf16.msra.mxu0 0
        %2254 = vmatprep.subr.bf16.mxu0 0
        %2255 = vmatpush2.bf16.msra.mxu0 0
        %2256 = vmatprep.subr.bf16.mxu0 0
        %2257 = vmatpush2.bf16.msra.mxu0 0
        %2258 = vmatprep.subr.bf16.mxu0 0
        %2259 = vmatpush2.bf16.msra.mxu0 0
        %2260 = vmatprep.subr.bf16.mxu0 0
        %2261 = vmatpush2.bf16.msra.mxu0 0
        %2262 = vmatprep.mubr.bf16.mxu0 0
        %2263 = vmatmul.mubr.bf16.gmra.mxu0 %v2225
        %v2264 = vpop.f32.mrf.mxu0
        %v2265 = vadd.f32 0.0, %v2264
        %v2266 = vpop.f32.mrf.mxu0
        %v2267 = vpop.f32.mrf.mxu0
        %v2268 = vpop.f32.mrf.mxu0
        %2269 = vdwg.mxu0
        %2271 = vrot.lane.b32.xlu0 %v2041, 8
        %v2272 = vpop.permute.xlu0 %2271
        %2275 = vrot.lane.b32.xlu0 %v2153, 16
        %v2276 = vpop.permute.xlu0 %2275
        %2279 = vrot.lane.b32.xlu0 %v2265, 24
        %v2280 = vpop.permute.xlu0 %2279
        %v2282 = vsel %vm1090, %v1926, %v2272
        %v2283 = vsel %vm1550, %v2282, %v2276
        %v2284 = vsel %vm1552, %v2283, %v2280
        %v2285 = vpack.c.bf16 %v2284, %v2284
        %v2290 = vunpack.c.l.b16 %v1652
        %v2291 = vunpack.c.l.b16 %v1653
        %v2292 = vunpack.c.l.b16 %v1654
        %v2293 = vunpack.c.l.b16 %v1655
        %v2294 = vpack.c.b16 %v2291, %v2290
        %v2295 = vpack.c.b16 %v2293, %v2292
        %v2299 = vsel %vm935, %v2285, 0
        %2301 = vmatprep.subr.bf16.mxu0 0
        %2302 = vmatpush1.bf16.msra.mxu0 0
        %2303 = vmatprep.subr.bf16.mxu0 0
        %2304 = vmatpush1.bf16.msra.mxu0 0
        %2305 = vmatprep.subr.bf16.mxu0 0
        %2306 = vmatpush1.bf16.msra.mxu0 0
        %2307 = vmatprep.subr.bf16.mxu0 0
        %2308 = vmatpush1.bf16.msra.mxu0 0
        %2309 = vmatprep.subr.bf16.mxu0 0
        %2310 = vmatpush1.bf16.msra.mxu0 0
        %2311 = vmatprep.subr.bf16.mxu0 0
        %2312 = vmatpush1.bf16.msra.mxu0 0
        %2313 = vmatprep.subr.bf16.mxu0 0
        %2314 = vmatpush1.bf16.msra.mxu0 %v2295
        %2315 = vmatprep.subr.bf16.mxu0 0
        %2316 = vmatpush1.bf16.msra.mxu0 %v2294
        %2317 = vmatprep.subr.bf16.mxu0 0
        %2318 = vmatpush2.bf16.msra.mxu0 0
        %2319 = vmatprep.subr.bf16.mxu0 0
        %2320 = vmatpush2.bf16.msra.mxu0 0
        %2321 = vmatprep.subr.bf16.mxu0 0
        %2322 = vmatpush2.bf16.msra.mxu0 0
        %2323 = vmatprep.subr.bf16.mxu0 0
        %2324 = vmatpush2.bf16.msra.mxu0 0
        %2325 = vmatprep.subr.bf16.mxu0 0
        %2326 = vmatpush2.bf16.msra.mxu0 0
        %2327 = vmatprep.subr.bf16.mxu0 0
        %2328 = vmatpush2.bf16.msra.mxu0 0
        %2329 = vmatprep.subr.bf16.mxu0 0
        %2330 = vmatpush2.bf16.msra.mxu0 0
        %2331 = vmatprep.subr.bf16.mxu0 0
        %2332 = vmatpush2.bf16.msra.mxu0 0
        %2333 = vmatprep.mubr.bf16.mxu0 0
        %2334 = vmatmul.mubr.bf16.gmra.mxu0 %v2299
        %v2335 = vpop.f32.mrf.mxu0
        %v2336 = vadd.f32 %v1637, %v2335
        %v2337 = vpop.f32.mrf.mxu0
        %v2338 = vpop.f32.mrf.mxu0
        %v2339 = vpop.f32.mrf.mxu0
        %2340 = vdwg.mxu0
        %v2341 = vsel %vm935, %v2336, 0.0
        %2342 = vadd.xlane.f32.xlu0 %v2341
        %v2343 = vpop.xlane.xlu0 %2342
        %v2344 = vmul.f32 %v2343, %v1613
        %v2345 = vsub.f32 %v2336, %v2344
        %v2346 = vmul.f32 %v2345, %v2345
        %v2347 = vsel %vm935, %v2346, 0.0
        %2348 = vadd.xlane.f32.xlu0 %v2347
        %v2349 = vpop.xlane.xlu0 %2348
        %v2350 = vmul.f32 %v2349, %v1613
        %v2351 = vadd.f32 %v2350, 1e-06
        %v2352 = vrsqrt.pop %v2351
        %v2353 = vmul.f32 %v2345, %v2352
        %v2355 = vlaneseq
        %v2356 = vshrl.u32 %v2355, 7
        %v2357 = vsub.s32 0, %v2356
        %v2358 = vrot.slane %v1656, %v2357
        %v2360 = vmul.f32 %v2353, %v2358
        %v2362 = vlaneseq
        %v2363 = vshrl.u32 %v2362, 7
        %v2364 = vsub.s32 0, %v2363
        %v2365 = vrot.slane %v1657, %v2364
        %v2367 = vadd.f32 %v2360, %v2365
        %v2368 = vld [vmem:[%s17] sm:$0xf]
        %v2369 = vld [vmem:[%s17 + $0x4] sm:$0xf]
        %v2370 = vld [vmem:[%s17 + $0x8] sm:$0xf]
        %v2371 = vld [vmem:[%s17 + $0xc] sm:$0xf]
        %v2372 = vld [vmem:[%s18] sm:$0x1]
        %v2373 = vld [vmem:[%s19] sm:$0xf]
        %v2374 = vld [vmem:[%s19 + $0x4] sm:$0xf]
        %v2375 = vld [vmem:[%s19 + $0x8] sm:$0xf]
        %v2376 = vld [vmem:[%s19 + $0xc] sm:$0xf]
        %v2377 = vld [vmem:[%s19 + $0x10] sm:$0xf]
        %v2378 = vld [vmem:[%s19 + $0x14] sm:$0xf]
        %v2379 = vld [vmem:[%s19 + $0x18] sm:$0xf]
        %v2380 = vld [vmem:[%s19 + $0x1c] sm:$0xf]
        %v2381 = vld [vmem:[%s20] sm:$0x1]
        %v2382 = vld [vmem:[%s21] sm:$0x1]
        %v2383 = vld [vmem:[%s22] sm:$0x1]
        %v2384 = vpack.c.bf16 %v2367, %v2367
        %v2386 = vlaneseq
        %v2387 = vshrl.u32 %v2386, 7
        %v2388 = vsub.s32 0, %v2387
        %v2389 = vrot.slane %v2372, %v2388
        %v2395 = vunpack.c.l.b16 %v2368
        %v2396 = vunpack.c.l.b16 %v2369
        %v2397 = vunpack.c.l.b16 %v2370
        %v2398 = vunpack.c.l.b16 %v2371
        %v2399 = vpack.c.b16 %v2396, %v2395
        %v2400 = vpack.c.b16 %v2398, %v2397
        %v2404 = vsel %vm935, %v2384, 0
        %2406 = vmatprep.subr.bf16.mxu0 0
        %2407 = vmatpush1.bf16.msra.mxu0 0
        %2408 = vmatprep.subr.bf16.mxu0 0
        %2409 = vmatpush1.bf16.msra.mxu0 0
        %2410 = vmatprep.subr.bf16.mxu0 0
        %2411 = vmatpush1.bf16.msra.mxu0 0
        %2412 = vmatprep.subr.bf16.mxu0 0
        %2413 = vmatpush1.bf16.msra.mxu0 0
        %2414 = vmatprep.subr.bf16.mxu0 0
        %2415 = vmatpush1.bf16.msra.mxu0 0
        %2416 = vmatprep.subr.bf16.mxu0 0
        %2417 = vmatpush1.bf16.msra.mxu0 0
        %2418 = vmatprep.subr.bf16.mxu0 0
        %2419 = vmatpush1.bf16.msra.mxu0 %v2400
        %2420 = vmatprep.subr.bf16.mxu0 0
        %2421 = vmatpush1.bf16.msra.mxu0 %v2399
        %2422 = vmatprep.subr.bf16.mxu0 0
        %2423 = vmatpush2.bf16.msra.mxu0 0
        %2424 = vmatprep.subr.bf16.mxu0 0
        %2425 = vmatpush2.bf16.msra.mxu0 0
        %2426 = vmatprep.subr.bf16.mxu0 0
        %2427 = vmatpush2.bf16.msra.mxu0 0
        %2428 = vmatprep.subr.bf16.mxu0 0
        %2429 = vmatpush2.bf16.msra.mxu0 0
        %2430 = vmatprep.subr.bf16.mxu0 0
        %2431 = vmatpush2.bf16.msra.mxu0 0
        %2432 = vmatprep.subr.bf16.mxu0 0
        %2433 = vmatpush2.bf16.msra.mxu0 0
        %2434 = vmatprep.subr.bf16.mxu0 0
        %2435 = vmatpush2.bf16.msra.mxu0 0
        %2436 = vmatprep.subr.bf16.mxu0 0
        %2437 = vmatpush2.bf16.msra.mxu0 0
        %2438 = vmatprep.mubr.bf16.mxu0 0
        %2439 = vmatmul.mubr.bf16.gmra.mxu0 %v2404
        %v2440 = vpop.f32.mrf.mxu0
        %v2441 = vadd.f32 %v2389, %v2440
        %v2442 = vpop.f32.mrf.mxu0
        %v2443 = vpop.f32.mrf.mxu0
        %v2444 = vpop.f32.mrf.mxu0
        %2445 = vdwg.mxu0
        %v2446 = vmax.f32 %v2441, 0.0
        %v2447 = vpack.c.bf16 %v2446, %v2446
        %v2449 = vlaneseq
        %v2450 = vshrl.u32 %v2449, 7
        %v2451 = vsub.s32 0, %v2450
        %v2452 = vrot.slane %v2381, %v2451
        %v2462 = vunpack.c.l.b16 %v2373
        %v2463 = vunpack.c.l.b16 %v2374
        %v2464 = vunpack.c.l.b16 %v2375
        %v2465 = vunpack.c.l.b16 %v2376
        %v2466 = vunpack.c.l.b16 %v2377
        %v2467 = vunpack.c.l.b16 %v2378
        %v2468 = vunpack.c.l.b16 %v2379
        %v2469 = vunpack.c.l.b16 %v2380
        %v2470 = vpack.c.b16 %v2463, %v2462
        %v2471 = vpack.c.b16 %v2465, %v2464
        %v2472 = vpack.c.b16 %v2467, %v2466
        %v2473 = vpack.c.b16 %v2469, %v2468
        %vm2478 = vcmask 523264
        %v2480 = vsel %vm2478, %v2447, 0
        %2482 = vmatprep.subr.bf16.mxu0 0
        %2483 = vmatpush1.bf16.msra.mxu0 0
        %2484 = vmatprep.subr.bf16.mxu0 0
        %2485 = vmatpush1.bf16.msra.mxu0 0
        %2486 = vmatprep.subr.bf16.mxu0 0
        %2487 = vmatpush1.bf16.msra.mxu0 0
        %2488 = vmatprep.subr.bf16.mxu0 0
        %2489 = vmatpush1.bf16.msra.mxu0 0
        %2490 = vmatprep.subr.bf16.mxu0 0
        %2491 = vmatpush1.bf16.msra.mxu0 %v2473
        %2492 = vmatprep.subr.bf16.mxu0 0
        %2493 = vmatpush1.bf16.msra.mxu0 %v2472
        %2494 = vmatprep.subr.bf16.mxu0 0
        %2495 = vmatpush1.bf16.msra.mxu0 %v2471
        %2496 = vmatprep.subr.bf16.mxu0 0
        %2497 = vmatpush1.bf16.msra.mxu0 %v2470
        %2498 = vmatprep.subr.bf16.mxu0 0
        %2499 = vmatpush2.bf16.msra.mxu0 0
        %2500 = vmatprep.subr.bf16.mxu0 0
        %2501 = vmatpush2.bf16.msra.mxu0 0
        %2502 = vmatprep.subr.bf16.mxu0 0
        %2503 = vmatpush2.bf16.msra.mxu0 0
        %2504 = vmatprep.subr.bf16.mxu0 0
        %2505 = vmatpush2.bf16.msra.mxu0 0
        %2506 = vmatprep.subr.bf16.mxu0 0
        %2507 = vmatpush2.bf16.msra.mxu0 0
        %2508 = vmatprep.subr.bf16.mxu0 0
        %2509 = vmatpush2.bf16.msra.mxu0 0
        %2510 = vmatprep.subr.bf16.mxu0 0
        %2511 = vmatpush2.bf16.msra.mxu0 0
        %2512 = vmatprep.subr.bf16.mxu0 0
        %2513 = vmatpush2.bf16.msra.mxu0 0
        %2514 = vmatprep.mubr.bf16.mxu0 0
        %2515 = vmatmul.mubr.bf16.gmra.mxu0 %v2480
        %v2516 = vpop.f32.mrf.mxu0
        %v2517 = vadd.f32 %v2452, %v2516
        %v2518 = vpop.f32.mrf.mxu0
        %v2519 = vpop.f32.mrf.mxu0
        %v2520 = vpop.f32.mrf.mxu0
        %2521 = vdwg.mxu0
        %v2522 = vadd.f32 %v2517, %v2367
        %v2523 = vsel %vm935, %v2522, 0.0
        %2524 = vadd.xlane.f32.xlu0 %v2523
        %v2525 = vpop.xlane.xlu0 %2524
        %v2526 = vmul.f32 %v2525, %v1613
        %v2527 = vsub.f32 %v2522, %v2526
        %v2528 = vmul.f32 %v2527, %v2527
        %v2529 = vsel %vm935, %v2528, 0.0
        %2530 = vadd.xlane.f32.xlu0 %v2529
        %v2531 = vpop.xlane.xlu0 %2530
        %v2532 = vmul.f32 %v2531, %v1613
        %v2533 = vadd.f32 %v2532, 1e-06
        %v2534 = vrsqrt.pop %v2533
        %v2535 = vmul.f32 %v2527, %v2534
        %v2537 = vlaneseq
        %v2538 = vshrl.u32 %v2537, 7
        %v2539 = vsub.s32 0, %v2538
        %v2540 = vrot.slane %v2382, %v2539
        %v2542 = vmul.f32 %v2535, %v2540
        %v2544 = vlaneseq
        %v2545 = vshrl.u32 %v2544, 7
        %v2546 = vsub.s32 0, %v2545
        %v2547 = vrot.slane %v2383, %v2546
        %v2549 = vadd.f32 %v2542, %v2547
        %2550 = vst.msk [vmem:[%s853] sm:$0xff] %vm935, %v2549
        %s2551 = sand.u32 %s579, 1
        %s2552 = scalar_lea.sflag [#allocation3], %s2551
        %s2553 = sand.u32 %s579, 1
        %s2554 = smul.addr %s2553, 8
        %s2555 = scalar_lea.vmem [#allocation2], %s2554
        %s2556 = sand.u32 %s43, 1
        %s2557 = scalar_lea.sflag [#allocation5], %s2556
        %s2558 = sand.u32 %s607, 1
        %s2559 = smul.addr %s2558, 16
        %s2560 = scalar_lea.vmem [#allocation4], %s2559
        %s2561 = sand.u32 %s43, 1
        %s2562 = scalar_lea.sflag [#allocation5], %s2561
        %s2563 = sand.u32 %s635, 1
        %s2564 = smul.addr %s2563, 16
        %s2565 = scalar_lea.vmem [#allocation6], %s2564
        // Predicated region
        $region113: #{_lambda_.1} parent=111 // pred_check
          %p2566 = pneg %p589
        $region114: #{_lambda_.1} parent=111 // pred_check_branch
          %2568 = sbr.rel (%p2566) target = $region116
        $region115: #{_lambda_.1} parent=111 // pred_region
          %s2570 = ssub.s32 128, 128
          %2571 = vsyncadd %s2552, %s2570
          %s2572 = sadd.s32 %s48, %s47
          %s2573 = smul.addr %s2572, 128
          %s2574 = scalar_lea.hbm %s23, %s2573
          %s2576 = sshll.u32 %s2555, 4
          %s2577 = int_to_ptr.vmem [resolvable:$true] %s2576
          %2579 = dma.vmem_to_hbm [thread:$0]  %s2577, 128, %s2574, %s2552
        $region116: #{_lambda_.1} parent=111 // pred_fallthru
          _
        // Predicated region
        $region117: #{_lambda_.1} parent=111 // pred_check
          %p2580 = pneg %p617
        $region118: #{_lambda_.1} parent=111 // pred_check_branch
          %2582 = sbr.rel (%p2580) target = $region120
        $region119: #{_lambda_.1} parent=111 // pred_region
          %s2584 = ssub.s32 256, 256
          %2585 = vsyncadd %s2557, %s2584
          %s2586 = smul.addr %s47, 4
          %s2587 = sadd.s32 %s48, %s2586
          %s2588 = smul.addr %s2587, 64
          %s2589 = scalar_lea.hbm %s24, %s2588
          %s2590 = sshll.u32 %s2560, 4
          %s2591 = int_to_ptr.vmem [resolvable:$true] %s2590
          %2596 = dma.vmem_to_hbm [thread:$0]  %s2591, 256, %s2589, %s2557, 64, 64, 4
        $region120: #{_lambda_.1} parent=111 // pred_fallthru
          _
        // Predicated region
        $region121: #{_lambda_.1} parent=111 // pred_check
          %p2597 = pneg %p645
        $region122: #{_lambda_.1} parent=111 // pred_check_branch
          %2599 = sbr.rel (%p2597) target = $region124
        $region123: #{_lambda_.1} parent=111 // pred_region
          %s2601 = ssub.s32 256, 256
          %2602 = vsyncadd %s2562, %s2601
          %s2603 = smul.addr %s47, 4
          %s2604 = sadd.s32 %s48, %s2603
          %s2605 = smul.addr %s2604, 64
          %s2606 = scalar_lea.hbm %s25, %s2605
          %s2607 = sshll.u32 %s2565, 4
          %s2608 = int_to_ptr.vmem [resolvable:$true] %s2607
          %2613 = dma.vmem_to_hbm [thread:$0]  %s2608, 256, %s2606, %s2562, 64, 64, 4
        $region124: #{_lambda_.1} parent=111 // pred_fallthru
          _
      $region112: #{_lambda_.1} parent=5 // pred_fallthru
        _
      %p2614 = scmp.le.s32.totalorder 2, %s38
      // Predicated region
      $region125: #{_lambda_.1} parent=5 // pred_check
        %p2615 = pneg %p2614
      $region126: #{_lambda_.1} parent=5 // pred_check_branch
        %2617 = sbr.rel (%p2615) target = $region128
      $region127: #{_lambda_.1} parent=5 // pred_region
        %s2618 = ssub.s32 %s38, 2
        // Predicated region
        $region129: #{_lambda_.1} parent=127 // pred_check
          %p2619 = pneg %p595
        $region130: #{_lambda_.1} parent=127 // pred_check_branch
          %2621 = sbr.rel (%p2619) target = $region132
        $region131: #{_lambda_.1} parent=127 // pred_region
          %s2622 = sand.u32 %s580, 1
          %s2623 = scalar_lea.sflag [#allocation3], %s2622
          %s2624 = sand.u32 %s580, 1
          %s2625 = smul.addr %s2624, 8
          %s2626 = scalar_lea.vmem [#allocation2], %s2625
          %2627 = dma.done %s2623, 128
        $region132: #{_lambda_.1} parent=127 // pred_fallthru
          _
        // Predicated region
        $region133: #{_lambda_.1} parent=127 // pred_check
          %p2628 = pneg %p623
        $region134: #{_lambda_.1} parent=127 // pred_check_branch
          %2630 = sbr.rel (%p2628) target = $region136
        $region135: #{_lambda_.1} parent=127 // pred_region
          %s2631 = sand.u32 %s44, 1
          %s2632 = scalar_lea.sflag [#allocation5], %s2631
          %s2633 = sand.u32 %s608, 1
          %s2634 = smul.addr %s2633, 16
          %s2635 = scalar_lea.vmem [#allocation4], %s2634
          %2636 = dma.done %s2632, 256
        $region136: #{_lambda_.1} parent=127 // pred_fallthru
          _
        // Predicated region
        $region137: #{_lambda_.1} parent=127 // pred_check
          %p2637 = pneg %p651
        $region138: #{_lambda_.1} parent=127 // pred_check_branch
          %2639 = sbr.rel (%p2637) target = $region140
        $region139: #{_lambda_.1} parent=127 // pred_region
          %s2640 = sand.u32 %s44, 1
          %s2641 = scalar_lea.sflag [#allocation5], %s2640
          %s2642 = sand.u32 %s636, 1
          %s2643 = smul.addr %s2642, 16
          %s2644 = scalar_lea.vmem [#allocation6], %s2643
          %2645 = dma.done %s2641, 256
        $region140: #{_lambda_.1} parent=127 // pred_fallthru
          _
      $region128: #{_lambda_.1} parent=5 // pred_fallthru
        _
    $region6: #{_lambda_.1} parent=1 // loop_footer
      %s42 = sadd.s32 1, %s38
    $region7: #{_lambda_.1} parent=1 // loop_footer_branch
      %37 = sbr.rel target = $region3
    $region8: #{_lambda_.1} parent=1 // loop_exit
      _
    %2646 = vsyncpa [#allocation3], 1
    %s2647 = scalar_lea.sflag [#allocation3], 1
    %2648 = vsyncpa %s2647, 1
    %2649 = vsyncpa [#allocation5], 1
    %s2650 = scalar_lea.sflag [#allocation5], 1
    %2651 = vsyncpa %s2650, 1

</llo_original>
